<compile_context>
chip_gen: v5e
topology: v5e:2x2
jax: 0.10.0
libtpu: 0.0.40
codegen_flags: <defaults>
</compile_context>

<pallas_src>
import math

import numpy as np
import jax
import jax.numpy as jnp
from jax import lax
from jax.experimental import pallas as pl
from jax.experimental.pallas import tpu as pltpu  # noqa: F401  (kept for TPU-specific extensions)

# ------------------------------ configuration ------------------------------
B = 2                 # batch
FEAT = 16             # mel dim
T_IN = 19             # chunk time == (chunk_size-1)*4 + 7  -> chunk_size = 4
D = 32                # encoder hidden dim
H = 2                 # attention heads
DK = D // H           # head dim
FFN_DIM = 64          # feed-forward hidden
NUM_LAYERS = 2        # elayers
CONV_KERNEL = 3       # cnn_module kernel
LORDER = CONV_KERNEL - 1   # cache_t2
CACHE = 8             # required_cache_size == cache_t1
VOCAB = 16            # ctc vocab
BEAM = 3              # beam size
SUBSAMPLE_RATE = 4
MAX_PE_LEN = 256

T1 = (T_IN - 3) // 2 + 1      # 9   (after conv1, time)
F1 = (FEAT - 3) // 2 + 1      # 7   (after conv1, freq)
T_OUT = (T1 - 3) // 2 + 1     # 4   (after conv2, time)  == chunk_size
F2 = (F1 - 3) // 2 + 1        # 3   (after conv2, freq)
P2 = 9 * 9                    # double-im2col patch length (3x3 of 3x3 patches)

BT = B * T_OUT                # 8   rows of the main activation
HBT = H * BT                  # 16  rows of head-stacked tensors
WIN = CACHE + T_OUT           # 12  attention window
NCOLS = H * B * WIN           # 48  score columns (cache block then new block)
EXT = LORDER + T_OUT          # 6   conv-module extended length per batch


# ------------------------------ in-kernel helpers ------------------------------
def _dot(a, b):
    return jnp.dot(a, b, preferred_element_type=jnp.float32)


def _dot_nt(a, b):
    # a @ b.T without materializing the transpose
    return lax.dot_general(a, b, (((1,), (1,)), ((), ())),
                           preferred_element_type=jnp.float32)


def _swish(x):
    return x * jax.nn.sigmoid(x)


def _layer_norm(x, g, b, eps=1e-5):
    mean = jnp.mean(x, axis=-1, keepdims=True)
    xc = x - mean
    var = jnp.mean(xc * xc, axis=-1, keepdims=True)
    return xc * jax.lax.rsqrt(var + eps) * g + b


# ------------------------------ the single fused kernel ------------------------------
def _encoder_kernel(x2_ref, pos_ref, mask_ref, attc_ref, cnnc_ref,
                    w1_ref, w32_ref, wmd_ref, wmf_ref, sl_ref, ss_ref,
                    out_main, out_att, out_cnn):
    neg = jnp.finfo(jnp.float32).min
    att_scale = 1.0 / math.sqrt(DK)

    # ---------------- shared small params ----------------
    ss = ss_ref[...]                          # (8, 128)
    conv2_b = ss[0:1, 0:D]
    emb_b = ss[0:1, D:2 * D]
    preln_g = ss[0:1, 2 * D:3 * D]
    preln_b = ss[0:1, 3 * D:4 * D]
    ctc_b = ss[1:2, 0:VOCAB]

    # ---------------- embed: conv1(+folded bias via ones column) -> relu ->
    #                  conv2 -> relu -> linear -> xscale -> preln ----------------
    h1 = jnp.maximum(_dot(x2_ref[...], w1_ref[...]), 0.0)               # (F2*BT, 9*D)
    h2 = jnp.maximum(_dot(h1, w32_ref[0:9 * D, :]) + conv2_b, 0.0)      # (F2*BT, D)
    emb = _dot(h2[0:BT], w32_ref[9 * D:10 * D, :])
    emb = emb + _dot(h2[BT:2 * BT], w32_ref[10 * D:11 * D, :])
    emb = emb + _dot(h2[2 * BT:3 * BT], w32_ref[11 * D:12 * D, :])      # (BT, D)
    xs = (emb + emb_b) * math.sqrt(D)                                   # RelPosEnc xscale
    xs = _layer_norm(xs, preln_g, preln_b)                              # encoder.preln

    pos = pos_ref[...]                        # (B*WIN, D), rows [b0 cache, b1 cache, b0 new, b1 new]
    mask = mask_ref[...]                      # (HBT, NCOLS) additive 0 / -1e30

    # ---------------- Squeezeformer encoder layers (post-LN) ----------------
    for l in range(NUM_LAYERS):
        wm = wmd_ref[l]                       # (D, 384)
        wf = wmf_ref[l]                       # (FFN_DIM, 2*D)
        sv = sl_ref[l]                        # (32, 128)

        wqkv = wm[:, 0:3 * D]
        wo = wm[:, 3 * D:4 * D]
        f1w1 = wm[:, 128:192]
        f2w1 = wm[:, 192:256]
        pw1w = wm[:, 256:320]
        wpos = wm[:, 320:352]
        pw2w = wm[:, 352:384]
        f1w2 = wf[:, 0:D]
        f2w2 = wf[:, D:2 * D]

        bqkv = sv[0:1, 0:3 * D]
        bo = sv[0:1, 3 * D:4 * D]
        f1b1 = sv[1:2, 0:FFN_DIM]
        f1b2 = sv[1:2, FFN_DIM:FFN_DIM + D]
        f2b2 = sv[1:2, FFN_DIM + D:FFN_DIM + 2 * D]
        f2b1 = sv[2:3, 0:FFN_DIM]
        pw1b = sv[2:3, FFN_DIM:FFN_DIM + 2 * D]
        pw2b = sv[3:4, 0:D]
        dwb = sv[3:4, D:2 * D]
        dww = sv[4:4 + CONV_KERNEL, 0:D]
        ln_g = sv[8:12, 0:D]
        ln_b = sv[8:12, D:2 * D]
        u_all = sv[16:16 + HBT, 0:DK]         # pos_bias_u expanded to (HBT, DK)
        v_all = sv[16:16 + HBT, DK:2 * DK]    # pos_bias_v expanded to (HBT, DK)

        # ----- MHSA with relative position + streaming KV cache (batched over head,batch) -----
        residual = xs
        qkv = _dot(xs, wqkv) + bqkv                                    # (BT, 3D) fused QKV
        pflat = _dot(pos, wpos)                                        # (B*WIN, D) linear_pos

        # head-stacked tensors: rows ordered (head, batch, time)
        q_all = jnp.concatenate([qkv[:, 0:DK], qkv[:, DK:D]], axis=0)                  # (HBT, DK)
        k_new = jnp.concatenate([qkv[:, D:D + DK], qkv[:, D + DK:2 * D]], axis=0)      # (HBT, DK)
        v_new = jnp.concatenate([qkv[:, 2 * D:2 * D + DK], qkv[:, 2 * D + DK:3 * D]], axis=0)

        # KV cache, lanes per batch b: [K(D) | V(D)] -> stack to rows (head, batch, cache_t)
        cache = attc_ref[l]                                            # (CACHE, 2*B*D) = (8, 128)
        k_c = jnp.concatenate([cache[:, 0:DK], cache[:, 2 * D:2 * D + DK],
                               cache[:, DK:2 * DK], cache[:, 2 * D + DK:3 * D]], axis=0)
        v_c = jnp.concatenate([cache[:, D:D + DK], cache[:, 3 * D:3 * D + DK],
                               cache[:, D + DK:2 * D], cache[:, 3 * D + DK:4 * D]], axis=0)

        # positional projection stacked per head, cache block then new block
        p_c = jnp.concatenate([pflat[0:B * CACHE, 0:DK], pflat[0:B * CACHE, DK:D]], axis=0)
        p_n = jnp.concatenate([pflat[B * CACHE:B * WIN, 0:DK],
                               pflat[B * CACHE:B * WIN, DK:D]], axis=0)

        k_full = jnp.concatenate([k_c, k_new], axis=0)                 # (NCOLS, DK)
        v_full = jnp.concatenate([v_c, v_new], axis=0)                 # (NCOLS, DK)
        p_full = jnp.concatenate([p_c, p_n], axis=0)                   # (NCOLS, DK)

        qu = q_all + u_all
        qv = q_all + v_all
        scores = (_dot_nt(qu, k_full) + _dot_nt(qv, p_full)) * att_scale + mask        # (HBT, NCOLS)
        m = jnp.max(scores, axis=-1, keepdims=True)
        e = jnp.exp(scores - m)
        inv = pl.reciprocal(jnp.sum(e, axis=-1, keepdims=True), approx=True)
        o_all = _dot(e * inv, v_full)                                  # (HBT, DK)
        att = jnp.concatenate([o_all[0:BT], o_all[BT:2 * BT]], axis=1)  # back to (BT, D)
        att = _dot(att, wo) + bo
        xs = _layer_norm(residual + att, ln_g[0:1], ln_b[0:1])

        # new KV cache = last CACHE frames of concat(old, new); one (8,128) store / layer.
        # NOTE: `cache` (the aliased input) is read above before this write.
        new_kv = jnp.concatenate([qkv[0:T_OUT, D:3 * D],
                                  qkv[T_OUT:2 * T_OUT, D:3 * D]], axis=1)              # (T, 128)
        out_att[l] = jnp.concatenate([cache[T_OUT:CACHE, :], new_kv], axis=0)

        # ----- FFN 1 (swish) -----
        residual = xs
        hdn = _swish(_dot(xs, f1w1) + f1b1)
        xs = _layer_norm(residual + _dot(hdn, f1w2) + f1b2, ln_g[1:2], ln_b[1:2])

        # ----- causal conv module: pw1 + GLU + depthwise + folded BN + swish + pw2 (batched) -----
        residual = xs
        out_cnn[l] = jnp.concatenate([xs[T_OUT - LORDER:T_OUT],
                                      xs[2 * T_OUT - LORDER:2 * T_OUT]], axis=0)       # (B*LORDER, D)
        cnn_c = cnnc_ref[l]                                            # (B*LORDER, D)
        x_ext = jnp.concatenate([cnn_c[0:LORDER], xs[0:T_OUT],
                                 cnn_c[LORDER:2 * LORDER], xs[T_OUT:2 * T_OUT]], axis=0)  # (B*EXT, D)
        y = _dot(x_ext, pw1w) + pw1b                                   # (B*EXT, 2D)
        glu = y[:, 0:D] * jax.nn.sigmoid(y[:, D:2 * D])                # GLU
        dw = jnp.zeros((BT, D), jnp.float32)
        for k in range(CONV_KERNEL):                                   # depthwise taps (per-b shifts)
            tap = jnp.concatenate([glu[k:k + T_OUT], glu[EXT + k:EXT + k + T_OUT]], axis=0)
            dw = dw + tap * dww[k:k + 1, :]
        dw = _swish(dw + dwb)                                          # folded BN + swish
        conv_out = _dot(dw, pw2w) + pw2b
        xs = _layer_norm(residual + conv_out, ln_g[2:3], ln_b[2:3])

        # ----- FFN 2 (swish) -----
        residual = xs
        hdn = _swish(_dot(xs, f2w1) + f2b1)
        xs = _layer_norm(residual + _dot(hdn, f2w2) + f2b2, ln_g[3:4], ln_b[3:4])

    # ---------------- CTC head: linear + log_softmax + top-k (BEAM) ----------------
    ctc_w = w32_ref[12 * D:13 * D, 0:VOCAB]                            # (D, VOCAB)
    logits = _dot(xs, ctc_w) + ctc_b                                   # (BT, VOCAB)
    mx = jnp.max(logits, axis=-1, keepdims=True)
    sh = logits - mx
    logp = sh - jnp.log(jnp.sum(jnp.exp(sh), axis=-1, keepdims=True))
    iota = lax.broadcasted_iota(jnp.int32, (BT, VOCAB), 1).astype(jnp.float32)
    work = logp
    vals, idxs = [], []
    for _ in range(BEAM):
        vmax = jnp.max(work, axis=-1, keepdims=True)
        sel = jnp.min(jnp.where(work == vmax, iota, float(VOCAB)), axis=-1, keepdims=True)
        vals.append(vmax)
        idxs.append(sel)
        work = jnp.where(iota == sel, neg, work)
    topv = jnp.concatenate(vals, axis=1)                               # (BT, BEAM)
    topi = jnp.concatenate(idxs, axis=1)                               # (BT, BEAM) float indices
    padv = jnp.zeros((BT, VOCAB - BEAM), jnp.float32)
    padw = jnp.zeros((BT, 128 - D - 2 * VOCAB), jnp.float32)
    # merged lane-dense output: [chunk_out(32) | topv(3)+pad | topi(3)+pad | pad]
    out_main[...] = jnp.concatenate([xs, topv, padv, topi, padv, padw], axis=1)


# ------------------------------ glue helpers (layout-only XLA) ------------------------------
def im2col(x, k, s):
    # x: (B, Hd, Wd, C) -> (B, Ho, Wo, k*k*C)
    Bn, Hd, Wd, C = x.shape
    Ho = (Hd - k) // s + 1
    Wo = (Wd - k) // s + 1
    cols = []
    for di in range(k):
        for dj in range(k):
            cols.append(x[:, di:di + s * (Ho - 1) + 1:s,
                          dj:dj + s * (Wo - 1) + 1:s, :])
    return jnp.concatenate(cols, axis=-1)


def make_pe(max_len, d):
    pos = jnp.arange(max_len, dtype=jnp.float32)[:, None]
    div = jnp.exp(jnp.arange(0, d, 2, dtype=jnp.float32) * -(math.log(10000.0) / d))
    pe = jnp.zeros((max_len, d), jnp.float32)
    pe = pe.at[:, 0::2].set(jnp.sin(pos * div))
    pe = pe.at[:, 1::2].set(jnp.cos(pos * div))
    return pe


def position_encoding(pe, offset, size):
    # torch: index = offset + arange ; index = index * (index > 0) ; F.embedding
    idx = offset[:, None] + jnp.arange(size)[None, :]
    idx = jnp.where(idx > 0, idx, 0)
    return pe[idx]                                      # (B, size, D)


# ------------------------------ full forward ------------------------------
def streaming_forward(params, chunk_xs, chunk_lens, offset, att_cache, cnn_cache, cache_mask):
    offset_sq = offset[:, 0]                                            # (B,)
    chunk_mask = (jnp.arange(T_IN)[None, :] < chunk_lens[:, None]
                  ).astype(jnp.float32)[:, None, :]                     # ~make_pad_mask

    # global CMVN + double im2col of the two stride-2 3x3 convs (layout-only)
    xs = (chunk_xs - params['cmvn_mean'][None, None, :]) * params['cmvn_istd'][None, None, :]
    cols1 = im2col(xs[..., None], 3, 2)                                 # (B, T1, F1, 9)
    cols2 = im2col(cols1, 3, 2)                                         # (B, T_OUT, F2, 81)
    x2 = jnp.transpose(cols2, (2, 0, 1, 3)).reshape(F2 * BT, P2)        # rows (f, b, t)
    x2a = jnp.concatenate([x2, jnp.ones((F2 * BT, 1), jnp.float32)], axis=1)   # ones col = conv1 bias

    mask_sub = chunk_mask[:, :, 2::2][:, :, 2::2]                       # (B,1,T_OUT)
    att_mask = jnp.concatenate([cache_mask, mask_sub], axis=2)          # (B,1,CACHE+T_OUT)
    r_cache_mask = att_mask[:, :, -CACHE:]

    # additive attention mask (HBT, NCOLS): 0 inside own (head,batch) block on valid keys,
    # -1e30 elsewhere (cross-block + padded keys).  cols = [cache (h,b,c) | new (h,b,t)]
    key_valid = att_mask[:, 0, :]                                       # (B, WIN)
    row_ids = np.repeat(np.arange(H * B), T_OUT)
    col_ids = np.concatenate([np.repeat(np.arange(H * B), CACHE),
                              np.repeat(np.arange(H * B), T_OUT)])
    block_ok = jnp.asarray(row_ids[:, None] == col_ids[None, :])
    colv = jnp.concatenate([
        jnp.tile(key_valid[:, :CACHE][None], (H, 1, 1)).reshape(-1),
        jnp.tile(key_valid[:, CACHE:][None], (H, 1, 1)).reshape(-1)])
    mask_add = jnp.where(block_ok & (colv[None, :] > 0.5), 0.0, -1e30).astype(jnp.float32)

    pos_full = position_encoding(params['pe'], offset_sq - CACHE, WIN)  # (B, WIN, D)
    pos_k = jnp.concatenate([pos_full[:, :CACHE, :].reshape(B * CACHE, D),
                             pos_full[:, CACHE:, :].reshape(BT, D)], axis=0)    # (B*WIN, D)

    # att cache (B,L,H,CACHE,2*DK) -> (L, CACHE, B*2*D), lanes = b*2D + kv*D + h*DK + d
    ac = att_cache.reshape(B, NUM_LAYERS, H, CACHE, 2, DK)
    ac = jnp.transpose(ac, (1, 3, 0, 4, 2, 5)).reshape(NUM_LAYERS, CACHE, 2 * B * D)
    # cnn cache (B,L,D,LORDER) -> (L, B*LORDER, D)
    cc = jnp.transpose(cnn_cache, (1, 0, 3, 2)).reshape(NUM_LAYERS, B * LORDER, D)

    out_main, r_att_k, r_cnn_k = pl.pallas_call(
        _encoder_kernel,
        out_shape=(
            jax.ShapeDtypeStruct((BT, 128), jnp.float32),
            jax.ShapeDtypeStruct((NUM_LAYERS, CACHE, 2 * B * D), jnp.float32),
            jax.ShapeDtypeStruct((NUM_LAYERS, B * LORDER, D), jnp.float32),
        ),
        input_output_aliases={3: 1, 4: 2},    # donate att_cache / cnn_cache buffers
        cost_estimate=pl.CostEstimate(flops=2_600_000, transcendentals=8_000,
                                      bytes_accessed=420_000),
    )(x2a, pos_k, mask_add, ac, cc,
      params['w1a'], params['w32'], params['wmd'], params['wmf'],
      params['sml'], params['ss'])

    chunk_out = out_main[:, 0:D].reshape(B, T_OUT, D)
    log_probs = out_main[:, D:D + BEAM].reshape(B, T_OUT, BEAM).astype(chunk_xs.dtype)
    log_probs_idx = out_main[:, D + VOCAB:D + VOCAB + BEAM].astype(jnp.int32).reshape(B, T_OUT, BEAM)

    r_att = r_att_k.reshape(NUM_LAYERS, CACHE, B, 2, H, DK)
    r_att_cache = jnp.transpose(r_att, (2, 0, 4, 1, 3, 5)).reshape(B, NUM_LAYERS, H, CACHE, 2 * DK)
    r_cnn_cache = jnp.transpose(r_cnn_k.reshape(NUM_LAYERS, B, LORDER, D), (1, 0, 3, 2))

    r_offset = (offset_sq + T_OUT)[:, None]
    chunk_out_lens = chunk_lens // SUBSAMPLE_RATE
    return (log_probs, log_probs_idx, chunk_out, chunk_out_lens, r_offset,
            r_att_cache, r_cnn_cache, r_cache_mask)


# ------------------------------ parameter init (packed slabs) ------------------------------
def make_params(key):
    keys = iter(jax.random.split(key, 256))

    def nrm(shape, s=0.1):
        return s * jax.random.normal(next(keys), shape, dtype=jnp.float32)

    # conv1 (1->D, 3x3, stride 2) as block-diagonal weight over the 9 conv2 taps,
    # bias folded as an extra row (matched by a ones column in x2).
    conv1_w = nrm((9, D))
    conv1_b = nrm((D,))
    w1bd = jnp.zeros((P2, 9 * D), jnp.float32)
    for k in range(9):
        w1bd = w1bd.at[k * 9:(k + 1) * 9, k * D:(k + 1) * D].set(conv1_w)
    w1a = jnp.concatenate([w1bd, jnp.tile(conv1_b, 9)[None, :]], axis=0)    # (82, 288)

    conv2_w = nrm((9 * D, D))
    conv2_b = nrm((D,))
    emb_w = nrm((F2, D, D))
    emb_b = nrm((D,))
    preln_g = 1.0 + nrm((D,))
    preln_b = nrm((D,))
    ctc_w = nrm((D, VOCAB))
    ctc_b = nrm((VOCAB,))

    # w32 slab: [conv2_w (0:288) | emb_w (288:384) | ctc_w padded (384:416)]
    ctc_w_pad = jnp.concatenate([ctc_w, jnp.zeros((D, D - VOCAB), jnp.float32)], axis=1)
    w32 = jnp.concatenate([conv2_w, emb_w.reshape(F2 * D, D), ctc_w_pad], axis=0)   # (416, 32)

    # shared small-param slab (8, 128)
    ss = jnp.zeros((8, 128), jnp.float32)
    ss = ss.at[0, 0:D].set(conv2_b)
    ss = ss.at[0, D:2 * D].set(emb_b)
    ss = ss.at[0, 2 * D:3 * D].set(preln_g)
    ss = ss.at[0, 3 * D:4 * D].set(preln_b)
    ss = ss.at[1, 0:VOCAB].set(ctc_b)

    wmd, wmf, sml = [], [], []
    bn_eps = 1e-5
    for _ in range(NUM_LAYERS):
        wqkv = jnp.concatenate([nrm((D, D)), nrm((D, D)), nrm((D, D))], axis=1)
        bqkv = jnp.concatenate([nrm((D,)), nrm((D,)), nrm((D,))])
        wo = nrm((D, D)); bo = nrm((D,))
        wpos = nrm((D, D))                         # linear_pos has no bias
        pbu = nrm((H, DK)); pbv = nrm((H, DK))
        ln_g = 1.0 + nrm((4, D)); ln_b = nrm((4, D))
        f1w1 = nrm((D, FFN_DIM)); f1b1 = nrm((FFN_DIM,))
        f1w2 = nrm((FFN_DIM, D)); f1b2 = nrm((D,))
        f2w1 = nrm((D, FFN_DIM)); f2b1 = nrm((FFN_DIM,))
        f2w2 = nrm((FFN_DIM, D)); f2b2 = nrm((D,))
        pw1w = nrm((D, 2 * D)); pw1b = nrm((2 * D,))
        # depthwise conv weights with eval-mode BatchNorm folded in
        dww = nrm((CONV_KERNEL, D)); dwb = nrm((D,))
        bng = 1.0 + nrm((D,)); bnb = nrm((D,))
        run_mean = jnp.zeros((D,), jnp.float32); run_var = jnp.ones((D,), jnp.float32)
        scale = bng / jnp.sqrt(run_var + bn_eps)
        shift = bnb - run_mean * scale
        dww_f = dww * scale[None, :]
        dwb_f = dwb * scale + shift
        pw2w = nrm((D, D)); pw2b = nrm((D,))

        # big per-layer matrices with D-row contraction, lane-concatenated at vreg-aligned offsets
        wmd.append(jnp.concatenate([wqkv, wo, f1w1, f2w1, pw1w, wpos, pw2w], axis=1))  # (32, 384)
        wmf.append(jnp.concatenate([f1w2, f2w2], axis=1))                              # (64, 64)

        sm = jnp.zeros((32, 128), jnp.float32)
        sm = sm.at[0, 0:3 * D].set(bqkv)
        sm = sm.at[0, 3 * D:4 * D].set(bo)
        sm = sm.at[1, 0:FFN_DIM].set(f1b1)
        sm = sm.at[1, FFN_DIM:FFN_DIM + D].set(f1b2)
        sm = sm.at[1, FFN_DIM + D:FFN_DIM + 2 * D].set(f2b2)
        sm = sm.at[2, 0:FFN_DIM].set(f2b1)
        sm = sm.at[2, FFN_DIM:FFN_DIM + 2 * D].set(pw1b)
        sm = sm.at[3, 0:D].set(pw2b)
        sm = sm.at[3, D:2 * D].set(dwb_f)
        sm = sm.at[4:4 + CONV_KERNEL, 0:D].set(dww_f)
        sm = sm.at[8:12, 0:D].set(ln_g)
        sm = sm.at[8:12, D:2 * D].set(ln_b)
        sm = sm.at[16:16 + HBT, 0:DK].set(jnp.repeat(pbu, BT, axis=0))
        sm = sm.at[16:16 + HBT, DK:2 * DK].set(jnp.repeat(pbv, BT, axis=0))
        sml.append(sm)

    return {
        'cmvn_mean': nrm((FEAT,)),
        'cmvn_istd': 1.0 + 0.05 * jax.random.normal(next(keys), (FEAT,), jnp.float32),
        'pe': make_pe(MAX_PE_LEN, D),
        'w1a': w1a,
        'w32': w32,
        'ss': ss,
        'wmd': jnp.stack(wmd),
        'wmf': jnp.stack(wmf),
        'sml': jnp.stack(sml),
    }


# ------------------------------ main ------------------------------
if __name__ == "__main__":
    key = jax.random.PRNGKey(0)
    pk, xk, ak, ck = jax.random.split(key, 4)
    params = make_params(pk)

    chunk_xs = jax.random.normal(xk, (B, T_IN, FEAT), jnp.float32)
    chunk_lens = jnp.array([T_IN, T_IN - 4], jnp.int32)
    offset = jnp.full((B, 1), CACHE, jnp.int32)
    att_cache = 0.1 * jax.random.normal(ak, (B, NUM_LAYERS, H, CACHE, 2 * DK), jnp.float32)
    cnn_cache = 0.1 * jax.random.normal(ck, (B, NUM_LAYERS, D, LORDER), jnp.float32)
    cache_mask = jnp.ones((B, 1, CACHE), jnp.float32)

    fwd = jax.jit(streaming_forward)
    outs = fwd(params, chunk_xs, chunk_lens, offset, att_cache, cnn_cache, cache_mask)
    jax.block_until_ready(outs)

    (log_probs, log_probs_idx, chunk_out, chunk_out_lens, r_offset,
     r_att_cache, r_cnn_cache, r_cache_mask) = outs
    assert log_probs.shape == (B, T_OUT, BEAM)
    assert log_probs_idx.shape == (B, T_OUT, BEAM)
    assert log_probs_idx.dtype == jnp.int32
    assert chunk_out.shape == (B, T_OUT, D)
    assert chunk_out_lens.shape == (B,)
    assert r_offset.shape == (B, 1)
    assert r_att_cache.shape == (B, NUM_LAYERS, H, CACHE, 2 * DK)
    assert r_cnn_cache.shape == (B, NUM_LAYERS, D, LORDER)
    assert r_cache_mask.shape == (B, 1, CACHE)
    assert bool(jnp.all(jnp.isfinite(log_probs)))
    print("KERNEL_OK")
</pallas_src>

<mosaic_0001>
module attributes {stable_mosaic.version = 11 : i64} {
  func.func @_encoder_kernel(%arg0: memref<24x82xf32, #tpu.memory_space<vmem>>, %arg1: memref<24x32xf32, #tpu.memory_space<vmem>>, %arg2: memref<16x48xf32, #tpu.memory_space<vmem>>, %arg3: memref<2x8x128xf32, #tpu.memory_space<vmem>>, %arg4: memref<2x4x32xf32, #tpu.memory_space<vmem>>, %arg5: memref<82x288xf32, #tpu.memory_space<vmem>>, %arg6: memref<416x32xf32, #tpu.memory_space<vmem>>, %arg7: memref<2x32x384xf32, #tpu.memory_space<vmem>>, %arg8: memref<2x64x64xf32, #tpu.memory_space<vmem>>, %arg9: memref<2x32x128xf32, #tpu.memory_space<vmem>>, %arg10: memref<8x128xf32, #tpu.memory_space<vmem>>, %arg11: memref<8x128xf32, #tpu.memory_space<vmem>>, %arg12: memref<2x8x128xf32, #tpu.memory_space<vmem>>, %arg13: memref<2x4x32xf32, #tpu.memory_space<vmem>>) attributes {dimension_semantics = [], scalar_prefetch = 0 : i64, scratch_operands = 0 : i64, tpu.core_type = #tpu.core_type<tc>} {
    %c0 = arith.constant 0 : index
    %c0_0 = arith.constant 0 : index
    %0 = vector.load %arg10[%c0, %c0_0] : memref<8x128xf32, #tpu.memory_space<vmem>>, vector<8x128xf32>
    %1 = vector.extract_strided_slice %0 {offsets = [0, 0], sizes = [1, 32], strides = [1, 1]} : vector<8x128xf32> to vector<1x32xf32>
    %2 = vector.extract_strided_slice %0 {offsets = [0, 32], sizes = [1, 32], strides = [1, 1]} : vector<8x128xf32> to vector<1x32xf32>
    %3 = vector.extract_strided_slice %0 {offsets = [0, 64], sizes = [1, 32], strides = [1, 1]} : vector<8x128xf32> to vector<1x32xf32>
    %4 = vector.extract_strided_slice %0 {offsets = [0, 96], sizes = [1, 32], strides = [1, 1]} : vector<8x128xf32> to vector<1x32xf32>
    %5 = vector.extract_strided_slice %0 {offsets = [1, 0], sizes = [1, 16], strides = [1, 1]} : vector<8x128xf32> to vector<1x16xf32>
    %c0_1 = arith.constant 0 : index
    %c0_2 = arith.constant 0 : index
    %6 = vector.load %arg0[%c0_1, %c0_2] : memref<24x82xf32, #tpu.memory_space<vmem>>, vector<24x82xf32>
    %c0_3 = arith.constant 0 : index
    %c0_4 = arith.constant 0 : index
    %7 = vector.load %arg5[%c0_3, %c0_4] : memref<82x288xf32, #tpu.memory_space<vmem>>, vector<82x288xf32>
    %cst = arith.constant dense<0.000000e+00> : vector<24x288xf32>
    %8 = tpu.matmul %6, %7, %cst {dimension_numbers = #tpu.dot_dimension_numbers<[1], [0], [0], [1], [0, 0, 1, 1], [], []>} : vector<24x82xf32>, vector<82x288xf32>, vector<24x288xf32> -> vector<24x288xf32>
    %cst_5 = arith.constant 0.000000e+00 : f32
    %9 = vector.broadcast %cst_5 : f32 to vector<24x288xf32>
    %10 = arith.maximumf %8, %9 : vector<24x288xf32>
    %c0_6 = arith.constant 0 : index
    %c0_7 = arith.constant 0 : index
    %11 = vector.load %arg6[%c0_6, %c0_7] : memref<416x32xf32, #tpu.memory_space<vmem>>, vector<288x32xf32>
    %cst_8 = arith.constant dense<0.000000e+00> : vector<24x32xf32>
    %12 = tpu.matmul %10, %11, %cst_8 {dimension_numbers = #tpu.dot_dimension_numbers<[1], [0], [0], [1], [0, 0, 1, 1], [], []>} : vector<24x288xf32>, vector<288x32xf32>, vector<24x32xf32> -> vector<24x32xf32>
    %13 = vector.broadcast %1 : vector<1x32xf32> to vector<24x32xf32>
    %14 = arith.addf %12, %13 : vector<24x32xf32>
    %cst_9 = arith.constant 0.000000e+00 : f32
    %15 = vector.broadcast %cst_9 : f32 to vector<24x32xf32>
    %16 = arith.maximumf %14, %15 : vector<24x32xf32>
    %17 = vector.extract_strided_slice %16 {offsets = [0, 0], sizes = [8, 32], strides = [1, 1]} : vector<24x32xf32> to vector<8x32xf32>
    %c288 = arith.constant 288 : index
    %c0_10 = arith.constant 0 : index
    %18 = vector.load %arg6[%c288, %c0_10] : memref<416x32xf32, #tpu.memory_space<vmem>>, vector<32x32xf32>
    %cst_11 = arith.constant dense<0.000000e+00> : vector<8x32xf32>
    %19 = tpu.matmul %17, %18, %cst_11 {dimension_numbers = #tpu.dot_dimension_numbers<[1], [0], [0], [1], [0, 0, 1, 1], [], []>} : vector<8x32xf32>, vector<32x32xf32>, vector<8x32xf32> -> vector<8x32xf32>
    %20 = vector.extract_strided_slice %16 {offsets = [8, 0], sizes = [8, 32], strides = [1, 1]} : vector<24x32xf32> to vector<8x32xf32>
    %c320 = arith.constant 320 : index
    %c0_12 = arith.constant 0 : index
    %21 = vector.load %arg6[%c320, %c0_12] : memref<416x32xf32, #tpu.memory_space<vmem>>, vector<32x32xf32>
    %cst_13 = arith.constant dense<0.000000e+00> : vector<8x32xf32>
    %22 = tpu.matmul %20, %21, %cst_13 {dimension_numbers = #tpu.dot_dimension_numbers<[1], [0], [0], [1], [0, 0, 1, 1], [], []>} : vector<8x32xf32>, vector<32x32xf32>, vector<8x32xf32> -> vector<8x32xf32>
    %23 = arith.addf %19, %22 : vector<8x32xf32>
    %24 = vector.extract_strided_slice %16 {offsets = [16, 0], sizes = [8, 32], strides = [1, 1]} : vector<24x32xf32> to vector<8x32xf32>
    %c352 = arith.constant 352 : index
    %c0_14 = arith.constant 0 : index
    %25 = vector.load %arg6[%c352, %c0_14] : memref<416x32xf32, #tpu.memory_space<vmem>>, vector<32x32xf32>
    %cst_15 = arith.constant dense<0.000000e+00> : vector<8x32xf32>
    %26 = tpu.matmul %24, %25, %cst_15 {dimension_numbers = #tpu.dot_dimension_numbers<[1], [0], [0], [1], [0, 0, 1, 1], [], []>} : vector<8x32xf32>, vector<32x32xf32>, vector<8x32xf32> -> vector<8x32xf32>
    %27 = arith.addf %23, %26 : vector<8x32xf32>
    %28 = vector.broadcast %2 : vector<1x32xf32> to vector<8x32xf32>
    %29 = arith.addf %27, %28 : vector<8x32xf32>
    %cst_16 = arith.constant 5.65685415 : f32
    %30 = vector.broadcast %cst_16 : f32 to vector<8x32xf32>
    %31 = arith.mulf %29, %30 : vector<8x32xf32>
    %cst_17 = arith.constant dense<0.000000e+00> : vector<8xf32>
    %32 = vector.multi_reduction <add>, %31, %cst_17 [1] : vector<8x32xf32> to vector<8xf32>
    %33 = vector.shape_cast %32 : vector<8xf32> to vector<8x1xf32>
    %cst_18 = arith.constant 3.200000e+01 : f32
    %34 = vector.broadcast %cst_18 : f32 to vector<8x1xf32>
    %35 = arith.divf %33, %34 : vector<8x1xf32>
    %36 = vector.broadcast %35 : vector<8x1xf32> to vector<8x32xf32>
    %37 = arith.subf %31, %36 : vector<8x32xf32>
    %38 = arith.mulf %37, %37 : vector<8x32xf32>
    %cst_19 = arith.constant dense<0.000000e+00> : vector<8xf32>
    %39 = vector.multi_reduction <add>, %38, %cst_19 [1] : vector<8x32xf32> to vector<8xf32>
    %40 = vector.shape_cast %39 : vector<8xf32> to vector<8x1xf32>
    %cst_20 = arith.constant 3.200000e+01 : f32
    %41 = vector.broadcast %cst_20 : f32 to vector<8x1xf32>
    %42 = arith.divf %40, %41 : vector<8x1xf32>
    %cst_21 = arith.constant 9.99999974E-6 : f32
    %43 = vector.broadcast %cst_21 : f32 to vector<8x1xf32>
    %44 = arith.addf %42, %43 : vector<8x1xf32>
    %45 = math.rsqrt %44 : vector<8x1xf32>
    %46 = vector.broadcast %45 : vector<8x1xf32> to vector<8x32xf32>
    %47 = arith.mulf %37, %46 : vector<8x32xf32>
    %48 = vector.broadcast %3 : vector<1x32xf32> to vector<8x32xf32>
    %49 = arith.mulf %47, %48 : vector<8x32xf32>
    %50 = vector.broadcast %4 : vector<1x32xf32> to vector<8x32xf32>
    %51 = arith.addf %49, %50 : vector<8x32xf32>
    %c0_22 = arith.constant 0 : index
    %c0_23 = arith.constant 0 : index
    %52 = vector.load %arg1[%c0_22, %c0_23] : memref<24x32xf32, #tpu.memory_space<vmem>>, vector<24x32xf32>
    %c0_24 = arith.constant 0 : index
    %c0_25 = arith.constant 0 : index
    %53 = vector.load %arg2[%c0_24, %c0_25] : memref<16x48xf32, #tpu.memory_space<vmem>>, vector<16x48xf32>
    %c0_26 = arith.constant 0 : index
    %c0_27 = arith.constant 0 : index
    %c0_28 = arith.constant 0 : index
    %54 = vector.load %arg7[%c0_26, %c0_27, %c0_28] : memref<2x32x384xf32, #tpu.memory_space<vmem>>, vector<1x32x384xf32>
    %55 = vector.shape_cast %54 : vector<1x32x384xf32> to vector<32x384xf32>
    %c0_29 = arith.constant 0 : index
    %c0_30 = arith.constant 0 : index
    %c0_31 = arith.constant 0 : index
    %56 = vector.load %arg8[%c0_29, %c0_30, %c0_31] : memref<2x64x64xf32, #tpu.memory_space<vmem>>, vector<1x64x64xf32>
    %57 = vector.shape_cast %56 : vector<1x64x64xf32> to vector<64x64xf32>
    %c0_32 = arith.constant 0 : index
    %c0_33 = arith.constant 0 : index
    %c0_34 = arith.constant 0 : index
    %58 = vector.load %arg9[%c0_32, %c0_33, %c0_34] : memref<2x32x128xf32, #tpu.memory_space<vmem>>, vector<1x32x128xf32>
    %59 = vector.shape_cast %58 : vector<1x32x128xf32> to vector<32x128xf32>
    %60 = vector.extract_strided_slice %55 {offsets = [0, 0], sizes = [32, 96], strides = [1, 1]} : vector<32x384xf32> to vector<32x96xf32>
    %61 = vector.extract_strided_slice %55 {offsets = [0, 96], sizes = [32, 32], strides = [1, 1]} : vector<32x384xf32> to vector<32x32xf32>
    %62 = vector.extract_strided_slice %55 {offsets = [0, 128], sizes = [32, 64], strides = [1, 1]} : vector<32x384xf32> to vector<32x64xf32>
    %63 = vector.extract_strided_slice %55 {offsets = [0, 192], sizes = [32, 64], strides = [1, 1]} : vector<32x384xf32> to vector<32x64xf32>
    %64 = vector.extract_strided_slice %55 {offsets = [0, 256], sizes = [32, 64], strides = [1, 1]} : vector<32x384xf32> to vector<32x64xf32>
    %65 = vector.extract_strided_slice %55 {offsets = [0, 320], sizes = [32, 32], strides = [1, 1]} : vector<32x384xf32> to vector<32x32xf32>
    %66 = vector.extract_strided_slice %55 {offsets = [0, 352], sizes = [32, 32], strides = [1, 1]} : vector<32x384xf32> to vector<32x32xf32>
    %67 = vector.extract_strided_slice %57 {offsets = [0, 0], sizes = [64, 32], strides = [1, 1]} : vector<64x64xf32> to vector<64x32xf32>
    %68 = vector.extract_strided_slice %57 {offsets = [0, 32], sizes = [64, 32], strides = [1, 1]} : vector<64x64xf32> to vector<64x32xf32>
    %69 = vector.extract_strided_slice %59 {offsets = [0, 0], sizes = [1, 96], strides = [1, 1]} : vector<32x128xf32> to vector<1x96xf32>
    %70 = vector.extract_strided_slice %59 {offsets = [0, 96], sizes = [1, 32], strides = [1, 1]} : vector<32x128xf32> to vector<1x32xf32>
    %71 = vector.extract_strided_slice %59 {offsets = [1, 0], sizes = [1, 64], strides = [1, 1]} : vector<32x128xf32> to vector<1x64xf32>
    %72 = vector.extract_strided_slice %59 {offsets = [1, 64], sizes = [1, 32], strides = [1, 1]} : vector<32x128xf32> to vector<1x32xf32>
    %73 = vector.extract_strided_slice %59 {offsets = [1, 96], sizes = [1, 32], strides = [1, 1]} : vector<32x128xf32> to vector<1x32xf32>
    %74 = vector.extract_strided_slice %59 {offsets = [2, 0], sizes = [1, 64], strides = [1, 1]} : vector<32x128xf32> to vector<1x64xf32>
    %75 = vector.extract_strided_slice %59 {offsets = [2, 64], sizes = [1, 64], strides = [1, 1]} : vector<32x128xf32> to vector<1x64xf32>
    %76 = vector.extract_strided_slice %59 {offsets = [3, 0], sizes = [1, 32], strides = [1, 1]} : vector<32x128xf32> to vector<1x32xf32>
    %77 = vector.extract_strided_slice %59 {offsets = [3, 32], sizes = [1, 32], strides = [1, 1]} : vector<32x128xf32> to vector<1x32xf32>
    %78 = vector.extract_strided_slice %59 {offsets = [4, 0], sizes = [3, 32], strides = [1, 1]} : vector<32x128xf32> to vector<3x32xf32>
    %79 = vector.extract_strided_slice %59 {offsets = [8, 0], sizes = [4, 32], strides = [1, 1]} : vector<32x128xf32> to vector<4x32xf32>
    %80 = vector.extract_strided_slice %59 {offsets = [8, 32], sizes = [4, 32], strides = [1, 1]} : vector<32x128xf32> to vector<4x32xf32>
    %81 = vector.extract_strided_slice %59 {offsets = [16, 0], sizes = [16, 16], strides = [1, 1]} : vector<32x128xf32> to vector<16x16xf32>
    %82 = vector.extract_strided_slice %59 {offsets = [16, 16], sizes = [16, 16], strides = [1, 1]} : vector<32x128xf32> to vector<16x16xf32>
    %cst_35 = arith.constant dense<0.000000e+00> : vector<8x96xf32>
    %83 = tpu.matmul %51, %60, %cst_35 {dimension_numbers = #tpu.dot_dimension_numbers<[1], [0], [0], [1], [0, 0, 1, 1], [], []>} : vector<8x32xf32>, vector<32x96xf32>, vector<8x96xf32> -> vector<8x96xf32>
    %84 = vector.broadcast %69 : vector<1x96xf32> to vector<8x96xf32>
    %85 = arith.addf %83, %84 : vector<8x96xf32>
    %cst_36 = arith.constant dense<0.000000e+00> : vector<24x32xf32>
    %86 = tpu.matmul %52, %65, %cst_36 {dimension_numbers = #tpu.dot_dimension_numbers<[1], [0], [0], [1], [0, 0, 1, 1], [], []>} : vector<24x32xf32>, vector<32x32xf32>, vector<24x32xf32> -> vector<24x32xf32>
    %87 = vector.extract_strided_slice %85 {offsets = [0, 0], sizes = [8, 16], strides = [1, 1]} : vector<8x96xf32> to vector<8x16xf32>
    %88 = vector.extract_strided_slice %85 {offsets = [0, 16], sizes = [8, 16], strides = [1, 1]} : vector<8x96xf32> to vector<8x16xf32>
    %89 = tpu.concatenate %87, %88 in 0 : vector<8x16xf32>, vector<8x16xf32> -> vector<16x16xf32>
    %90 = vector.extract_strided_slice %85 {offsets = [0, 32], sizes = [8, 16], strides = [1, 1]} : vector<8x96xf32> to vector<8x16xf32>
    %91 = vector.extract_strided_slice %85 {offsets = [0, 48], sizes = [8, 16], strides = [1, 1]} : vector<8x96xf32> to vector<8x16xf32>
    %92 = tpu.concatenate %90, %91 in 0 : vector<8x16xf32>, vector<8x16xf32> -> vector<16x16xf32>
    %93 = vector.extract_strided_slice %85 {offsets = [0, 64], sizes = [8, 16], strides = [1, 1]} : vector<8x96xf32> to vector<8x16xf32>
    %94 = vector.extract_strided_slice %85 {offsets = [0, 80], sizes = [8, 16], strides = [1, 1]} : vector<8x96xf32> to vector<8x16xf32>
    %95 = tpu.concatenate %93, %94 in 0 : vector<8x16xf32>, vector<8x16xf32> -> vector<16x16xf32>
    %c0_37 = arith.constant 0 : index
    %c0_38 = arith.constant 0 : index
    %c0_39 = arith.constant 0 : index
    %96 = vector.load %arg3[%c0_37, %c0_38, %c0_39] : memref<2x8x128xf32, #tpu.memory_space<vmem>>, vector<1x8x128xf32>
    %97 = vector.shape_cast %96 : vector<1x8x128xf32> to vector<8x128xf32>
    %98 = vector.extract_strided_slice %97 {offsets = [0, 0], sizes = [8, 16], strides = [1, 1]} : vector<8x128xf32> to vector<8x16xf32>
    %99 = vector.extract_strided_slice %97 {offsets = [0, 64], sizes = [8, 16], strides = [1, 1]} : vector<8x128xf32> to vector<8x16xf32>
    %100 = vector.extract_strided_slice %97 {offsets = [0, 16], sizes = [8, 16], strides = [1, 1]} : vector<8x128xf32> to vector<8x16xf32>
    %101 = vector.extract_strided_slice %97 {offsets = [0, 80], sizes = [8, 16], strides = [1, 1]} : vector<8x128xf32> to vector<8x16xf32>
    %102 = tpu.concatenate %98, %99, %100, %101 in 0 : vector<8x16xf32>, vector<8x16xf32>, vector<8x16xf32>, vector<8x16xf32> -> vector<32x16xf32>
    %103 = vector.extract_strided_slice %97 {offsets = [0, 32], sizes = [8, 16], strides = [1, 1]} : vector<8x128xf32> to vector<8x16xf32>
    %104 = vector.extract_strided_slice %97 {offsets = [0, 96], sizes = [8, 16], strides = [1, 1]} : vector<8x128xf32> to vector<8x16xf32>
    %105 = vector.extract_strided_slice %97 {offsets = [0, 48], sizes = [8, 16], strides = [1, 1]} : vector<8x128xf32> to vector<8x16xf32>
    %106 = vector.extract_strided_slice %97 {offsets = [0, 112], sizes = [8, 16], strides = [1, 1]} : vector<8x128xf32> to vector<8x16xf32>
    %107 = tpu.concatenate %103, %104, %105, %106 in 0 : vector<8x16xf32>, vector<8x16xf32>, vector<8x16xf32>, vector<8x16xf32> -> vector<32x16xf32>
    %108 = vector.extract_strided_slice %86 {offsets = [0, 0], sizes = [16, 16], strides = [1, 1]} : vector<24x32xf32> to vector<16x16xf32>
    %109 = vector.extract_strided_slice %86 {offsets = [0, 16], sizes = [16, 16], strides = [1, 1]} : vector<24x32xf32> to vector<16x16xf32>
    %110 = tpu.concatenate %108, %109 in 0 : vector<16x16xf32>, vector<16x16xf32> -> vector<32x16xf32>
    %111 = vector.extract_strided_slice %86 {offsets = [16, 0], sizes = [8, 16], strides = [1, 1]} : vector<24x32xf32> to vector<8x16xf32>
    %112 = vector.extract_strided_slice %86 {offsets = [16, 16], sizes = [8, 16], strides = [1, 1]} : vector<24x32xf32> to vector<8x16xf32>
    %113 = tpu.concatenate %111, %112 in 0 : vector<8x16xf32>, vector<8x16xf32> -> vector<16x16xf32>
    %114 = tpu.concatenate %102, %92 in 0 : vector<32x16xf32>, vector<16x16xf32> -> vector<48x16xf32>
    %115 = tpu.concatenate %107, %95 in 0 : vector<32x16xf32>, vector<16x16xf32> -> vector<48x16xf32>
    %116 = tpu.concatenate %110, %113 in 0 : vector<32x16xf32>, vector<16x16xf32> -> vector<48x16xf32>
    %117 = arith.addf %89, %81 : vector<16x16xf32>
    %118 = arith.addf %89, %82 : vector<16x16xf32>
    %cst_40 = arith.constant dense<0.000000e+00> : vector<16x48xf32>
    %119 = tpu.matmul %117, %114, %cst_40 {dimension_numbers = #tpu.dot_dimension_numbers<[1], [1], [0], [0], [0, 0, 1, 0], [], []>} : vector<16x16xf32>, vector<48x16xf32>, vector<16x48xf32> -> vector<16x48xf32>
    %cst_41 = arith.constant dense<0.000000e+00> : vector<16x48xf32>
    %120 = tpu.matmul %118, %116, %cst_41 {dimension_numbers = #tpu.dot_dimension_numbers<[1], [1], [0], [0], [0, 0, 1, 0], [], []>} : vector<16x16xf32>, vector<48x16xf32>, vector<16x48xf32> -> vector<16x48xf32>
    %121 = arith.addf %119, %120 : vector<16x48xf32>
    %cst_42 = arith.constant 2.500000e-01 : f32
    %122 = vector.broadcast %cst_42 : f32 to vector<16x48xf32>
    %123 = arith.mulf %121, %122 : vector<16x48xf32>
    %124 = arith.addf %123, %53 : vector<16x48xf32>
    %cst_43 = arith.constant dense<0xFF800000> : vector<16xf32>
    %125 = vector.multi_reduction <maximumf>, %124, %cst_43 [1] : vector<16x48xf32> to vector<16xf32>
    %126 = vector.shape_cast %125 : vector<16xf32> to vector<16x1xf32>
    %127 = vector.broadcast %126 : vector<16x1xf32> to vector<16x48xf32>
    %128 = arith.subf %124, %127 : vector<16x48xf32>
    %129 = math.exp %128 : vector<16x48xf32>
    %cst_44 = arith.constant dense<0.000000e+00> : vector<16xf32>
    %130 = vector.multi_reduction <add>, %129, %cst_44 [1] : vector<16x48xf32> to vector<16xf32>
    %131 = vector.shape_cast %130 : vector<16xf32> to vector<16x1xf32>
    %132 = tpu.reciprocal %131 {approx = true} : vector<16x1xf32> -> vector<16x1xf32>
    %133 = vector.broadcast %132 : vector<16x1xf32> to vector<16x48xf32>
    %134 = arith.mulf %129, %133 : vector<16x48xf32>
    %cst_45 = arith.constant dense<0.000000e+00> : vector<16x16xf32>
    %135 = tpu.matmul %134, %115, %cst_45 {dimension_numbers = #tpu.dot_dimension_numbers<[1], [0], [0], [1], [0, 0, 1, 1], [], []>} : vector<16x48xf32>, vector<48x16xf32>, vector<16x16xf32> -> vector<16x16xf32>
    %136 = vector.extract_strided_slice %135 {offsets = [0, 0], sizes = [8, 16], strides = [1, 1]} : vector<16x16xf32> to vector<8x16xf32>
    %137 = vector.extract_strided_slice %135 {offsets = [8, 0], sizes = [8, 16], strides = [1, 1]} : vector<16x16xf32> to vector<8x16xf32>
    %138 = tpu.concatenate %136, %137 in 1 : vector<8x16xf32>, vector<8x16xf32> -> vector<8x32xf32>
    %cst_46 = arith.constant dense<0.000000e+00> : vector<8x32xf32>
    %139 = tpu.matmul %138, %61, %cst_46 {dimension_numbers = #tpu.dot_dimension_numbers<[1], [0], [0], [1], [0, 0, 1, 1], [], []>} : vector<8x32xf32>, vector<32x32xf32>, vector<8x32xf32> -> vector<8x32xf32>
    %140 = vector.broadcast %70 : vector<1x32xf32> to vector<8x32xf32>
    %141 = arith.addf %139, %140 : vector<8x32xf32>
    %142 = arith.addf %51, %141 : vector<8x32xf32>
    %143 = vector.extract_strided_slice %79 {offsets = [0, 0], sizes = [1, 32], strides = [1, 1]} : vector<4x32xf32> to vector<1x32xf32>
    %144 = vector.extract_strided_slice %80 {offsets = [0, 0], sizes = [1, 32], strides = [1, 1]} : vector<4x32xf32> to vector<1x32xf32>
    %cst_47 = arith.constant dense<0.000000e+00> : vector<8xf32>
    %145 = vector.multi_reduction <add>, %142, %cst_47 [1] : vector<8x32xf32> to vector<8xf32>
    %146 = vector.shape_cast %145 : vector<8xf32> to vector<8x1xf32>
    %cst_48 = arith.constant 3.200000e+01 : f32
    %147 = vector.broadcast %cst_48 : f32 to vector<8x1xf32>
    %148 = arith.divf %146, %147 : vector<8x1xf32>
    %149 = vector.broadcast %148 : vector<8x1xf32> to vector<8x32xf32>
    %150 = arith.subf %142, %149 : vector<8x32xf32>
    %151 = arith.mulf %150, %150 : vector<8x32xf32>
    %cst_49 = arith.constant dense<0.000000e+00> : vector<8xf32>
    %152 = vector.multi_reduction <add>, %151, %cst_49 [1] : vector<8x32xf32> to vector<8xf32>
    %153 = vector.shape_cast %152 : vector<8xf32> to vector<8x1xf32>
    %cst_50 = arith.constant 3.200000e+01 : f32
    %154 = vector.broadcast %cst_50 : f32 to vector<8x1xf32>
    %155 = arith.divf %153, %154 : vector<8x1xf32>
    %cst_51 = arith.constant 9.99999974E-6 : f32
    %156 = vector.broadcast %cst_51 : f32 to vector<8x1xf32>
    %157 = arith.addf %155, %156 : vector<8x1xf32>
    %158 = math.rsqrt %157 : vector<8x1xf32>
    %159 = vector.broadcast %158 : vector<8x1xf32> to vector<8x32xf32>
    %160 = arith.mulf %150, %159 : vector<8x32xf32>
    %161 = vector.broadcast %143 : vector<1x32xf32> to vector<8x32xf32>
    %162 = arith.mulf %160, %161 : vector<8x32xf32>
    %163 = vector.broadcast %144 : vector<1x32xf32> to vector<8x32xf32>
    %164 = arith.addf %162, %163 : vector<8x32xf32>
    %165 = vector.extract_strided_slice %85 {offsets = [0, 32], sizes = [4, 64], strides = [1, 1]} : vector<8x96xf32> to vector<4x64xf32>
    %166 = vector.extract_strided_slice %85 {offsets = [4, 32], sizes = [4, 64], strides = [1, 1]} : vector<8x96xf32> to vector<4x64xf32>
    %167 = tpu.concatenate %165, %166 in 1 : vector<4x64xf32>, vector<4x64xf32> -> vector<4x128xf32>
    %168 = vector.extract_strided_slice %97 {offsets = [4, 0], sizes = [4, 128], strides = [1, 1]} : vector<8x128xf32> to vector<4x128xf32>
    %169 = tpu.concatenate %168, %167 in 0 : vector<4x128xf32>, vector<4x128xf32> -> vector<8x128xf32>
    %c0_52 = arith.constant 0 : index
    %c0_53 = arith.constant 0 : index
    %c0_54 = arith.constant 0 : index
    %170 = vector.load %arg12[%c0_52, %c0_53, %c0_54] : memref<2x8x128xf32, #tpu.memory_space<vmem>>, vector<1x8x128xf32>
    %171 = vector.shape_cast %170 : vector<1x8x128xf32> to vector<8x128xf32>
    %172 = vector.shape_cast %169 : vector<8x128xf32> to vector<1x8x128xf32>
    tpu.vector_store %arg12[%c0_52, %c0_53, %c0_54], %172 {strides = array<i32>} : memref<2x8x128xf32, #tpu.memory_space<vmem>>, vector<1x8x128xf32>,
    %cst_55 = arith.constant dense<0.000000e+00> : vector<8x64xf32>
    %173 = tpu.matmul %164, %62, %cst_55 {dimension_numbers = #tpu.dot_dimension_numbers<[1], [0], [0], [1], [0, 0, 1, 1], [], []>} : vector<8x32xf32>, vector<32x64xf32>, vector<8x64xf32> -> vector<8x64xf32>
    %174 = vector.broadcast %71 : vector<1x64xf32> to vector<8x64xf32>
    %175 = arith.addf %173, %174 : vector<8x64xf32>
    %176 = arith.negf %175 : vector<8x64xf32>
    %177 = math.exp %176 : vector<8x64xf32>
    %cst_56 = arith.constant 1.000000e+00 : f32
    %178 = vector.broadcast %cst_56 : f32 to vector<8x64xf32>
    %179 = arith.addf %178, %177 : vector<8x64xf32>
    %180 = arith.divf %178, %179 : vector<8x64xf32>
    %181 = arith.mulf %175, %180 : vector<8x64xf32>
    %cst_57 = arith.constant dense<0.000000e+00> : vector<8x32xf32>
    %182 = tpu.matmul %181, %67, %cst_57 {dimension_numbers = #tpu.dot_dimension_numbers<[1], [0], [0], [1], [0, 0, 1, 1], [], []>} : vector<8x64xf32>, vector<64x32xf32>, vector<8x32xf32> -> vector<8x32xf32>
    %183 = arith.addf %164, %182 : vector<8x32xf32>
    %184 = vector.broadcast %72 : vector<1x32xf32> to vector<8x32xf32>
    %185 = arith.addf %183, %184 : vector<8x32xf32>
    %186 = vector.extract_strided_slice %79 {offsets = [1, 0], sizes = [1, 32], strides = [1, 1]} : vector<4x32xf32> to vector<1x32xf32>
    %187 = vector.extract_strided_slice %80 {offsets = [1, 0], sizes = [1, 32], strides = [1, 1]} : vector<4x32xf32> to vector<1x32xf32>
    %cst_58 = arith.constant dense<0.000000e+00> : vector<8xf32>
    %188 = vector.multi_reduction <add>, %185, %cst_58 [1] : vector<8x32xf32> to vector<8xf32>
    %189 = vector.shape_cast %188 : vector<8xf32> to vector<8x1xf32>
    %cst_59 = arith.constant 3.200000e+01 : f32
    %190 = vector.broadcast %cst_59 : f32 to vector<8x1xf32>
    %191 = arith.divf %189, %190 : vector<8x1xf32>
    %192 = vector.broadcast %191 : vector<8x1xf32> to vector<8x32xf32>
    %193 = arith.subf %185, %192 : vector<8x32xf32>
    %194 = arith.mulf %193, %193 : vector<8x32xf32>
    %cst_60 = arith.constant dense<0.000000e+00> : vector<8xf32>
    %195 = vector.multi_reduction <add>, %194, %cst_60 [1] : vector<8x32xf32> to vector<8xf32>
    %196 = vector.shape_cast %195 : vector<8xf32> to vector<8x1xf32>
    %cst_61 = arith.constant 3.200000e+01 : f32
    %197 = vector.broadcast %cst_61 : f32 to vector<8x1xf32>
    %198 = arith.divf %196, %197 : vector<8x1xf32>
    %cst_62 = arith.constant 9.99999974E-6 : f32
    %199 = vector.broadcast %cst_62 : f32 to vector<8x1xf32>
    %200 = arith.addf %198, %199 : vector<8x1xf32>
    %201 = math.rsqrt %200 : vector<8x1xf32>
    %202 = vector.broadcast %201 : vector<8x1xf32> to vector<8x32xf32>
    %203 = arith.mulf %193, %202 : vector<8x32xf32>
    %204 = vector.broadcast %186 : vector<1x32xf32> to vector<8x32xf32>
    %205 = arith.mulf %203, %204 : vector<8x32xf32>
    %206 = vector.broadcast %187 : vector<1x32xf32> to vector<8x32xf32>
    %207 = arith.addf %205, %206 : vector<8x32xf32>
    %208 = vector.extract_strided_slice %207 {offsets = [2, 0], sizes = [2, 32], strides = [1, 1]} : vector<8x32xf32> to vector<2x32xf32>
    %209 = vector.extract_strided_slice %207 {offsets = [6, 0], sizes = [2, 32], strides = [1, 1]} : vector<8x32xf32> to vector<2x32xf32>
    %210 = tpu.concatenate %208, %209 in 0 : vector<2x32xf32>, vector<2x32xf32> -> vector<4x32xf32>
    %c0_63 = arith.constant 0 : index
    %c0_64 = arith.constant 0 : index
    %c0_65 = arith.constant 0 : index
    %211 = vector.load %arg13[%c0_63, %c0_64, %c0_65] : memref<2x4x32xf32, #tpu.memory_space<vmem>>, vector<1x4x32xf32>
    %212 = vector.shape_cast %211 : vector<1x4x32xf32> to vector<4x32xf32>
    %213 = vector.shape_cast %210 : vector<4x32xf32> to vector<1x4x32xf32>
    tpu.vector_store %arg13[%c0_63, %c0_64, %c0_65], %213 {strides = array<i32>} : memref<2x4x32xf32, #tpu.memory_space<vmem>>, vector<1x4x32xf32>,
    %c0_66 = arith.constant 0 : index
    %c0_67 = arith.constant 0 : index
    %c0_68 = arith.constant 0 : index
    %214 = vector.load %arg4[%c0_66, %c0_67, %c0_68] : memref<2x4x32xf32, #tpu.memory_space<vmem>>, vector<1x4x32xf32>
    %215 = vector.shape_cast %214 : vector<1x4x32xf32> to vector<4x32xf32>
    %216 = vector.extract_strided_slice %215 {offsets = [0, 0], sizes = [2, 32], strides = [1, 1]} : vector<4x32xf32> to vector<2x32xf32>
    %217 = vector.extract_strided_slice %207 {offsets = [0, 0], sizes = [4, 32], strides = [1, 1]} : vector<8x32xf32> to vector<4x32xf32>
    %218 = vector.extract_strided_slice %215 {offsets = [2, 0], sizes = [2, 32], strides = [1, 1]} : vector<4x32xf32> to vector<2x32xf32>
    %219 = vector.extract_strided_slice %207 {offsets = [4, 0], sizes = [4, 32], strides = [1, 1]} : vector<8x32xf32> to vector<4x32xf32>
    %220 = tpu.concatenate %216, %217, %218, %219 in 0 : vector<2x32xf32>, vector<4x32xf32>, vector<2x32xf32>, vector<4x32xf32> -> vector<12x32xf32>
    %cst_69 = arith.constant dense<0.000000e+00> : vector<12x64xf32>
    %221 = tpu.matmul %220, %64, %cst_69 {dimension_numbers = #tpu.dot_dimension_numbers<[1], [0], [0], [1], [0, 0, 1, 1], [], []>} : vector<12x32xf32>, vector<32x64xf32>, vector<12x64xf32> -> vector<12x64xf32>
    %222 = vector.broadcast %75 : vector<1x64xf32> to vector<12x64xf32>
    %223 = arith.addf %221, %222 : vector<12x64xf32>
    %224 = vector.extract_strided_slice %223 {offsets = [0, 0], sizes = [12, 32], strides = [1, 1]} : vector<12x64xf32> to vector<12x32xf32>
    %225 = vector.extract_strided_slice %223 {offsets = [0, 32], sizes = [12, 32], strides = [1, 1]} : vector<12x64xf32> to vector<12x32xf32>
    %226 = arith.negf %225 : vector<12x32xf32>
    %227 = math.exp %226 : vector<12x32xf32>
    %cst_70 = arith.constant 1.000000e+00 : f32
    %228 = vector.broadcast %cst_70 : f32 to vector<12x32xf32>
    %229 = arith.addf %228, %227 : vector<12x32xf32>
    %230 = arith.divf %228, %229 : vector<12x32xf32>
    %231 = arith.mulf %224, %230 : vector<12x32xf32>
    %cst_71 = arith.constant 0.000000e+00 : f32
    %232 = vector.broadcast %cst_71 : f32 to vector<8x32xf32>
    %233 = vector.extract_strided_slice %231 {offsets = [0, 0], sizes = [4, 32], strides = [1, 1]} : vector<12x32xf32> to vector<4x32xf32>
    %234 = vector.extract_strided_slice %231 {offsets = [6, 0], sizes = [4, 32], strides = [1, 1]} : vector<12x32xf32> to vector<4x32xf32>
    %235 = tpu.concatenate %233, %234 in 0 : vector<4x32xf32>, vector<4x32xf32> -> vector<8x32xf32>
    %236 = vector.extract_strided_slice %78 {offsets = [0, 0], sizes = [1, 32], strides = [1, 1]} : vector<3x32xf32> to vector<1x32xf32>
    %237 = vector.broadcast %236 : vector<1x32xf32> to vector<8x32xf32>
    %238 = arith.mulf %235, %237 : vector<8x32xf32>
    %239 = arith.addf %232, %238 : vector<8x32xf32>
    %240 = vector.extract_strided_slice %231 {offsets = [1, 0], sizes = [4, 32], strides = [1, 1]} : vector<12x32xf32> to vector<4x32xf32>
    %241 = vector.extract_strided_slice %231 {offsets = [7, 0], sizes = [4, 32], strides = [1, 1]} : vector<12x32xf32> to vector<4x32xf32>
    %242 = tpu.concatenate %240, %241 in 0 : vector<4x32xf32>, vector<4x32xf32> -> vector<8x32xf32>
    %243 = vector.extract_strided_slice %78 {offsets = [1, 0], sizes = [1, 32], strides = [1, 1]} : vector<3x32xf32> to vector<1x32xf32>
    %244 = vector.broadcast %243 : vector<1x32xf32> to vector<8x32xf32>
    %245 = arith.mulf %242, %244 : vector<8x32xf32>
    %246 = arith.addf %239, %245 : vector<8x32xf32>
    %247 = vector.extract_strided_slice %231 {offsets = [2, 0], sizes = [4, 32], strides = [1, 1]} : vector<12x32xf32> to vector<4x32xf32>
    %248 = vector.extract_strided_slice %231 {offsets = [8, 0], sizes = [4, 32], strides = [1, 1]} : vector<12x32xf32> to vector<4x32xf32>
    %249 = tpu.concatenate %247, %248 in 0 : vector<4x32xf32>, vector<4x32xf32> -> vector<8x32xf32>
    %250 = vector.extract_strided_slice %78 {offsets = [2, 0], sizes = [1, 32], strides = [1, 1]} : vector<3x32xf32> to vector<1x32xf32>
    %251 = vector.broadcast %250 : vector<1x32xf32> to vector<8x32xf32>
    %252 = arith.mulf %249, %251 : vector<8x32xf32>
    %253 = arith.addf %246, %252 : vector<8x32xf32>
    %254 = vector.broadcast %77 : vector<1x32xf32> to vector<8x32xf32>
    %255 = arith.addf %253, %254 : vector<8x32xf32>
    %256 = arith.negf %255 : vector<8x32xf32>
    %257 = math.exp %256 : vector<8x32xf32>
    %cst_72 = arith.constant 1.000000e+00 : f32
    %258 = vector.broadcast %cst_72 : f32 to vector<8x32xf32>
    %259 = arith.addf %258, %257 : vector<8x32xf32>
    %260 = arith.divf %258, %259 : vector<8x32xf32>
    %261 = arith.mulf %255, %260 : vector<8x32xf32>
    %cst_73 = arith.constant dense<0.000000e+00> : vector<8x32xf32>
    %262 = tpu.matmul %261, %66, %cst_73 {dimension_numbers = #tpu.dot_dimension_numbers<[1], [0], [0], [1], [0, 0, 1, 1], [], []>} : vector<8x32xf32>, vector<32x32xf32>, vector<8x32xf32> -> vector<8x32xf32>
    %263 = vector.broadcast %76 : vector<1x32xf32> to vector<8x32xf32>
    %264 = arith.addf %262, %263 : vector<8x32xf32>
    %265 = arith.addf %207, %264 : vector<8x32xf32>
    %266 = vector.extract_strided_slice %79 {offsets = [2, 0], sizes = [1, 32], strides = [1, 1]} : vector<4x32xf32> to vector<1x32xf32>
    %267 = vector.extract_strided_slice %80 {offsets = [2, 0], sizes = [1, 32], strides = [1, 1]} : vector<4x32xf32> to vector<1x32xf32>
    %cst_74 = arith.constant dense<0.000000e+00> : vector<8xf32>
    %268 = vector.multi_reduction <add>, %265, %cst_74 [1] : vector<8x32xf32> to vector<8xf32>
    %269 = vector.shape_cast %268 : vector<8xf32> to vector<8x1xf32>
    %cst_75 = arith.constant 3.200000e+01 : f32
    %270 = vector.broadcast %cst_75 : f32 to vector<8x1xf32>
    %271 = arith.divf %269, %270 : vector<8x1xf32>
    %272 = vector.broadcast %271 : vector<8x1xf32> to vector<8x32xf32>
    %273 = arith.subf %265, %272 : vector<8x32xf32>
    %274 = arith.mulf %273, %273 : vector<8x32xf32>
    %cst_76 = arith.constant dense<0.000000e+00> : vector<8xf32>
    %275 = vector.multi_reduction <add>, %274, %cst_76 [1] : vector<8x32xf32> to vector<8xf32>
    %276 = vector.shape_cast %275 : vector<8xf32> to vector<8x1xf32>
    %cst_77 = arith.constant 3.200000e+01 : f32
    %277 = vector.broadcast %cst_77 : f32 to vector<8x1xf32>
    %278 = arith.divf %276, %277 : vector<8x1xf32>
    %cst_78 = arith.constant 9.99999974E-6 : f32
    %279 = vector.broadcast %cst_78 : f32 to vector<8x1xf32>
    %280 = arith.addf %278, %279 : vector<8x1xf32>
    %281 = math.rsqrt %280 : vector<8x1xf32>
    %282 = vector.broadcast %281 : vector<8x1xf32> to vector<8x32xf32>
    %283 = arith.mulf %273, %282 : vector<8x32xf32>
    %284 = vector.broadcast %266 : vector<1x32xf32> to vector<8x32xf32>
    %285 = arith.mulf %283, %284 : vector<8x32xf32>
    %286 = vector.broadcast %267 : vector<1x32xf32> to vector<8x32xf32>
    %287 = arith.addf %285, %286 : vector<8x32xf32>
    %cst_79 = arith.constant dense<0.000000e+00> : vector<8x64xf32>
    %288 = tpu.matmul %287, %63, %cst_79 {dimension_numbers = #tpu.dot_dimension_numbers<[1], [0], [0], [1], [0, 0, 1, 1], [], []>} : vector<8x32xf32>, vector<32x64xf32>, vector<8x64xf32> -> vector<8x64xf32>
    %289 = vector.broadcast %74 : vector<1x64xf32> to vector<8x64xf32>
    %290 = arith.addf %288, %289 : vector<8x64xf32>
    %291 = arith.negf %290 : vector<8x64xf32>
    %292 = math.exp %291 : vector<8x64xf32>
    %cst_80 = arith.constant 1.000000e+00 : f32
    %293 = vector.broadcast %cst_80 : f32 to vector<8x64xf32>
    %294 = arith.addf %293, %292 : vector<8x64xf32>
    %295 = arith.divf %293, %294 : vector<8x64xf32>
    %296 = arith.mulf %290, %295 : vector<8x64xf32>
    %cst_81 = arith.constant dense<0.000000e+00> : vector<8x32xf32>
    %297 = tpu.matmul %296, %68, %cst_81 {dimension_numbers = #tpu.dot_dimension_numbers<[1], [0], [0], [1], [0, 0, 1, 1], [], []>} : vector<8x64xf32>, vector<64x32xf32>, vector<8x32xf32> -> vector<8x32xf32>
    %298 = arith.addf %287, %297 : vector<8x32xf32>
    %299 = vector.broadcast %73 : vector<1x32xf32> to vector<8x32xf32>
    %300 = arith.addf %298, %299 : vector<8x32xf32>
    %301 = vector.extract_strided_slice %79 {offsets = [3, 0], sizes = [1, 32], strides = [1, 1]} : vector<4x32xf32> to vector<1x32xf32>
    %302 = vector.extract_strided_slice %80 {offsets = [3, 0], sizes = [1, 32], strides = [1, 1]} : vector<4x32xf32> to vector<1x32xf32>
    %cst_82 = arith.constant dense<0.000000e+00> : vector<8xf32>
    %303 = vector.multi_reduction <add>, %300, %cst_82 [1] : vector<8x32xf32> to vector<8xf32>
    %304 = vector.shape_cast %303 : vector<8xf32> to vector<8x1xf32>
    %cst_83 = arith.constant 3.200000e+01 : f32
    %305 = vector.broadcast %cst_83 : f32 to vector<8x1xf32>
    %306 = arith.divf %304, %305 : vector<8x1xf32>
    %307 = vector.broadcast %306 : vector<8x1xf32> to vector<8x32xf32>
    %308 = arith.subf %300, %307 : vector<8x32xf32>
    %309 = arith.mulf %308, %308 : vector<8x32xf32>
    %cst_84 = arith.constant dense<0.000000e+00> : vector<8xf32>
    %310 = vector.multi_reduction <add>, %309, %cst_84 [1] : vector<8x32xf32> to vector<8xf32>
    %311 = vector.shape_cast %310 : vector<8xf32> to vector<8x1xf32>
    %cst_85 = arith.constant 3.200000e+01 : f32
    %312 = vector.broadcast %cst_85 : f32 to vector<8x1xf32>
    %313 = arith.divf %311, %312 : vector<8x1xf32>
    %cst_86 = arith.constant 9.99999974E-6 : f32
    %314 = vector.broadcast %cst_86 : f32 to vector<8x1xf32>
    %315 = arith.addf %313, %314 : vector<8x1xf32>
    %316 = math.rsqrt %315 : vector<8x1xf32>
    %317 = vector.broadcast %316 : vector<8x1xf32> to vector<8x32xf32>
    %318 = arith.mulf %308, %317 : vector<8x32xf32>
    %319 = vector.broadcast %301 : vector<1x32xf32> to vector<8x32xf32>
    %320 = arith.mulf %318, %319 : vector<8x32xf32>
    %321 = vector.broadcast %302 : vector<1x32xf32> to vector<8x32xf32>
    %322 = arith.addf %320, %321 : vector<8x32xf32>
    %c1 = arith.constant 1 : index
    %c0_87 = arith.constant 0 : index
    %c0_88 = arith.constant 0 : index
    %323 = vector.load %arg7[%c1, %c0_87, %c0_88] : memref<2x32x384xf32, #tpu.memory_space<vmem>>, vector<1x32x384xf32>
    %324 = vector.shape_cast %323 : vector<1x32x384xf32> to vector<32x384xf32>
    %c1_89 = arith.constant 1 : index
    %c0_90 = arith.constant 0 : index
    %c0_91 = arith.constant 0 : index
    %325 = vector.load %arg8[%c1_89, %c0_90, %c0_91] : memref<2x64x64xf32, #tpu.memory_space<vmem>>, vector<1x64x64xf32>
    %326 = vector.shape_cast %325 : vector<1x64x64xf32> to vector<64x64xf32>
    %c1_92 = arith.constant 1 : index
    %c0_93 = arith.constant 0 : index
    %c0_94 = arith.constant 0 : index
    %327 = vector.load %arg9[%c1_92, %c0_93, %c0_94] : memref<2x32x128xf32, #tpu.memory_space<vmem>>, vector<1x32x128xf32>
    %328 = vector.shape_cast %327 : vector<1x32x128xf32> to vector<32x128xf32>
    %329 = vector.extract_strided_slice %324 {offsets = [0, 0], sizes = [32, 96], strides = [1, 1]} : vector<32x384xf32> to vector<32x96xf32>
    %330 = vector.extract_strided_slice %324 {offsets = [0, 96], sizes = [32, 32], strides = [1, 1]} : vector<32x384xf32> to vector<32x32xf32>
    %331 = vector.extract_strided_slice %324 {offsets = [0, 128], sizes = [32, 64], strides = [1, 1]} : vector<32x384xf32> to vector<32x64xf32>
    %332 = vector.extract_strided_slice %324 {offsets = [0, 192], sizes = [32, 64], strides = [1, 1]} : vector<32x384xf32> to vector<32x64xf32>
    %333 = vector.extract_strided_slice %324 {offsets = [0, 256], sizes = [32, 64], strides = [1, 1]} : vector<32x384xf32> to vector<32x64xf32>
    %334 = vector.extract_strided_slice %324 {offsets = [0, 320], sizes = [32, 32], strides = [1, 1]} : vector<32x384xf32> to vector<32x32xf32>
    %335 = vector.extract_strided_slice %324 {offsets = [0, 352], sizes = [32, 32], strides = [1, 1]} : vector<32x384xf32> to vector<32x32xf32>
    %336 = vector.extract_strided_slice %326 {offsets = [0, 0], sizes = [64, 32], strides = [1, 1]} : vector<64x64xf32> to vector<64x32xf32>
    %337 = vector.extract_strided_slice %326 {offsets = [0, 32], sizes = [64, 32], strides = [1, 1]} : vector<64x64xf32> to vector<64x32xf32>
    %338 = vector.extract_strided_slice %328 {offsets = [0, 0], sizes = [1, 96], strides = [1, 1]} : vector<32x128xf32> to vector<1x96xf32>
    %339 = vector.extract_strided_slice %328 {offsets = [0, 96], sizes = [1, 32], strides = [1, 1]} : vector<32x128xf32> to vector<1x32xf32>
    %340 = vector.extract_strided_slice %328 {offsets = [1, 0], sizes = [1, 64], strides = [1, 1]} : vector<32x128xf32> to vector<1x64xf32>
    %341 = vector.extract_strided_slice %328 {offsets = [1, 64], sizes = [1, 32], strides = [1, 1]} : vector<32x128xf32> to vector<1x32xf32>
    %342 = vector.extract_strided_slice %328 {offsets = [1, 96], sizes = [1, 32], strides = [1, 1]} : vector<32x128xf32> to vector<1x32xf32>
    %343 = vector.extract_strided_slice %328 {offsets = [2, 0], sizes = [1, 64], strides = [1, 1]} : vector<32x128xf32> to vector<1x64xf32>
    %344 = vector.extract_strided_slice %328 {offsets = [2, 64], sizes = [1, 64], strides = [1, 1]} : vector<32x128xf32> to vector<1x64xf32>
    %345 = vector.extract_strided_slice %328 {offsets = [3, 0], sizes = [1, 32], strides = [1, 1]} : vector<32x128xf32> to vector<1x32xf32>
    %346 = vector.extract_strided_slice %328 {offsets = [3, 32], sizes = [1, 32], strides = [1, 1]} : vector<32x128xf32> to vector<1x32xf32>
    %347 = vector.extract_strided_slice %328 {offsets = [4, 0], sizes = [3, 32], strides = [1, 1]} : vector<32x128xf32> to vector<3x32xf32>
    %348 = vector.extract_strided_slice %328 {offsets = [8, 0], sizes = [4, 32], strides = [1, 1]} : vector<32x128xf32> to vector<4x32xf32>
    %349 = vector.extract_strided_slice %328 {offsets = [8, 32], sizes = [4, 32], strides = [1, 1]} : vector<32x128xf32> to vector<4x32xf32>
    %350 = vector.extract_strided_slice %328 {offsets = [16, 0], sizes = [16, 16], strides = [1, 1]} : vector<32x128xf32> to vector<16x16xf32>
    %351 = vector.extract_strided_slice %328 {offsets = [16, 16], sizes = [16, 16], strides = [1, 1]} : vector<32x128xf32> to vector<16x16xf32>
    %cst_95 = arith.constant dense<0.000000e+00> : vector<8x96xf32>
    %352 = tpu.matmul %322, %329, %cst_95 {dimension_numbers = #tpu.dot_dimension_numbers<[1], [0], [0], [1], [0, 0, 1, 1], [], []>} : vector<8x32xf32>, vector<32x96xf32>, vector<8x96xf32> -> vector<8x96xf32>
    %353 = vector.broadcast %338 : vector<1x96xf32> to vector<8x96xf32>
    %354 = arith.addf %352, %353 : vector<8x96xf32>
    %cst_96 = arith.constant dense<0.000000e+00> : vector<24x32xf32>
    %355 = tpu.matmul %52, %334, %cst_96 {dimension_numbers = #tpu.dot_dimension_numbers<[1], [0], [0], [1], [0, 0, 1, 1], [], []>} : vector<24x32xf32>, vector<32x32xf32>, vector<24x32xf32> -> vector<24x32xf32>
    %356 = vector.extract_strided_slice %354 {offsets = [0, 0], sizes = [8, 16], strides = [1, 1]} : vector<8x96xf32> to vector<8x16xf32>
    %357 = vector.extract_strided_slice %354 {offsets = [0, 16], sizes = [8, 16], strides = [1, 1]} : vector<8x96xf32> to vector<8x16xf32>
    %358 = tpu.concatenate %356, %357 in 0 : vector<8x16xf32>, vector<8x16xf32> -> vector<16x16xf32>
    %359 = vector.extract_strided_slice %354 {offsets = [0, 32], sizes = [8, 16], strides = [1, 1]} : vector<8x96xf32> to vector<8x16xf32>
    %360 = vector.extract_strided_slice %354 {offsets = [0, 48], sizes = [8, 16], strides = [1, 1]} : vector<8x96xf32> to vector<8x16xf32>
    %361 = tpu.concatenate %359, %360 in 0 : vector<8x16xf32>, vector<8x16xf32> -> vector<16x16xf32>
    %362 = vector.extract_strided_slice %354 {offsets = [0, 64], sizes = [8, 16], strides = [1, 1]} : vector<8x96xf32> to vector<8x16xf32>
    %363 = vector.extract_strided_slice %354 {offsets = [0, 80], sizes = [8, 16], strides = [1, 1]} : vector<8x96xf32> to vector<8x16xf32>
    %364 = tpu.concatenate %362, %363 in 0 : vector<8x16xf32>, vector<8x16xf32> -> vector<16x16xf32>
    %c1_97 = arith.constant 1 : index
    %c0_98 = arith.constant 0 : index
    %c0_99 = arith.constant 0 : index
    %365 = vector.load %arg3[%c1_97, %c0_98, %c0_99] : memref<2x8x128xf32, #tpu.memory_space<vmem>>, vector<1x8x128xf32>
    %366 = vector.shape_cast %365 : vector<1x8x128xf32> to vector<8x128xf32>
    %367 = vector.extract_strided_slice %366 {offsets = [0, 0], sizes = [8, 16], strides = [1, 1]} : vector<8x128xf32> to vector<8x16xf32>
    %368 = vector.extract_strided_slice %366 {offsets = [0, 64], sizes = [8, 16], strides = [1, 1]} : vector<8x128xf32> to vector<8x16xf32>
    %369 = vector.extract_strided_slice %366 {offsets = [0, 16], sizes = [8, 16], strides = [1, 1]} : vector<8x128xf32> to vector<8x16xf32>
    %370 = vector.extract_strided_slice %366 {offsets = [0, 80], sizes = [8, 16], strides = [1, 1]} : vector<8x128xf32> to vector<8x16xf32>
    %371 = tpu.concatenate %367, %368, %369, %370 in 0 : vector<8x16xf32>, vector<8x16xf32>, vector<8x16xf32>, vector<8x16xf32> -> vector<32x16xf32>
    %372 = vector.extract_strided_slice %366 {offsets = [0, 32], sizes = [8, 16], strides = [1, 1]} : vector<8x128xf32> to vector<8x16xf32>
    %373 = vector.extract_strided_slice %366 {offsets = [0, 96], sizes = [8, 16], strides = [1, 1]} : vector<8x128xf32> to vector<8x16xf32>
    %374 = vector.extract_strided_slice %366 {offsets = [0, 48], sizes = [8, 16], strides = [1, 1]} : vector<8x128xf32> to vector<8x16xf32>
    %375 = vector.extract_strided_slice %366 {offsets = [0, 112], sizes = [8, 16], strides = [1, 1]} : vector<8x128xf32> to vector<8x16xf32>
    %376 = tpu.concatenate %372, %373, %374, %375 in 0 : vector<8x16xf32>, vector<8x16xf32>, vector<8x16xf32>, vector<8x16xf32> -> vector<32x16xf32>
    %377 = vector.extract_strided_slice %355 {offsets = [0, 0], sizes = [16, 16], strides = [1, 1]} : vector<24x32xf32> to vector<16x16xf32>
    %378 = vector.extract_strided_slice %355 {offsets = [0, 16], sizes = [16, 16], strides = [1, 1]} : vector<24x32xf32> to vector<16x16xf32>
    %379 = tpu.concatenate %377, %378 in 0 : vector<16x16xf32>, vector<16x16xf32> -> vector<32x16xf32>
    %380 = vector.extract_strided_slice %355 {offsets = [16, 0], sizes = [8, 16], strides = [1, 1]} : vector<24x32xf32> to vector<8x16xf32>
    %381 = vector.extract_strided_slice %355 {offsets = [16, 16], sizes = [8, 16], strides = [1, 1]} : vector<24x32xf32> to vector<8x16xf32>
    %382 = tpu.concatenate %380, %381 in 0 : vector<8x16xf32>, vector<8x16xf32> -> vector<16x16xf32>
    %383 = tpu.concatenate %371, %361 in 0 : vector<32x16xf32>, vector<16x16xf32> -> vector<48x16xf32>
    %384 = tpu.concatenate %376, %364 in 0 : vector<32x16xf32>, vector<16x16xf32> -> vector<48x16xf32>
    %385 = tpu.concatenate %379, %382 in 0 : vector<32x16xf32>, vector<16x16xf32> -> vector<48x16xf32>
    %386 = arith.addf %358, %350 : vector<16x16xf32>
    %387 = arith.addf %358, %351 : vector<16x16xf32>
    %cst_100 = arith.constant dense<0.000000e+00> : vector<16x48xf32>
    %388 = tpu.matmul %386, %383, %cst_100 {dimension_numbers = #tpu.dot_dimension_numbers<[1], [1], [0], [0], [0, 0, 1, 0], [], []>} : vector<16x16xf32>, vector<48x16xf32>, vector<16x48xf32> -> vector<16x48xf32>
    %cst_101 = arith.constant dense<0.000000e+00> : vector<16x48xf32>
    %389 = tpu.matmul %387, %385, %cst_101 {dimension_numbers = #tpu.dot_dimension_numbers<[1], [1], [0], [0], [0, 0, 1, 0], [], []>} : vector<16x16xf32>, vector<48x16xf32>, vector<16x48xf32> -> vector<16x48xf32>
    %390 = arith.addf %388, %389 : vector<16x48xf32>
    %cst_102 = arith.constant 2.500000e-01 : f32
    %391 = vector.broadcast %cst_102 : f32 to vector<16x48xf32>
    %392 = arith.mulf %390, %391 : vector<16x48xf32>
    %393 = arith.addf %392, %53 : vector<16x48xf32>
    %cst_103 = arith.constant dense<0xFF800000> : vector<16xf32>
    %394 = vector.multi_reduction <maximumf>, %393, %cst_103 [1] : vector<16x48xf32> to vector<16xf32>
    %395 = vector.shape_cast %394 : vector<16xf32> to vector<16x1xf32>
    %396 = vector.broadcast %395 : vector<16x1xf32> to vector<16x48xf32>
    %397 = arith.subf %393, %396 : vector<16x48xf32>
    %398 = math.exp %397 : vector<16x48xf32>
    %cst_104 = arith.constant dense<0.000000e+00> : vector<16xf32>
    %399 = vector.multi_reduction <add>, %398, %cst_104 [1] : vector<16x48xf32> to vector<16xf32>
    %400 = vector.shape_cast %399 : vector<16xf32> to vector<16x1xf32>
    %401 = tpu.reciprocal %400 {approx = true} : vector<16x1xf32> -> vector<16x1xf32>
    %402 = vector.broadcast %401 : vector<16x1xf32> to vector<16x48xf32>
    %403 = arith.mulf %398, %402 : vector<16x48xf32>
    %cst_105 = arith.constant dense<0.000000e+00> : vector<16x16xf32>
    %404 = tpu.matmul %403, %384, %cst_105 {dimension_numbers = #tpu.dot_dimension_numbers<[1], [0], [0], [1], [0, 0, 1, 1], [], []>} : vector<16x48xf32>, vector<48x16xf32>, vector<16x16xf32> -> vector<16x16xf32>
    %405 = vector.extract_strided_slice %404 {offsets = [0, 0], sizes = [8, 16], strides = [1, 1]} : vector<16x16xf32> to vector<8x16xf32>
    %406 = vector.extract_strided_slice %404 {offsets = [8, 0], sizes = [8, 16], strides = [1, 1]} : vector<16x16xf32> to vector<8x16xf32>
    %407 = tpu.concatenate %405, %406 in 1 : vector<8x16xf32>, vector<8x16xf32> -> vector<8x32xf32>
    %cst_106 = arith.constant dense<0.000000e+00> : vector<8x32xf32>
    %408 = tpu.matmul %407, %330, %cst_106 {dimension_numbers = #tpu.dot_dimension_numbers<[1], [0], [0], [1], [0, 0, 1, 1], [], []>} : vector<8x32xf32>, vector<32x32xf32>, vector<8x32xf32> -> vector<8x32xf32>
    %409 = vector.broadcast %339 : vector<1x32xf32> to vector<8x32xf32>
    %410 = arith.addf %408, %409 : vector<8x32xf32>
    %411 = arith.addf %322, %410 : vector<8x32xf32>
    %412 = vector.extract_strided_slice %348 {offsets = [0, 0], sizes = [1, 32], strides = [1, 1]} : vector<4x32xf32> to vector<1x32xf32>
    %413 = vector.extract_strided_slice %349 {offsets = [0, 0], sizes = [1, 32], strides = [1, 1]} : vector<4x32xf32> to vector<1x32xf32>
    %cst_107 = arith.constant dense<0.000000e+00> : vector<8xf32>
    %414 = vector.multi_reduction <add>, %411, %cst_107 [1] : vector<8x32xf32> to vector<8xf32>
    %415 = vector.shape_cast %414 : vector<8xf32> to vector<8x1xf32>
    %cst_108 = arith.constant 3.200000e+01 : f32
    %416 = vector.broadcast %cst_108 : f32 to vector<8x1xf32>
    %417 = arith.divf %415, %416 : vector<8x1xf32>
    %418 = vector.broadcast %417 : vector<8x1xf32> to vector<8x32xf32>
    %419 = arith.subf %411, %418 : vector<8x32xf32>
    %420 = arith.mulf %419, %419 : vector<8x32xf32>
    %cst_109 = arith.constant dense<0.000000e+00> : vector<8xf32>
    %421 = vector.multi_reduction <add>, %420, %cst_109 [1] : vector<8x32xf32> to vector<8xf32>
    %422 = vector.shape_cast %421 : vector<8xf32> to vector<8x1xf32>
    %cst_110 = arith.constant 3.200000e+01 : f32
    %423 = vector.broadcast %cst_110 : f32 to vector<8x1xf32>
    %424 = arith.divf %422, %423 : vector<8x1xf32>
    %cst_111 = arith.constant 9.99999974E-6 : f32
    %425 = vector.broadcast %cst_111 : f32 to vector<8x1xf32>
    %426 = arith.addf %424, %425 : vector<8x1xf32>
    %427 = math.rsqrt %426 : vector<8x1xf32>
    %428 = vector.broadcast %427 : vector<8x1xf32> to vector<8x32xf32>
    %429 = arith.mulf %419, %428 : vector<8x32xf32>
    %430 = vector.broadcast %412 : vector<1x32xf32> to vector<8x32xf32>
    %431 = arith.mulf %429, %430 : vector<8x32xf32>
    %432 = vector.broadcast %413 : vector<1x32xf32> to vector<8x32xf32>
    %433 = arith.addf %431, %432 : vector<8x32xf32>
    %434 = vector.extract_strided_slice %354 {offsets = [0, 32], sizes = [4, 64], strides = [1, 1]} : vector<8x96xf32> to vector<4x64xf32>
    %435 = vector.extract_strided_slice %354 {offsets = [4, 32], sizes = [4, 64], strides = [1, 1]} : vector<8x96xf32> to vector<4x64xf32>
    %436 = tpu.concatenate %434, %435 in 1 : vector<4x64xf32>, vector<4x64xf32> -> vector<4x128xf32>
    %437 = vector.extract_strided_slice %366 {offsets = [4, 0], sizes = [4, 128], strides = [1, 1]} : vector<8x128xf32> to vector<4x128xf32>
    %438 = tpu.concatenate %437, %436 in 0 : vector<4x128xf32>, vector<4x128xf32> -> vector<8x128xf32>
    %c1_112 = arith.constant 1 : index
    %c0_113 = arith.constant 0 : index
    %c0_114 = arith.constant 0 : index
    %439 = vector.load %arg12[%c1_112, %c0_113, %c0_114] : memref<2x8x128xf32, #tpu.memory_space<vmem>>, vector<1x8x128xf32>
    %440 = vector.shape_cast %439 : vector<1x8x128xf32> to vector<8x128xf32>
    %441 = vector.shape_cast %438 : vector<8x128xf32> to vector<1x8x128xf32>
    tpu.vector_store %arg12[%c1_112, %c0_113, %c0_114], %441 {strides = array<i32>} : memref<2x8x128xf32, #tpu.memory_space<vmem>>, vector<1x8x128xf32>,
    %cst_115 = arith.constant dense<0.000000e+00> : vector<8x64xf32>
    %442 = tpu.matmul %433, %331, %cst_115 {dimension_numbers = #tpu.dot_dimension_numbers<[1], [0], [0], [1], [0, 0, 1, 1], [], []>} : vector<8x32xf32>, vector<32x64xf32>, vector<8x64xf32> -> vector<8x64xf32>
    %443 = vector.broadcast %340 : vector<1x64xf32> to vector<8x64xf32>
    %444 = arith.addf %442, %443 : vector<8x64xf32>
    %445 = arith.negf %444 : vector<8x64xf32>
    %446 = math.exp %445 : vector<8x64xf32>
    %cst_116 = arith.constant 1.000000e+00 : f32
    %447 = vector.broadcast %cst_116 : f32 to vector<8x64xf32>
    %448 = arith.addf %447, %446 : vector<8x64xf32>
    %449 = arith.divf %447, %448 : vector<8x64xf32>
    %450 = arith.mulf %444, %449 : vector<8x64xf32>
    %cst_117 = arith.constant dense<0.000000e+00> : vector<8x32xf32>
    %451 = tpu.matmul %450, %336, %cst_117 {dimension_numbers = #tpu.dot_dimension_numbers<[1], [0], [0], [1], [0, 0, 1, 1], [], []>} : vector<8x64xf32>, vector<64x32xf32>, vector<8x32xf32> -> vector<8x32xf32>
    %452 = arith.addf %433, %451 : vector<8x32xf32>
    %453 = vector.broadcast %341 : vector<1x32xf32> to vector<8x32xf32>
    %454 = arith.addf %452, %453 : vector<8x32xf32>
    %455 = vector.extract_strided_slice %348 {offsets = [1, 0], sizes = [1, 32], strides = [1, 1]} : vector<4x32xf32> to vector<1x32xf32>
    %456 = vector.extract_strided_slice %349 {offsets = [1, 0], sizes = [1, 32], strides = [1, 1]} : vector<4x32xf32> to vector<1x32xf32>
    %cst_118 = arith.constant dense<0.000000e+00> : vector<8xf32>
    %457 = vector.multi_reduction <add>, %454, %cst_118 [1] : vector<8x32xf32> to vector<8xf32>
    %458 = vector.shape_cast %457 : vector<8xf32> to vector<8x1xf32>
    %cst_119 = arith.constant 3.200000e+01 : f32
    %459 = vector.broadcast %cst_119 : f32 to vector<8x1xf32>
    %460 = arith.divf %458, %459 : vector<8x1xf32>
    %461 = vector.broadcast %460 : vector<8x1xf32> to vector<8x32xf32>
    %462 = arith.subf %454, %461 : vector<8x32xf32>
    %463 = arith.mulf %462, %462 : vector<8x32xf32>
    %cst_120 = arith.constant dense<0.000000e+00> : vector<8xf32>
    %464 = vector.multi_reduction <add>, %463, %cst_120 [1] : vector<8x32xf32> to vector<8xf32>
    %465 = vector.shape_cast %464 : vector<8xf32> to vector<8x1xf32>
    %cst_121 = arith.constant 3.200000e+01 : f32
    %466 = vector.broadcast %cst_121 : f32 to vector<8x1xf32>
    %467 = arith.divf %465, %466 : vector<8x1xf32>
    %cst_122 = arith.constant 9.99999974E-6 : f32
    %468 = vector.broadcast %cst_122 : f32 to vector<8x1xf32>
    %469 = arith.addf %467, %468 : vector<8x1xf32>
    %470 = math.rsqrt %469 : vector<8x1xf32>
    %471 = vector.broadcast %470 : vector<8x1xf32> to vector<8x32xf32>
    %472 = arith.mulf %462, %471 : vector<8x32xf32>
    %473 = vector.broadcast %455 : vector<1x32xf32> to vector<8x32xf32>
    %474 = arith.mulf %472, %473 : vector<8x32xf32>
    %475 = vector.broadcast %456 : vector<1x32xf32> to vector<8x32xf32>
    %476 = arith.addf %474, %475 : vector<8x32xf32>
    %477 = vector.extract_strided_slice %476 {offsets = [2, 0], sizes = [2, 32], strides = [1, 1]} : vector<8x32xf32> to vector<2x32xf32>
    %478 = vector.extract_strided_slice %476 {offsets = [6, 0], sizes = [2, 32], strides = [1, 1]} : vector<8x32xf32> to vector<2x32xf32>
    %479 = tpu.concatenate %477, %478 in 0 : vector<2x32xf32>, vector<2x32xf32> -> vector<4x32xf32>
    %c1_123 = arith.constant 1 : index
    %c0_124 = arith.constant 0 : index
    %c0_125 = arith.constant 0 : index
    %480 = vector.load %arg13[%c1_123, %c0_124, %c0_125] : memref<2x4x32xf32, #tpu.memory_space<vmem>>, vector<1x4x32xf32>
    %481 = vector.shape_cast %480 : vector<1x4x32xf32> to vector<4x32xf32>
    %482 = vector.shape_cast %479 : vector<4x32xf32> to vector<1x4x32xf32>
    tpu.vector_store %arg13[%c1_123, %c0_124, %c0_125], %482 {strides = array<i32>} : memref<2x4x32xf32, #tpu.memory_space<vmem>>, vector<1x4x32xf32>,
    %c1_126 = arith.constant 1 : index
    %c0_127 = arith.constant 0 : index
    %c0_128 = arith.constant 0 : index
    %483 = vector.load %arg4[%c1_126, %c0_127, %c0_128] : memref<2x4x32xf32, #tpu.memory_space<vmem>>, vector<1x4x32xf32>
    %484 = vector.shape_cast %483 : vector<1x4x32xf32> to vector<4x32xf32>
    %485 = vector.extract_strided_slice %484 {offsets = [0, 0], sizes = [2, 32], strides = [1, 1]} : vector<4x32xf32> to vector<2x32xf32>
    %486 = vector.extract_strided_slice %476 {offsets = [0, 0], sizes = [4, 32], strides = [1, 1]} : vector<8x32xf32> to vector<4x32xf32>
    %487 = vector.extract_strided_slice %484 {offsets = [2, 0], sizes = [2, 32], strides = [1, 1]} : vector<4x32xf32> to vector<2x32xf32>
    %488 = vector.extract_strided_slice %476 {offsets = [4, 0], sizes = [4, 32], strides = [1, 1]} : vector<8x32xf32> to vector<4x32xf32>
    %489 = tpu.concatenate %485, %486, %487, %488 in 0 : vector<2x32xf32>, vector<4x32xf32>, vector<2x32xf32>, vector<4x32xf32> -> vector<12x32xf32>
    %cst_129 = arith.constant dense<0.000000e+00> : vector<12x64xf32>
    %490 = tpu.matmul %489, %333, %cst_129 {dimension_numbers = #tpu.dot_dimension_numbers<[1], [0], [0], [1], [0, 0, 1, 1], [], []>} : vector<12x32xf32>, vector<32x64xf32>, vector<12x64xf32> -> vector<12x64xf32>
    %491 = vector.broadcast %344 : vector<1x64xf32> to vector<12x64xf32>
    %492 = arith.addf %490, %491 : vector<12x64xf32>
    %493 = vector.extract_strided_slice %492 {offsets = [0, 0], sizes = [12, 32], strides = [1, 1]} : vector<12x64xf32> to vector<12x32xf32>
    %494 = vector.extract_strided_slice %492 {offsets = [0, 32], sizes = [12, 32], strides = [1, 1]} : vector<12x64xf32> to vector<12x32xf32>
    %495 = arith.negf %494 : vector<12x32xf32>
    %496 = math.exp %495 : vector<12x32xf32>
    %cst_130 = arith.constant 1.000000e+00 : f32
    %497 = vector.broadcast %cst_130 : f32 to vector<12x32xf32>
    %498 = arith.addf %497, %496 : vector<12x32xf32>
    %499 = arith.divf %497, %498 : vector<12x32xf32>
    %500 = arith.mulf %493, %499 : vector<12x32xf32>
    %cst_131 = arith.constant 0.000000e+00 : f32
    %501 = vector.broadcast %cst_131 : f32 to vector<8x32xf32>
    %502 = vector.extract_strided_slice %500 {offsets = [0, 0], sizes = [4, 32], strides = [1, 1]} : vector<12x32xf32> to vector<4x32xf32>
    %503 = vector.extract_strided_slice %500 {offsets = [6, 0], sizes = [4, 32], strides = [1, 1]} : vector<12x32xf32> to vector<4x32xf32>
    %504 = tpu.concatenate %502, %503 in 0 : vector<4x32xf32>, vector<4x32xf32> -> vector<8x32xf32>
    %505 = vector.extract_strided_slice %347 {offsets = [0, 0], sizes = [1, 32], strides = [1, 1]} : vector<3x32xf32> to vector<1x32xf32>
    %506 = vector.broadcast %505 : vector<1x32xf32> to vector<8x32xf32>
    %507 = arith.mulf %504, %506 : vector<8x32xf32>
    %508 = arith.addf %501, %507 : vector<8x32xf32>
    %509 = vector.extract_strided_slice %500 {offsets = [1, 0], sizes = [4, 32], strides = [1, 1]} : vector<12x32xf32> to vector<4x32xf32>
    %510 = vector.extract_strided_slice %500 {offsets = [7, 0], sizes = [4, 32], strides = [1, 1]} : vector<12x32xf32> to vector<4x32xf32>
    %511 = tpu.concatenate %509, %510 in 0 : vector<4x32xf32>, vector<4x32xf32> -> vector<8x32xf32>
    %512 = vector.extract_strided_slice %347 {offsets = [1, 0], sizes = [1, 32], strides = [1, 1]} : vector<3x32xf32> to vector<1x32xf32>
    %513 = vector.broadcast %512 : vector<1x32xf32> to vector<8x32xf32>
    %514 = arith.mulf %511, %513 : vector<8x32xf32>
    %515 = arith.addf %508, %514 : vector<8x32xf32>
    %516 = vector.extract_strided_slice %500 {offsets = [2, 0], sizes = [4, 32], strides = [1, 1]} : vector<12x32xf32> to vector<4x32xf32>
    %517 = vector.extract_strided_slice %500 {offsets = [8, 0], sizes = [4, 32], strides = [1, 1]} : vector<12x32xf32> to vector<4x32xf32>
    %518 = tpu.concatenate %516, %517 in 0 : vector<4x32xf32>, vector<4x32xf32> -> vector<8x32xf32>
    %519 = vector.extract_strided_slice %347 {offsets = [2, 0], sizes = [1, 32], strides = [1, 1]} : vector<3x32xf32> to vector<1x32xf32>
    %520 = vector.broadcast %519 : vector<1x32xf32> to vector<8x32xf32>
    %521 = arith.mulf %518, %520 : vector<8x32xf32>
    %522 = arith.addf %515, %521 : vector<8x32xf32>
    %523 = vector.broadcast %346 : vector<1x32xf32> to vector<8x32xf32>
    %524 = arith.addf %522, %523 : vector<8x32xf32>
    %525 = arith.negf %524 : vector<8x32xf32>
    %526 = math.exp %525 : vector<8x32xf32>
    %cst_132 = arith.constant 1.000000e+00 : f32
    %527 = vector.broadcast %cst_132 : f32 to vector<8x32xf32>
    %528 = arith.addf %527, %526 : vector<8x32xf32>
    %529 = arith.divf %527, %528 : vector<8x32xf32>
    %530 = arith.mulf %524, %529 : vector<8x32xf32>
    %cst_133 = arith.constant dense<0.000000e+00> : vector<8x32xf32>
    %531 = tpu.matmul %530, %335, %cst_133 {dimension_numbers = #tpu.dot_dimension_numbers<[1], [0], [0], [1], [0, 0, 1, 1], [], []>} : vector<8x32xf32>, vector<32x32xf32>, vector<8x32xf32> -> vector<8x32xf32>
    %532 = vector.broadcast %345 : vector<1x32xf32> to vector<8x32xf32>
    %533 = arith.addf %531, %532 : vector<8x32xf32>
    %534 = arith.addf %476, %533 : vector<8x32xf32>
    %535 = vector.extract_strided_slice %348 {offsets = [2, 0], sizes = [1, 32], strides = [1, 1]} : vector<4x32xf32> to vector<1x32xf32>
    %536 = vector.extract_strided_slice %349 {offsets = [2, 0], sizes = [1, 32], strides = [1, 1]} : vector<4x32xf32> to vector<1x32xf32>
    %cst_134 = arith.constant dense<0.000000e+00> : vector<8xf32>
    %537 = vector.multi_reduction <add>, %534, %cst_134 [1] : vector<8x32xf32> to vector<8xf32>
    %538 = vector.shape_cast %537 : vector<8xf32> to vector<8x1xf32>
    %cst_135 = arith.constant 3.200000e+01 : f32
    %539 = vector.broadcast %cst_135 : f32 to vector<8x1xf32>
    %540 = arith.divf %538, %539 : vector<8x1xf32>
    %541 = vector.broadcast %540 : vector<8x1xf32> to vector<8x32xf32>
    %542 = arith.subf %534, %541 : vector<8x32xf32>
    %543 = arith.mulf %542, %542 : vector<8x32xf32>
    %cst_136 = arith.constant dense<0.000000e+00> : vector<8xf32>
    %544 = vector.multi_reduction <add>, %543, %cst_136 [1] : vector<8x32xf32> to vector<8xf32>
    %545 = vector.shape_cast %544 : vector<8xf32> to vector<8x1xf32>
    %cst_137 = arith.constant 3.200000e+01 : f32
    %546 = vector.broadcast %cst_137 : f32 to vector<8x1xf32>
    %547 = arith.divf %545, %546 : vector<8x1xf32>
    %cst_138 = arith.constant 9.99999974E-6 : f32
    %548 = vector.broadcast %cst_138 : f32 to vector<8x1xf32>
    %549 = arith.addf %547, %548 : vector<8x1xf32>
    %550 = math.rsqrt %549 : vector<8x1xf32>
    %551 = vector.broadcast %550 : vector<8x1xf32> to vector<8x32xf32>
    %552 = arith.mulf %542, %551 : vector<8x32xf32>
    %553 = vector.broadcast %535 : vector<1x32xf32> to vector<8x32xf32>
    %554 = arith.mulf %552, %553 : vector<8x32xf32>
    %555 = vector.broadcast %536 : vector<1x32xf32> to vector<8x32xf32>
    %556 = arith.addf %554, %555 : vector<8x32xf32>
    %cst_139 = arith.constant dense<0.000000e+00> : vector<8x64xf32>
    %557 = tpu.matmul %556, %332, %cst_139 {dimension_numbers = #tpu.dot_dimension_numbers<[1], [0], [0], [1], [0, 0, 1, 1], [], []>} : vector<8x32xf32>, vector<32x64xf32>, vector<8x64xf32> -> vector<8x64xf32>
    %558 = vector.broadcast %343 : vector<1x64xf32> to vector<8x64xf32>
    %559 = arith.addf %557, %558 : vector<8x64xf32>
    %560 = arith.negf %559 : vector<8x64xf32>
    %561 = math.exp %560 : vector<8x64xf32>
    %cst_140 = arith.constant 1.000000e+00 : f32
    %562 = vector.broadcast %cst_140 : f32 to vector<8x64xf32>
    %563 = arith.addf %562, %561 : vector<8x64xf32>
    %564 = arith.divf %562, %563 : vector<8x64xf32>
    %565 = arith.mulf %559, %564 : vector<8x64xf32>
    %cst_141 = arith.constant dense<0.000000e+00> : vector<8x32xf32>
    %566 = tpu.matmul %565, %337, %cst_141 {dimension_numbers = #tpu.dot_dimension_numbers<[1], [0], [0], [1], [0, 0, 1, 1], [], []>} : vector<8x64xf32>, vector<64x32xf32>, vector<8x32xf32> -> vector<8x32xf32>
    %567 = arith.addf %556, %566 : vector<8x32xf32>
    %568 = vector.broadcast %342 : vector<1x32xf32> to vector<8x32xf32>
    %569 = arith.addf %567, %568 : vector<8x32xf32>
    %570 = vector.extract_strided_slice %348 {offsets = [3, 0], sizes = [1, 32], strides = [1, 1]} : vector<4x32xf32> to vector<1x32xf32>
    %571 = vector.extract_strided_slice %349 {offsets = [3, 0], sizes = [1, 32], strides = [1, 1]} : vector<4x32xf32> to vector<1x32xf32>
    %cst_142 = arith.constant dense<0.000000e+00> : vector<8xf32>
    %572 = vector.multi_reduction <add>, %569, %cst_142 [1] : vector<8x32xf32> to vector<8xf32>
    %573 = vector.shape_cast %572 : vector<8xf32> to vector<8x1xf32>
    %cst_143 = arith.constant 3.200000e+01 : f32
    %574 = vector.broadcast %cst_143 : f32 to vector<8x1xf32>
    %575 = arith.divf %573, %574 : vector<8x1xf32>
    %576 = vector.broadcast %575 : vector<8x1xf32> to vector<8x32xf32>
    %577 = arith.subf %569, %576 : vector<8x32xf32>
    %578 = arith.mulf %577, %577 : vector<8x32xf32>
    %cst_144 = arith.constant dense<0.000000e+00> : vector<8xf32>
    %579 = vector.multi_reduction <add>, %578, %cst_144 [1] : vector<8x32xf32> to vector<8xf32>
    %580 = vector.shape_cast %579 : vector<8xf32> to vector<8x1xf32>
    %cst_145 = arith.constant 3.200000e+01 : f32
    %581 = vector.broadcast %cst_145 : f32 to vector<8x1xf32>
    %582 = arith.divf %580, %581 : vector<8x1xf32>
    %cst_146 = arith.constant 9.99999974E-6 : f32
    %583 = vector.broadcast %cst_146 : f32 to vector<8x1xf32>
    %584 = arith.addf %582, %583 : vector<8x1xf32>
    %585 = math.rsqrt %584 : vector<8x1xf32>
    %586 = vector.broadcast %585 : vector<8x1xf32> to vector<8x32xf32>
    %587 = arith.mulf %577, %586 : vector<8x32xf32>
    %588 = vector.broadcast %570 : vector<1x32xf32> to vector<8x32xf32>
    %589 = arith.mulf %587, %588 : vector<8x32xf32>
    %590 = vector.broadcast %571 : vector<1x32xf32> to vector<8x32xf32>
    %591 = arith.addf %589, %590 : vector<8x32xf32>
    %c384 = arith.constant 384 : index
    %c0_147 = arith.constant 0 : index
    %592 = vector.load %arg6[%c384, %c0_147] : memref<416x32xf32, #tpu.memory_space<vmem>>, vector<32x16xf32>
    %cst_148 = arith.constant dense<0.000000e+00> : vector<8x16xf32>
    %593 = tpu.matmul %591, %592, %cst_148 {dimension_numbers = #tpu.dot_dimension_numbers<[1], [0], [0], [1], [0, 0, 1, 1], [], []>} : vector<8x32xf32>, vector<32x16xf32>, vector<8x16xf32> -> vector<8x16xf32>
    %594 = vector.broadcast %5 : vector<1x16xf32> to vector<8x16xf32>
    %595 = arith.addf %593, %594 : vector<8x16xf32>
    %cst_149 = arith.constant dense<0xFF800000> : vector<8xf32>
    %596 = vector.multi_reduction <maximumf>, %595, %cst_149 [1] : vector<8x16xf32> to vector<8xf32>
    %597 = vector.shape_cast %596 : vector<8xf32> to vector<8x1xf32>
    %598 = vector.broadcast %597 : vector<8x1xf32> to vector<8x16xf32>
    %599 = arith.subf %595, %598 : vector<8x16xf32>
    %600 = math.exp %599 : vector<8x16xf32>
    %cst_150 = arith.constant dense<0.000000e+00> : vector<8xf32>
    %601 = vector.multi_reduction <add>, %600, %cst_150 [1] : vector<8x16xf32> to vector<8xf32>
    %602 = vector.shape_cast %601 : vector<8xf32> to vector<8x1xf32>
    %603 = math.log %602 : vector<8x1xf32>
    %604 = vector.broadcast %603 : vector<8x1xf32> to vector<8x16xf32>
    %605 = arith.subf %599, %604 : vector<8x16xf32>
    %606 = tpu.iota {dimensions = array<i32: 1>} : vector<8x16xi32>
    %607 = arith.sitofp %606 : vector<8x16xi32> to vector<8x16xf32>
    %cst_151 = arith.constant dense<0xFF800000> : vector<8xf32>
    %608 = vector.multi_reduction <maximumf>, %605, %cst_151 [1] : vector<8x16xf32> to vector<8xf32>
    %609 = vector.shape_cast %608 : vector<8xf32> to vector<8x1xf32>
    %610 = vector.broadcast %609 : vector<8x1xf32> to vector<8x16xf32>
    %611 = arith.cmpf oeq, %605, %610 : vector<8x16xf32>
    %cst_152 = arith.constant 1.600000e+01 : f32
    %612 = vector.broadcast %cst_152 : f32 to vector<8x16xf32>
    %613 = arith.select %611, %607, %612 : vector<8x16xi1>, vector<8x16xf32>
    %cst_153 = arith.constant dense<0x7F800000> : vector<8xf32>
    %614 = vector.multi_reduction <minimumf>, %613, %cst_153 [1] : vector<8x16xf32> to vector<8xf32>
    %615 = vector.shape_cast %614 : vector<8xf32> to vector<8x1xf32>
    %616 = vector.broadcast %615 : vector<8x1xf32> to vector<8x16xf32>
    %617 = arith.cmpf oeq, %607, %616 : vector<8x16xf32>
    %cst_154 = arith.constant -3.40282347E+38 : f32
    %618 = vector.broadcast %cst_154 : f32 to vector<8x16xf32>
    %619 = arith.select %617, %618, %605 : vector<8x16xi1>, vector<8x16xf32>
    %cst_155 = arith.constant dense<0xFF800000> : vector<8xf32>
    %620 = vector.multi_reduction <maximumf>, %619, %cst_155 [1] : vector<8x16xf32> to vector<8xf32>
    %621 = vector.shape_cast %620 : vector<8xf32> to vector<8x1xf32>
    %622 = vector.broadcast %621 : vector<8x1xf32> to vector<8x16xf32>
    %623 = arith.cmpf oeq, %619, %622 : vector<8x16xf32>
    %cst_156 = arith.constant 1.600000e+01 : f32
    %624 = vector.broadcast %cst_156 : f32 to vector<8x16xf32>
    %625 = arith.select %623, %607, %624 : vector<8x16xi1>, vector<8x16xf32>
    %cst_157 = arith.constant dense<0x7F800000> : vector<8xf32>
    %626 = vector.multi_reduction <minimumf>, %625, %cst_157 [1] : vector<8x16xf32> to vector<8xf32>
    %627 = vector.shape_cast %626 : vector<8xf32> to vector<8x1xf32>
    %628 = vector.broadcast %627 : vector<8x1xf32> to vector<8x16xf32>
    %629 = arith.cmpf oeq, %607, %628 : vector<8x16xf32>
    %cst_158 = arith.constant -3.40282347E+38 : f32
    %630 = vector.broadcast %cst_158 : f32 to vector<8x16xf32>
    %631 = arith.select %629, %630, %619 : vector<8x16xi1>, vector<8x16xf32>
    %cst_159 = arith.constant dense<0xFF800000> : vector<8xf32>
    %632 = vector.multi_reduction <maximumf>, %631, %cst_159 [1] : vector<8x16xf32> to vector<8xf32>
    %633 = vector.shape_cast %632 : vector<8xf32> to vector<8x1xf32>
    %634 = vector.broadcast %633 : vector<8x1xf32> to vector<8x16xf32>
    %635 = arith.cmpf oeq, %631, %634 : vector<8x16xf32>
    %cst_160 = arith.constant 1.600000e+01 : f32
    %636 = vector.broadcast %cst_160 : f32 to vector<8x16xf32>
    %637 = arith.select %635, %607, %636 : vector<8x16xi1>, vector<8x16xf32>
    %cst_161 = arith.constant dense<0x7F800000> : vector<8xf32>
    %638 = vector.multi_reduction <minimumf>, %637, %cst_161 [1] : vector<8x16xf32> to vector<8xf32>
    %639 = vector.shape_cast %638 : vector<8xf32> to vector<8x1xf32>
    %640 = tpu.concatenate %609, %621, %633 in 1 : vector<8x1xf32>, vector<8x1xf32>, vector<8x1xf32> -> vector<8x3xf32>
    %641 = tpu.concatenate %615, %627, %639 in 1 : vector<8x1xf32>, vector<8x1xf32>, vector<8x1xf32> -> vector<8x3xf32>
    %cst_162 = arith.constant 0.000000e+00 : f32
    %642 = vector.broadcast %cst_162 : f32 to vector<8x13xf32>
    %cst_163 = arith.constant 0.000000e+00 : f32
    %643 = vector.broadcast %cst_163 : f32 to vector<8x64xf32>
    %644 = tpu.concatenate %591, %640, %642, %641, %642, %643 in 1 : vector<8x32xf32>, vector<8x3xf32>, vector<8x13xf32>, vector<8x3xf32>, vector<8x13xf32>, vector<8x64xf32> -> vector<8x128xf32>
    %c0_164 = arith.constant 0 : index
    %c0_165 = arith.constant 0 : index
    %645 = vector.load %arg11[%c0_164, %c0_165] : memref<8x128xf32, #tpu.memory_space<vmem>>, vector<8x128xf32>
    tpu.vector_store %arg11[%c0_164, %c0_165], %644 {strides = array<i32>} : memref<8x128xf32, #tpu.memory_space<vmem>>, vector<8x128xf32>,
    return
  }
}

</mosaic_0001>

<llo_original>
// kernel: tile.14
$region0: #{tile.14}
  #allocation0 [shape = 's32[1]{0}', space=sflag, size = 0x4, scoped, tag = 'scoped memory for tile.14']
  %s0 = inlined_call_operand.vmem [shape: f32[2,4], index: 0, kind: input, shape index: {}]
  %s1 = inlined_call_operand.vmem [shape: f32[2,1,1,2,1,4], index: 1, kind: output, shape index: {}]
  // Predicated region
  $region2: #{tile.14} parent=0 // pred_check
    _
  $region3: #{tile.14} parent=0 // pred_check_branch
    %3 = sbr.rel (0) target = $region5
  $region4: #{tile.14} parent=0 // pred_region
    _
  $region5: #{tile.14} parent=0 // pred_fallthru
    _
  %v4 = vld [vmem:[%s0] sm:$0x3]
  %5 = vst [vmem:[%s1] sm:$0x3] %v4
  %s6 = scalar_lea.vmem %s1, 2
  %7 = vst [vmem:[%s6] sm:$0x3] %v4

// kernel: tile.15
$region0: #{tile.15}
  %s0 = inlined_call_operand.vmem [shape: f32[2,1,1,2,1,4], index: 0, kind: input, shape index: {}]
  %s1 = inlined_call_operand.vmem [shape: f32[16], index: 1, kind: output, shape index: {}]
  $region1: #{tile.15} parent=0
    #allocation0 [shape = 'u8[4096]{0}', space=vmem, size = 0x1000, scoped, tag = 'scoped mem for output reshape']
    #allocation1 [shape = 'u8[8192]{0}', space=vmem, size = 0x2000, scoped, tag = 'scoped mem for input reshape']
    %s3 = ssub.s32 4, 1
    %s4 = scalar_lea.vmem %s0, 2
    %v5 = vld [vmem:[%s4] sm:%s3]
    %s6 = scalar_lea.vmem [#allocation1], 8
    %7 = vst [vmem:[%s6] sm:%s3] %v5
    %v8 = vld [vmem:[%s0] sm:%s3]
    %9 = vst [vmem:[#allocation1] sm:%s3] %v8
    %v10 = vld [vmem:[#allocation1] sm:$0x1]
    %vm11 = vcmask 31744
    %12 = vst.msk [vmem:[#allocation0] sm:$0x1] %vm11, %v10
    %s13 = scalar_lea.vmem [#allocation1], 9
    %v14 = vld [vmem:[%s13] sm:$0x1]
    %15 = vrot.lane.b32.xlu0 %v14, 12
    %v16 = vpop.permute.xlu0 %15
    %vm17 = vcmask 130144
    %18 = vst.msk [vmem:[#allocation0] sm:$0x1] %vm17, %v16
    %s19 = scalar_lea.vmem [#allocation1], 8
    %v20 = vld [vmem:[%s19] sm:$0x1]
    %21 = vrot.lane.b32.xlu0 %v20, 8
    %v22 = vpop.permute.xlu0 %21
    %vm23 = vcmask 97344
    %24 = vst.msk [vmem:[#allocation0] sm:$0x1] %vm23, %v22
    %s25 = scalar_lea.vmem [#allocation1], 1
    %v26 = vld [vmem:[%s25] sm:$0x1]
    %27 = vrot.lane.b32.xlu0 %v26, 4
    %v28 = vpop.permute.xlu0 %27
    %vm29 = vcmask 64544
    %30 = vst.msk [vmem:[#allocation0] sm:$0x1] %vm29, %v28
    %s32 = ssub.s32 2, 1
    %v33 = vld [vmem:[#allocation0] sm:%s32]
    %s35 = ssub.s32 2, 1
    %36 = vst [vmem:[%s1] sm:%s35] %v33

// kernel: tile.11
$region0: #{tile.11}
  %s0 = inlined_call_operand.vmem [shape: f32[2,1,1,2,1,8], index: 0, kind: input, shape index: {}]
  %s1 = inlined_call_operand.vmem [shape: f32[32], index: 1, kind: output, shape index: {}]
  $region1: #{tile.11} parent=0
    #allocation0 [shape = 'u8[4096]{0}', space=vmem, size = 0x1000, scoped, tag = 'scoped mem for output reshape']
    #allocation1 [shape = 'u8[8192]{0}', space=vmem, size = 0x2000, scoped, tag = 'scoped mem for input reshape']
    %s3 = ssub.s32 4, 1
    %s4 = scalar_lea.vmem %s0, 2
    %v5 = vld [vmem:[%s4] sm:%s3]
    %s6 = scalar_lea.vmem [#allocation1], 8
    %7 = vst [vmem:[%s6] sm:%s3] %v5
    %v8 = vld [vmem:[%s0] sm:%s3]
    %9 = vst [vmem:[#allocation1] sm:%s3] %v8
    %v10 = vld [vmem:[#allocation1] sm:$0x1]
    %vm11 = vcmask 64512
    %12 = vst.msk [vmem:[#allocation0] sm:$0x1] %vm11, %v10
    %s13 = scalar_lea.vmem [#allocation1], 9
    %v14 = vld [vmem:[%s13] sm:$0x1]
    %15 = vrot.lane.b32.xlu0 %v14, 24
    %v16 = vpop.permute.xlu0 %15
    %vm17 = vcmask 261312
    %18 = vst.msk [vmem:[#allocation0] sm:$0x1] %vm17, %v16
    %s19 = scalar_lea.vmem [#allocation1], 8
    %v20 = vld [vmem:[%s19] sm:$0x1]
    %21 = vrot.lane.b32.xlu0 %v20, 16
    %v22 = vpop.permute.xlu0 %21
    %vm23 = vcmask 195712
    %24 = vst.msk [vmem:[#allocation0] sm:$0x1] %vm23, %v22
    %s25 = scalar_lea.vmem [#allocation1], 1
    %v26 = vld [vmem:[%s25] sm:$0x1]
    %27 = vrot.lane.b32.xlu0 %v26, 8
    %v28 = vpop.permute.xlu0 %27
    %vm29 = vcmask 130112
    %30 = vst.msk [vmem:[#allocation0] sm:$0x1] %vm29, %v28
    %s32 = ssub.s32 2, 1
    %v33 = vld [vmem:[#allocation0] sm:%s32]
    %s35 = ssub.s32 2, 1
    %36 = vst [vmem:[%s1] sm:%s35] %v33

// kernel: tile.10
$region0: #{tile.10}
  #allocation0 [shape = 's32[1]{0}', space=sflag, size = 0x4, scoped, tag = 'scoped memory for tile.10']
  %s0 = inlined_call_operand.vmem [shape: f32[2,8], index: 0, kind: input, shape index: {}]
  %s1 = inlined_call_operand.vmem [shape: f32[2,1,1,2,1,8], index: 1, kind: output, shape index: {}]
  // Predicated region
  $region2: #{tile.10} parent=0 // pred_check
    _
  $region3: #{tile.10} parent=0 // pred_check_branch
    %3 = sbr.rel (0) target = $region5
  $region4: #{tile.10} parent=0 // pred_region
    _
  $region5: #{tile.10} parent=0 // pred_fallthru
    _
  %v4 = vld [vmem:[%s0] sm:$0x3]
  %5 = vst [vmem:[%s1] sm:$0x3] %v4
  %s6 = scalar_lea.vmem %s1, 2
  %7 = vst [vmem:[%s6] sm:$0x3] %v4

// kernel: streaming_forward.1
$region0: #{streaming_forward.1}
  #allocation0 [shape = 'u32[]', space=smem, size = 0x4, offset = 0x4, fixed_abs, tag = 'smem constant byte address 0x4 - core index']
  #allocation1 [shape = 'u32[72,128]{1,0:T(1,128)}', space=vmem, size = 0x9000, scoped, tag = 'internal scratch']
  %s0 = inlined_call_operand.vmem [shape: f32[24,82], index: 0, kind: input, shape index: {}]
  %s1 = inlined_call_operand.vmem [shape: f32[24,32], index: 1, kind: input, shape index: {}]
  %s2 = inlined_call_operand.vmem [shape: f32[16,48], index: 2, kind: input, shape index: {}]
  %s3 = inlined_call_operand.vmem [shape: f32[2,8,128], index: 3, kind: input, shape index: {}, may-alias: {3,12}]
  %s4 = inlined_call_operand.vmem [shape: f32[2,4,32], index: 4, kind: input, shape index: {}, may-alias: {4,13}]
  %s5 = inlined_call_operand.vmem [shape: f32[82,288], index: 5, kind: input, shape index: {}]
  %s6 = inlined_call_operand.vmem [shape: f32[416,32], index: 6, kind: input, shape index: {}]
  %s7 = inlined_call_operand.vmem [shape: f32[2,32,384], index: 7, kind: input, shape index: {}]
  %s8 = inlined_call_operand.vmem [shape: f32[2,64,64], index: 8, kind: input, shape index: {}]
  %s9 = inlined_call_operand.vmem [shape: f32[2,32,128], index: 9, kind: input, shape index: {}]
  %s10 = inlined_call_operand.vmem [shape: f32[8,128], index: 10, kind: input, shape index: {}]
  %s11 = inlined_call_operand.vmem [shape: f32[8,128], index: 11, kind: output, shape index: {0}]
  %s12 = inlined_call_operand.vmem [shape: f32[2,8,128], index: 12, kind: output, shape index: {1}, may-alias: {3,12}]
  %s13 = inlined_call_operand.vmem [shape: f32[2,4,32], index: 13, kind: output, shape index: {2}, may-alias: {4,13}]
  %14 = xla_tuple %s11, %s12, %s13
  %s15 = sld [smem:[#allocation0]]
  $region70: #{streaming_forward.1} parent=0
    _
  %s17 = ssub.s32 1, %s15
  %s18 = scalar_select 0, %s17, %s15
  // Predicated region
  $region2: #{streaming_forward.1} parent=0 // pred_check
    _
  $region3: #{streaming_forward.1} parent=0 // pred_check_branch
    %20 = sbr.rel (0) target = $region5
  $region4: #{streaming_forward.1} parent=0 // pred_region
    _
  $region5: #{streaming_forward.1} parent=0 // pred_fallthru
    _
  // Predicated region
  $region6: #{streaming_forward.1} parent=0 // pred_check
    _
  $region7: #{streaming_forward.1} parent=0 // pred_check_branch
    %22 = sbr.rel (0) target = $region9
  $region8: #{streaming_forward.1} parent=0 // pred_region
    _
  $region9: #{streaming_forward.1} parent=0 // pred_fallthru
    _
  // Predicated region
  $region10: #{streaming_forward.1} parent=0 // pred_check
    _
  $region11: #{streaming_forward.1} parent=0 // pred_check_branch
    %24 = sbr.rel (0) target = $region13
  $region12: #{streaming_forward.1} parent=0 // pred_region
    _
  $region13: #{streaming_forward.1} parent=0 // pred_fallthru
    _
  // Predicated region
  $region14: #{streaming_forward.1} parent=0 // pred_check
    _
  $region15: #{streaming_forward.1} parent=0 // pred_check_branch
    %26 = sbr.rel (0) target = $region17
  $region16: #{streaming_forward.1} parent=0 // pred_region
    _
  $region17: #{streaming_forward.1} parent=0 // pred_fallthru
    _
  // Predicated region
  $region18: #{streaming_forward.1} parent=0 // pred_check
    _
  $region19: #{streaming_forward.1} parent=0 // pred_check_branch
    %28 = sbr.rel (0) target = $region21
  $region20: #{streaming_forward.1} parent=0 // pred_region
    _
  $region21: #{streaming_forward.1} parent=0 // pred_fallthru
    _
  // Predicated region
  $region22: #{streaming_forward.1} parent=0 // pred_check
    _
  $region23: #{streaming_forward.1} parent=0 // pred_check_branch
    %30 = sbr.rel (0) target = $region25
  $region24: #{streaming_forward.1} parent=0 // pred_region
    _
  $region25: #{streaming_forward.1} parent=0 // pred_fallthru
    _
  // Predicated region
  $region26: #{streaming_forward.1} parent=0 // pred_check
    _
  $region27: #{streaming_forward.1} parent=0 // pred_check_branch
    %32 = sbr.rel (0) target = $region29
  $region28: #{streaming_forward.1} parent=0 // pred_region
    _
  $region29: #{streaming_forward.1} parent=0 // pred_fallthru
    _
  // Predicated region
  $region30: #{streaming_forward.1} parent=0 // pred_check
    _
  $region31: #{streaming_forward.1} parent=0 // pred_check_branch
    %34 = sbr.rel (0) target = $region33
  $region32: #{streaming_forward.1} parent=0 // pred_region
    _
  $region33: #{streaming_forward.1} parent=0 // pred_fallthru
    _
  // Predicated region
  $region34: #{streaming_forward.1} parent=0 // pred_check
    _
  $region35: #{streaming_forward.1} parent=0 // pred_check_branch
    %36 = sbr.rel (0) target = $region37
  $region36: #{streaming_forward.1} parent=0 // pred_region
    _
  $region37: #{streaming_forward.1} parent=0 // pred_fallthru
    _
  // Predicated region
  $region38: #{streaming_forward.1} parent=0 // pred_check
    _
  $region39: #{streaming_forward.1} parent=0 // pred_check_branch
    %38 = sbr.rel (0) target = $region41
  $region40: #{streaming_forward.1} parent=0 // pred_region
    _
  $region41: #{streaming_forward.1} parent=0 // pred_fallthru
    _
  // Predicated region
  $region42: #{streaming_forward.1} parent=0 // pred_check
    _
  $region43: #{streaming_forward.1} parent=0 // pred_check_branch
    %40 = sbr.rel (0) target = $region45
  $region44: #{streaming_forward.1} parent=0 // pred_region
    _
  $region45: #{streaming_forward.1} parent=0 // pred_fallthru
    _
  %v41 = vld [vmem:[%s10] sm:$0xff]
  %v42 = vld [vmem:[%s0] sm:$0xff]
  %v43 = vld [vmem:[%s0 + $0x8] sm:$0xff]
  %v44 = vld [vmem:[%s0 + $0x10] sm:$0xff]
  %v45 = vld [vmem:[%s5] sm:$0xff]
  %v46 = vld [vmem:[%s5 + $0x8] sm:$0xff]
  %v47 = vld [vmem:[%s5 + $0x10] sm:$0xff]
  %v48 = vld [vmem:[%s5 + $0x18] sm:$0xff]
  %v49 = vld [vmem:[%s5 + $0x20] sm:$0xff]
  %v50 = vld [vmem:[%s5 + $0x28] sm:$0xff]
  %v51 = vld [vmem:[%s5 + $0x30] sm:$0xff]
  %v52 = vld [vmem:[%s5 + $0x38] sm:$0xff]
  %v53 = vld [vmem:[%s5 + $0x40] sm:$0xff]
  %v54 = vld [vmem:[%s5 + $0x48] sm:$0xff]
  %v55 = vld [vmem:[%s5 + $0x50] sm:$0xff]
  %v56 = vld [vmem:[%s5 + $0x58] sm:$0xff]
  %v57 = vld [vmem:[%s5 + $0x60] sm:$0xff]
  %v58 = vld [vmem:[%s5 + $0x68] sm:$0xff]
  %v59 = vld [vmem:[%s5 + $0x70] sm:$0xff]
  %v60 = vld [vmem:[%s5 + $0x78] sm:$0xff]
  %v61 = vld [vmem:[%s5 + $0x80] sm:$0xff]
  %v62 = vld [vmem:[%s5 + $0x88] sm:$0xff]
  %v63 = vld [vmem:[%s5 + $0x90] sm:$0xff]
  %v64 = vld [vmem:[%s5 + $0x98] sm:$0xff]
  %v65 = vld [vmem:[%s5 + $0xa0] sm:$0xff]
  %v66 = vld [vmem:[%s5 + $0xa8] sm:$0xff]
  %v67 = vld [vmem:[%s5 + $0xb0] sm:$0xff]
  %v68 = vld [vmem:[%s5 + $0xb8] sm:$0xff]
  %v69 = vld [vmem:[%s5 + $0xc0] sm:$0xff]
  %v70 = vld [vmem:[%s5 + $0xc8] sm:$0xff]
  %v71 = vld [vmem:[%s5 + $0xd0] sm:$0xff]
  %v72 = vld [vmem:[%s5 + $0xd8] sm:$0xff]
  %v73 = vld [vmem:[%s5 + $0xe0] sm:$0xff]
  %v74 = vld [vmem:[%s5 + $0xe8] sm:$0xff]
  %v75 = vld [vmem:[%s5 + $0xf0] sm:$0x3]
  %v76 = vld [vmem:[%s5 + $0xf8] sm:$0x3]
  %v77 = vld [vmem:[%s5 + $0x100] sm:$0x3]
  %vm78 = vcmask 670720
  %v80 = vsel %vm78, %v42, 0
  %v83 = vsel %vm78, %v43, 0
  %v86 = vsel %vm78, %v44, 0
  %vm88 = vcmask 1041408
  %v90 = vsel %vm88, %v75, 0
  %v93 = vsel %vm88, %v76, 0
  %v96 = vsel %vm88, %v77, 0
  %98 = vmatpush.msra.mxu0 0.0
  %99 = vmatpush.msra.mxu0 0.0
  %100 = vmatpush.msra.mxu0 0.0
  %101 = vmatpush.msra.mxu0 0.0
  %102 = vmatpush.msra.mxu0 0.0
  %103 = vmatpush.msra.mxu0 %v90
  %104 = vmatpush.msra.mxu0 %v72
  %105 = vmatpush.msra.mxu0 %v69
  %106 = vmatpush.msra.mxu0 %v66
  %107 = vmatpush.msra.mxu0 %v63
  %108 = vmatpush.msra.mxu0 %v60
  %109 = vmatpush.msra.mxu0 %v57
  %110 = vmatpush.msra.mxu0 %v54
  %111 = vmatpush.msra.mxu0 %v51
  %112 = vmatpush.msra.mxu0 %v48
  %113 = vmatpush.msra.mxu0 %v45
  %114 = vmatmul.f32.gmra.mxu0 %v80
  %v115 = vpop.f32.mrf.mxu0
  %v116 = vadd.f32 0.0, %v115
  %117 = vmatmul.f32.gmra.mxu0 %v83
  %v118 = vpop.f32.mrf.mxu0
  %v119 = vadd.f32 0.0, %v118
  %120 = vmatmul.f32.gmra.mxu0 %v86
  %v121 = vpop.f32.mrf.mxu0
  %v122 = vadd.f32 0.0, %v121
  %123 = vdwg.mxu0
  %124 = vmatpush.msra.mxu0 0.0
  %125 = vmatpush.msra.mxu0 0.0
  %126 = vmatpush.msra.mxu0 0.0
  %127 = vmatpush.msra.mxu0 0.0
  %128 = vmatpush.msra.mxu0 0.0
  %129 = vmatpush.msra.mxu0 %v93
  %130 = vmatpush.msra.mxu0 %v73
  %131 = vmatpush.msra.mxu0 %v70
  %132 = vmatpush.msra.mxu0 %v67
  %133 = vmatpush.msra.mxu0 %v64
  %134 = vmatpush.msra.mxu0 %v61
  %135 = vmatpush.msra.mxu0 %v58
  %136 = vmatpush.msra.mxu0 %v55
  %137 = vmatpush.msra.mxu0 %v52
  %138 = vmatpush.msra.mxu0 %v49
  %139 = vmatpush.msra.mxu0 %v46
  %140 = vmatmul.f32.gmra.mxu0 %v80
  %v141 = vpop.f32.mrf.mxu0
  %v142 = vadd.f32 0.0, %v141
  %143 = vmatmul.f32.gmra.mxu0 %v83
  %v144 = vpop.f32.mrf.mxu0
  %v145 = vadd.f32 0.0, %v144
  %146 = vmatmul.f32.gmra.mxu0 %v86
  %v147 = vpop.f32.mrf.mxu0
  %v148 = vadd.f32 0.0, %v147
  %149 = vdwg.mxu0
  %150 = vmatpush.msra.mxu0 0.0
  %151 = vmatpush.msra.mxu0 0.0
  %152 = vmatpush.msra.mxu0 0.0
  %153 = vmatpush.msra.mxu0 0.0
  %154 = vmatpush.msra.mxu0 0.0
  %155 = vmatpush.msra.mxu0 %v96
  %156 = vmatpush.msra.mxu0 %v74
  %157 = vmatpush.msra.mxu0 %v71
  %158 = vmatpush.msra.mxu0 %v68
  %159 = vmatpush.msra.mxu0 %v65
  %160 = vmatpush.msra.mxu0 %v62
  %161 = vmatpush.msra.mxu0 %v59
  %162 = vmatpush.msra.mxu0 %v56
  %163 = vmatpush.msra.mxu0 %v53
  %164 = vmatpush.msra.mxu0 %v50
  %165 = vmatpush.msra.mxu0 %v47
  %166 = vmatmul.f32.gmra.mxu0 %v80
  %v167 = vpop.f32.mrf.mxu0
  %v168 = vadd.f32 0.0, %v167
  %169 = vmatmul.f32.gmra.mxu0 %v83
  %v170 = vpop.f32.mrf.mxu0
  %v171 = vadd.f32 0.0, %v170
  %172 = vmatmul.f32.gmra.mxu0 %v86
  %v173 = vpop.f32.mrf.mxu0
  %v174 = vadd.f32 0.0, %v173
  %175 = vdwg.mxu0
  %v176 = vmax.f32 %v116, 0.0
  %v177 = vmax.f32 %v142, 0.0
  %v178 = vmax.f32 %v168, 0.0
  %v179 = vmax.f32 %v119, 0.0
  %v180 = vmax.f32 %v145, 0.0
  %v181 = vmax.f32 %v171, 0.0
  %v182 = vmax.f32 %v122, 0.0
  %v183 = vmax.f32 %v148, 0.0
  %v184 = vmax.f32 %v174, 0.0
  %v185 = vld [vmem:[%s6] sm:$0xff]
  %v186 = vld [vmem:[%s6 + $0x8] sm:$0xff]
  %v187 = vld [vmem:[%s6 + $0x10] sm:$0xff]
  %v188 = vld [vmem:[%s6 + $0x18] sm:$0xff]
  %v189 = vld [vmem:[%s6 + $0x20] sm:$0xff]
  %v190 = vld [vmem:[%s6 + $0x28] sm:$0xff]
  %v191 = vld [vmem:[%s6 + $0x30] sm:$0xff]
  %v192 = vld [vmem:[%s6 + $0x38] sm:$0xff]
  %v193 = vld [vmem:[%s6 + $0x40] sm:$0xff]
  %v194 = vld [vmem:[%s6 + $0x48] sm:$0xff]
  %v195 = vld [vmem:[%s6 + $0x50] sm:$0xff]
  %v196 = vld [vmem:[%s6 + $0x58] sm:$0xff]
  %v197 = vld [vmem:[%s6 + $0x60] sm:$0xff]
  %v198 = vld [vmem:[%s6 + $0x68] sm:$0xff]
  %v199 = vld [vmem:[%s6 + $0x70] sm:$0xff]
  %v200 = vld [vmem:[%s6 + $0x78] sm:$0xff]
  %v201 = vld [vmem:[%s6 + $0x80] sm:$0xff]
  %v202 = vld [vmem:[%s6 + $0x88] sm:$0xff]
  %v203 = vld [vmem:[%s6 + $0x90] sm:$0xff]
  %v204 = vld [vmem:[%s6 + $0x98] sm:$0xff]
  %v205 = vld [vmem:[%s6 + $0xa0] sm:$0xff]
  %v206 = vld [vmem:[%s6 + $0xa8] sm:$0xff]
  %v207 = vld [vmem:[%s6 + $0xb0] sm:$0xff]
  %v208 = vld [vmem:[%s6 + $0xb8] sm:$0xff]
  %v209 = vld [vmem:[%s6 + $0xc0] sm:$0xff]
  %v210 = vld [vmem:[%s6 + $0xc8] sm:$0xff]
  %v211 = vld [vmem:[%s6 + $0xd0] sm:$0xff]
  %v212 = vld [vmem:[%s6 + $0xd8] sm:$0xff]
  %v213 = vld [vmem:[%s6 + $0xe0] sm:$0xff]
  %v214 = vld [vmem:[%s6 + $0xe8] sm:$0xff]
  %v215 = vld [vmem:[%s6 + $0xf0] sm:$0xff]
  %v216 = vld [vmem:[%s6 + $0xf8] sm:$0xff]
  %v217 = vld [vmem:[%s6 + $0x100] sm:$0xff]
  %v218 = vld [vmem:[%s6 + $0x108] sm:$0xff]
  %v219 = vld [vmem:[%s6 + $0x110] sm:$0xff]
  %v220 = vld [vmem:[%s6 + $0x118] sm:$0xff]
  %v221 = vperm.slane %v41, 0
  %vm222 = vcmask 261120
  %v224 = vsel %vm222, %v178, 0
  %v227 = vsel %vm222, %v181, 0
  %v230 = vsel %vm222, %v184, 0
  %232 = vmatpush.msra.mxu0 %v200
  %233 = vmatpush.msra.mxu0 %v199
  %234 = vmatpush.msra.mxu0 %v198
  %235 = vmatpush.msra.mxu0 %v197
  %236 = vmatpush.msra.mxu0 %v196
  %237 = vmatpush.msra.mxu0 %v195
  %238 = vmatpush.msra.mxu0 %v194
  %239 = vmatpush.msra.mxu0 %v193
  %240 = vmatpush.msra.mxu0 %v192
  %241 = vmatpush.msra.mxu0 %v191
  %242 = vmatpush.msra.mxu0 %v190
  %243 = vmatpush.msra.mxu0 %v189
  %244 = vmatpush.msra.mxu0 %v188
  %245 = vmatpush.msra.mxu0 %v187
  %246 = vmatpush.msra.mxu0 %v186
  %247 = vmatpush.msra.mxu0 %v185
  %248 = vmatmul.f32.gmra.mxu0 %v176
  %v249 = vpop.f32.mrf.mxu0
  %v250 = vadd.f32 %v221, %v249
  %251 = vmatmul.f32.gmra.mxu0 %v179
  %v252 = vpop.f32.mrf.mxu0
  %v253 = vadd.f32 %v221, %v252
  %254 = vmatmul.f32.gmra.mxu0 %v182
  %v255 = vpop.f32.mrf.mxu0
  %v256 = vadd.f32 %v221, %v255
  %257 = vdwg.mxu0
  %258 = vmatpush.msra.mxu0 %v216
  %259 = vmatpush.msra.mxu0 %v215
  %260 = vmatpush.msra.mxu0 %v214
  %261 = vmatpush.msra.mxu0 %v213
  %262 = vmatpush.msra.mxu0 %v212
  %263 = vmatpush.msra.mxu0 %v211
  %264 = vmatpush.msra.mxu0 %v210
  %265 = vmatpush.msra.mxu0 %v209
  %266 = vmatpush.msra.mxu0 %v208
  %267 = vmatpush.msra.mxu0 %v207
  %268 = vmatpush.msra.mxu0 %v206
  %269 = vmatpush.msra.mxu0 %v205
  %270 = vmatpush.msra.mxu0 %v204
  %271 = vmatpush.msra.mxu0 %v203
  %272 = vmatpush.msra.mxu0 %v202
  %273 = vmatpush.msra.mxu0 %v201
  %274 = vmatmul.f32.gmra.mxu0 %v177
  %v275 = vpop.f32.mrf.mxu0
  %v276 = vadd.f32 %v250, %v275
  %277 = vmatmul.f32.gmra.mxu0 %v180
  %v278 = vpop.f32.mrf.mxu0
  %v279 = vadd.f32 %v253, %v278
  %280 = vmatmul.f32.gmra.mxu0 %v183
  %v281 = vpop.f32.mrf.mxu0
  %v282 = vadd.f32 %v256, %v281
  %283 = vdwg.mxu0
  %284 = vmatpush.msra.mxu0 0.0
  %285 = vmatpush.msra.mxu0 0.0
  %286 = vmatpush.msra.mxu0 0.0
  %287 = vmatpush.msra.mxu0 0.0
  %288 = vmatpush.msra.mxu0 0.0
  %289 = vmatpush.msra.mxu0 0.0
  %290 = vmatpush.msra.mxu0 0.0
  %291 = vmatpush.msra.mxu0 0.0
  %292 = vmatpush.msra.mxu0 0.0
  %293 = vmatpush.msra.mxu0 0.0
  %294 = vmatpush.msra.mxu0 0.0
  %295 = vmatpush.msra.mxu0 0.0
  %296 = vmatpush.msra.mxu0 %v220
  %297 = vmatpush.msra.mxu0 %v219
  %298 = vmatpush.msra.mxu0 %v218
  %299 = vmatpush.msra.mxu0 %v217
  %300 = vmatmul.f32.gmra.mxu0 %v224
  %v301 = vpop.f32.mrf.mxu0
  %v302 = vadd.f32 %v276, %v301
  %303 = vmatmul.f32.gmra.mxu0 %v227
  %v304 = vpop.f32.mrf.mxu0
  %v305 = vadd.f32 %v279, %v304
  %306 = vmatmul.f32.gmra.mxu0 %v230
  %v307 = vpop.f32.mrf.mxu0
  %v308 = vadd.f32 %v282, %v307
  %309 = vdwg.mxu0
  %v310 = vmax.f32 %v302, 0.0
  %v311 = vmax.f32 %v305, 0.0
  %v312 = vmax.f32 %v308, 0.0
  %v313 = vld [vmem:[%s6 + $0x120] sm:$0xff]
  %v314 = vld [vmem:[%s6 + $0x128] sm:$0xff]
  %v315 = vld [vmem:[%s6 + $0x130] sm:$0xff]
  %v316 = vld [vmem:[%s6 + $0x138] sm:$0xff]
  %v317 = vld [vmem:[%s6 + $0x140] sm:$0xff]
  %v318 = vld [vmem:[%s6 + $0x148] sm:$0xff]
  %v319 = vld [vmem:[%s6 + $0x150] sm:$0xff]
  %v320 = vld [vmem:[%s6 + $0x158] sm:$0xff]
  %v322 = vsel %vm222, %v311, 0
  %324 = vmatpush.msra.mxu0 0.0
  %325 = vmatpush.msra.mxu0 0.0
  %326 = vmatpush.msra.mxu0 0.0
  %327 = vmatpush.msra.mxu0 0.0
  %328 = vmatpush.msra.mxu0 0.0
  %329 = vmatpush.msra.mxu0 0.0
  %330 = vmatpush.msra.mxu0 0.0
  %331 = vmatpush.msra.mxu0 0.0
  %332 = vmatpush.msra.mxu0 0.0
  %333 = vmatpush.msra.mxu0 0.0
  %334 = vmatpush.msra.mxu0 0.0
  %335 = vmatpush.msra.mxu0 0.0
  %336 = vmatpush.msra.mxu0 %v320
  %337 = vmatpush.msra.mxu0 %v319
  %338 = vmatpush.msra.mxu0 %v318
  %339 = vmatpush.msra.mxu0 %v317
  %340 = vmatmul.f32.gmra.mxu0 %v322
  %v341 = vpop.f32.mrf.mxu0
  %v342 = vadd.f32 0.0, %v341
  %343 = vdwg.mxu0
  %v345 = vsel %vm222, %v310, 0
  %347 = vmatpush.msra.mxu0 0.0
  %348 = vmatpush.msra.mxu0 0.0
  %349 = vmatpush.msra.mxu0 0.0
  %350 = vmatpush.msra.mxu0 0.0
  %351 = vmatpush.msra.mxu0 0.0
  %352 = vmatpush.msra.mxu0 0.0
  %353 = vmatpush.msra.mxu0 0.0
  %354 = vmatpush.msra.mxu0 0.0
  %355 = vmatpush.msra.mxu0 0.0
  %356 = vmatpush.msra.mxu0 0.0
  %357 = vmatpush.msra.mxu0 0.0
  %358 = vmatpush.msra.mxu0 0.0
  %359 = vmatpush.msra.mxu0 %v316
  %360 = vmatpush.msra.mxu0 %v315
  %361 = vmatpush.msra.mxu0 %v314
  %362 = vmatpush.msra.mxu0 %v313
  %363 = vmatmul.f32.gmra.mxu0 %v345
  %v364 = vpop.f32.mrf.mxu0
  %v365 = vadd.f32 %v342, %v364
  %366 = vdwg.mxu0
  %v367 = vld [vmem:[%s6 + $0x160] sm:$0xff]
  %v368 = vld [vmem:[%s6 + $0x168] sm:$0xff]
  %v369 = vld [vmem:[%s6 + $0x170] sm:$0xff]
  %v370 = vld [vmem:[%s6 + $0x178] sm:$0xff]
  %v372 = vsel %vm222, %v312, 0
  %374 = vmatpush.msra.mxu0 0.0
  %375 = vmatpush.msra.mxu0 0.0
  %376 = vmatpush.msra.mxu0 0.0
  %377 = vmatpush.msra.mxu0 0.0
  %378 = vmatpush.msra.mxu0 0.0
  %379 = vmatpush.msra.mxu0 0.0
  %380 = vmatpush.msra.mxu0 0.0
  %381 = vmatpush.msra.mxu0 0.0
  %382 = vmatpush.msra.mxu0 0.0
  %383 = vmatpush.msra.mxu0 0.0
  %384 = vmatpush.msra.mxu0 0.0
  %385 = vmatpush.msra.mxu0 0.0
  %386 = vmatpush.msra.mxu0 %v370
  %387 = vmatpush.msra.mxu0 %v369
  %388 = vmatpush.msra.mxu0 %v368
  %389 = vmatpush.msra.mxu0 %v367
  %390 = vmatmul.f32.gmra.mxu0 %v372
  %v391 = vpop.f32.mrf.mxu0
  %v392 = vadd.f32 0.0, %v391
  %393 = vdwg.mxu0
  %v394 = vadd.f32 %v365, %v392
  %396 = vrot.lane.b32.xlu0 %v221, 96
  %v397 = vpop.permute.xlu0 %396
  %v399 = vadd.f32 %v394, %v397
  %v400 = vmul.f32 %v399, 5.656854
  %v401 = vsel %vm222, %v400, 0.0
  %402 = vadd.xlane.f32.xlu0 %v401
  %v403 = vpop.xlane.xlu0 %402
  %v404 = vrcp.pop 32.0
  %v405 = vmul.f32 32.0, %v404
  %v406 = vsub.f32 1.0, %v405
  %v407 = vmul.f32 %v404, %v406
  %v408 = vadd.f32 %v404, %v407
  %vm409 = vweird.f32 %v404
  %v410 = vsel %vm409, %v404, %v408
  %v411 = vmul.f32 %v403, %v410
  %v412 = vsub.f32 %v400, %v411
  %v413 = vmul.f32 %v412, %v412
  %v414 = vsel %vm222, %v413, 0.0
  %415 = vadd.xlane.f32.xlu0 %v414
  %v416 = vpop.xlane.xlu0 %415
  %v417 = vmul.f32 %v416, %v410
  %v418 = vadd.f32 %v417, 1e-05
  %v419 = vrsqrt.pop %v418
  %v420 = vmul.f32 %v419, %v418
  %v421 = vmul.f32 %v420, %v419
  %v422 = vmul.f32 0.5, %v421
  %v423 = vsub.f32 1.5, %v422
  %v424 = vmul.f32 %v419, %v423
  %vm425 = vweird.f32 %v418
  %vm426 = vweird.f32 %v419
  %vm427 = vmor %vm425, %vm426
  %v428 = vsel %vm427, %v419, %v424
  %v429 = vmul.f32 %v412, %v428
  %430 = vrot.lane.b32.xlu0 %v221, 64
  %v431 = vpop.permute.xlu0 %430
  %v433 = vmul.f32 %v429, %v431
  %434 = vrot.lane.b32.xlu0 %v221, 32
  %v435 = vpop.permute.xlu0 %434
  %v437 = vadd.f32 %v433, %v435
  %v438 = vld [vmem:[%s1] sm:$0xff]
  %v439 = vld [vmem:[%s1 + $0x8] sm:$0xff]
  %v440 = vld [vmem:[%s1 + $0x10] sm:$0xff]
  %v441 = vld [vmem:[%s2] sm:$0xff]
  %v442 = vld [vmem:[%s2 + $0x8] sm:$0xff]
  %v443 = vld [vmem:[%s7] sm:$0xff]
  %v444 = vld [vmem:[%s7 + $0x8] sm:$0xff]
  %v445 = vld [vmem:[%s7 + $0x10] sm:$0xff]
  %v446 = vld [vmem:[%s7 + $0x18] sm:$0xff]
  %v447 = vld [vmem:[%s7 + $0x20] sm:$0xff]
  %v448 = vld [vmem:[%s7 + $0x28] sm:$0xff]
  %v449 = vld [vmem:[%s7 + $0x30] sm:$0xff]
  %v450 = vld [vmem:[%s7 + $0x38] sm:$0xff]
  %v451 = vld [vmem:[%s7 + $0x40] sm:$0xff]
  %v452 = vld [vmem:[%s7 + $0x48] sm:$0xff]
  %v453 = vld [vmem:[%s7 + $0x50] sm:$0xff]
  %v454 = vld [vmem:[%s7 + $0x58] sm:$0xff]
  %v455 = vld [vmem:[%s8] sm:$0xff]
  %v456 = vld [vmem:[%s8 + $0x8] sm:$0xff]
  %v457 = vld [vmem:[%s8 + $0x10] sm:$0xff]
  %v458 = vld [vmem:[%s8 + $0x18] sm:$0xff]
  %v459 = vld [vmem:[%s8 + $0x20] sm:$0xff]
  %v460 = vld [vmem:[%s8 + $0x28] sm:$0xff]
  %v461 = vld [vmem:[%s8 + $0x30] sm:$0xff]
  %v462 = vld [vmem:[%s8 + $0x38] sm:$0xff]
  %v463 = vld [vmem:[%s9] sm:$0xff]
  %v464 = vld [vmem:[%s9 + $0x8] sm:$0xff]
  %v465 = vld [vmem:[%s9 + $0x10] sm:$0xff]
  %v466 = vld [vmem:[%s9 + $0x18] sm:$0xff]
  %v467 = vperm.slane %v463, 0
  %v469 = vsel %vm222, %v437, 0
  %471 = vmatpush.msra.mxu0 0.0
  %472 = vmatpush.msra.mxu0 0.0
  %473 = vmatpush.msra.mxu0 0.0
  %474 = vmatpush.msra.mxu0 0.0
  %475 = vmatpush.msra.mxu0 0.0
  %476 = vmatpush.msra.mxu0 0.0
  %477 = vmatpush.msra.mxu0 0.0
  %478 = vmatpush.msra.mxu0 0.0
  %479 = vmatpush.msra.mxu0 0.0
  %480 = vmatpush.msra.mxu0 0.0
  %481 = vmatpush.msra.mxu0 0.0
  %482 = vmatpush.msra.mxu0 0.0
  %483 = vmatpush.msra.mxu0 %v452
  %484 = vmatpush.msra.mxu0 %v449
  %485 = vmatpush.msra.mxu0 %v446
  %486 = vmatpush.msra.mxu0 %v443
  %487 = vmatmul.f32.gmra.mxu0 %v469
  %v488 = vpop.f32.mrf.mxu0
  %v489 = vadd.f32 %v467, %v488
  %490 = vdwg.mxu0
  %495 = vrot.lane.b32.xlu0 %v445, 64
  %v496 = vpop.permute.xlu0 %495
  %497 = vrot.lane.b32.xlu0 %v448, 64
  %v498 = vpop.permute.xlu0 %497
  %499 = vrot.lane.b32.xlu0 %v451, 64
  %v500 = vpop.permute.xlu0 %499
  %501 = vrot.lane.b32.xlu0 %v454, 64
  %v502 = vpop.permute.xlu0 %501
  %v508 = vsel %vm222, %v438, 0
  %v511 = vsel %vm222, %v439, 0
  %v514 = vsel %vm222, %v440, 0
  %516 = vmatpush.msra.mxu0 0.0
  %517 = vmatpush.msra.mxu0 0.0
  %518 = vmatpush.msra.mxu0 0.0
  %519 = vmatpush.msra.mxu0 0.0
  %520 = vmatpush.msra.mxu0 0.0
  %521 = vmatpush.msra.mxu0 0.0
  %522 = vmatpush.msra.mxu0 0.0
  %523 = vmatpush.msra.mxu0 0.0
  %524 = vmatpush.msra.mxu0 0.0
  %525 = vmatpush.msra.mxu0 0.0
  %526 = vmatpush.msra.mxu0 0.0
  %527 = vmatpush.msra.mxu0 0.0
  %528 = vmatpush.msra.mxu0 %v502
  %529 = vmatpush.msra.mxu0 %v500
  %530 = vmatpush.msra.mxu0 %v498
  %531 = vmatpush.msra.mxu0 %v496
  %532 = vmatmul.f32.gmra.mxu0 %v508
  %v533 = vpop.f32.mrf.mxu0
  %v534 = vadd.f32 0.0, %v533
  %535 = vmatmul.f32.gmra.mxu0 %v511
  %v536 = vpop.f32.mrf.mxu0
  %v537 = vadd.f32 0.0, %v536
  %538 = vmatmul.f32.gmra.mxu0 %v514
  %v539 = vpop.f32.mrf.mxu0
  %v540 = vadd.f32 0.0, %v539
  %541 = vdwg.mxu0
  %543 = vrot.lane.b32.xlu0 %v489, 112
  %v544 = vpop.permute.xlu0 %543
  %v546 = vld [vmem:[%s3] sm:$0xff]
  %548 = vrot.lane.b32.xlu0 %v546, 64
  %v549 = vpop.permute.xlu0 %548
  %550 = vrot.lane.b32.xlu0 %v546, 112
  %v551 = vpop.permute.xlu0 %550
  %552 = vrot.lane.b32.xlu0 %v546, 48
  %v553 = vpop.permute.xlu0 %552
  %556 = vrot.lane.b32.xlu0 %v534, 112
  %v557 = vpop.permute.xlu0 %556
  %558 = vrot.lane.b32.xlu0 %v537, 112
  %v559 = vpop.permute.xlu0 %558
  %561 = vrot.lane.b32.xlu0 %v540, 112
  %v562 = vpop.permute.xlu0 %561
  %563 = vrot.lane.b32.xlu0 %v489, 96
  %v564 = vpop.permute.xlu0 %563
  %565 = vrot.lane.b32.xlu0 %v544, 96
  %v566 = vpop.permute.xlu0 %565
  %v567 = vadd.f32 %v489, %v465
  %v568 = vadd.f32 %v544, %v466
  %571 = vrot.lane.b32.xlu0 %v465, 112
  %v572 = vpop.permute.xlu0 %571
  %573 = vrot.lane.b32.xlu0 %v466, 112
  %v574 = vpop.permute.xlu0 %573
  %v577 = vadd.f32 %v489, %v572
  %v578 = vadd.f32 %v544, %v574
  %vm579 = vcmask 130048
  %v581 = vsel %vm579, %v577, 0
  %v584 = vsel %vm579, %v578, 0
  %v586 = vsel %vm579, %v534, 0
  %v588 = vsel %vm579, %v537, 0
  %v590 = vsel %vm579, %v557, 0
  %v592 = vsel %vm579, %v559, 0
  %v594 = vsel %vm579, %v540, 0
  %v596 = vsel %vm579, %v562, 0
  %598 = vmatpush.xpose.msra.mxu0 0.0
  %599 = vmatpush.xpose.msra.mxu0 0.0
  %600 = vmatpush.xpose.msra.mxu0 0.0
  %601 = vmatpush.xpose.msra.mxu0 0.0
  %602 = vmatpush.xpose.msra.mxu0 0.0
  %603 = vmatpush.xpose.msra.mxu0 0.0
  %604 = vmatpush.xpose.msra.mxu0 0.0
  %605 = vmatpush.xpose.msra.mxu0 0.0
  %606 = vmatpush.xpose.msra.mxu0 0.0
  %607 = vmatpush.xpose.msra.mxu0 0.0
  %608 = vmatpush.xpose.msra.mxu0 %v596
  %609 = vmatpush.xpose.msra.mxu0 %v594
  %610 = vmatpush.xpose.msra.mxu0 %v592
  %611 = vmatpush.xpose.msra.mxu0 %v590
  %612 = vmatpush.xpose.msra.mxu0 %v588
  %613 = vmatpush.xpose.msra.mxu0 %v586
  %614 = vmatmul.f32.gmra.mxu0 %v581
  %v615 = vpop.f32.mrf.mxu0
  %v616 = vadd.f32 0.0, %v615
  %617 = vmatmul.f32.gmra.mxu0 %v584
  %v618 = vpop.f32.mrf.mxu0
  %v619 = vadd.f32 0.0, %v618
  %620 = vdwg.mxu0
  %v622 = vsel %vm579, %v567, 0
  %v625 = vsel %vm579, %v568, 0
  %v627 = vsel %vm579, %v546, 0
  %v629 = vsel %vm579, %v549, 0
  %v631 = vsel %vm579, %v551, 0
  %v633 = vsel %vm579, %v553, 0
  %v635 = vsel %vm579, %v564, 0
  %v637 = vsel %vm579, %v566, 0
  %639 = vmatpush.xpose.msra.mxu0 0.0
  %640 = vmatpush.xpose.msra.mxu0 0.0
  %641 = vmatpush.xpose.msra.mxu0 0.0
  %642 = vmatpush.xpose.msra.mxu0 0.0
  %643 = vmatpush.xpose.msra.mxu0 0.0
  %644 = vmatpush.xpose.msra.mxu0 0.0
  %645 = vmatpush.xpose.msra.mxu0 0.0
  %646 = vmatpush.xpose.msra.mxu0 0.0
  %647 = vmatpush.xpose.msra.mxu0 0.0
  %648 = vmatpush.xpose.msra.mxu0 0.0
  %649 = vmatpush.xpose.msra.mxu0 %v637
  %650 = vmatpush.xpose.msra.mxu0 %v635
  %651 = vmatpush.xpose.msra.mxu0 %v633
  %652 = vmatpush.xpose.msra.mxu0 %v631
  %653 = vmatpush.xpose.msra.mxu0 %v629
  %654 = vmatpush.xpose.msra.mxu0 %v627
  %655 = vmatmul.f32.gmra.mxu0 %v622
  %v656 = vpop.f32.mrf.mxu0
  %v657 = vadd.f32 %v616, %v656
  %658 = vmatmul.f32.gmra.mxu0 %v625
  %v659 = vpop.f32.mrf.mxu0
  %v660 = vadd.f32 %v619, %v659
  %661 = vdwg.mxu0
  %v662 = vmul.f32 %v657, 0.25
  %v663 = vmul.f32 %v660, 0.25
  %v664 = vadd.f32 %v662, %v441
  %v665 = vadd.f32 %v663, %v442
  %vm666 = vcmask 392192
  %v667 = vsel %vm666, %v664, -inf
  %668 = vmax.xlane.f32.xlu0 %v667
  %v669 = vpop.xlane.xlu0 %668
  %v670 = vsel %vm666, %v665, -inf
  %671 = vmax.xlane.f32.xlu0 %v670
  %v672 = vpop.xlane.xlu0 %671
  %v673 = vsub.f32 %v664, %v669
  %v674 = vsub.f32 %v665, %v672
  %v675 = vmul.f32 %v673, 1.442695
  %v676 = vpow.pop %v675
  %v677 = vmul.f32 %v674, 1.442695
  %v678 = vpow.pop %v677
  %v679 = vsel %vm666, %v676, 0.0
  %680 = vadd.xlane.f32.xlu0 %v679
  %v681 = vpop.xlane.xlu0 %680
  %v682 = vsel %vm666, %v678, 0.0
  %683 = vadd.xlane.f32.xlu0 %v682
  %v684 = vpop.xlane.xlu0 %683
  %v685 = vrcp.pop %v681
  %v686 = vrcp.pop %v684
  %v687 = vmul.f32 %v676, %v685
  %v688 = vmul.f32 %v678, %v686
  %689 = vrot.lane.b32.xlu0 %v546, 96
  %v690 = vpop.permute.xlu0 %689
  %691 = vrot.lane.b32.xlu0 %v549, 96
  %v692 = vpop.permute.xlu0 %691
  %693 = vrot.lane.b32.xlu0 %v551, 96
  %v694 = vpop.permute.xlu0 %693
  %695 = vrot.lane.b32.xlu0 %v553, 96
  %v696 = vpop.permute.xlu0 %695
  %697 = vrot.lane.b32.xlu0 %v564, 96
  %v698 = vpop.permute.xlu0 %697
  %699 = vrot.lane.b32.xlu0 %v566, 96
  %v700 = vpop.permute.xlu0 %699
  %v708 = vsel %vm666, %v687, 0
  %v711 = vsel %vm666, %v688, 0
  %713 = vmatpush.msra.mxu0 0.0
  %714 = vmatpush.msra.mxu0 0.0
  %715 = vmatpush.msra.mxu0 0.0
  %716 = vmatpush.msra.mxu0 0.0
  %717 = vmatpush.msra.mxu0 0.0
  %718 = vmatpush.msra.mxu0 0.0
  %719 = vmatpush.msra.mxu0 0.0
  %720 = vmatpush.msra.mxu0 0.0
  %721 = vmatpush.msra.mxu0 0.0
  %722 = vmatpush.msra.mxu0 0.0
  %723 = vmatpush.msra.mxu0 %v700
  %724 = vmatpush.msra.mxu0 %v698
  %725 = vmatpush.msra.mxu0 %v696
  %726 = vmatpush.msra.mxu0 %v694
  %727 = vmatpush.msra.mxu0 %v692
  %728 = vmatpush.msra.mxu0 %v690
  %729 = vmatmul.f32.gmra.mxu0 %v708
  %v730 = vpop.f32.mrf.mxu0
  %v731 = vadd.f32 0.0, %v730
  %732 = vmatmul.f32.gmra.mxu0 %v711
  %v733 = vpop.f32.mrf.mxu0
  %v734 = vadd.f32 0.0, %v733
  %735 = vdwg.mxu0
  %737 = vrot.lane.b32.xlu0 %v734, 16
  %v738 = vpop.permute.xlu0 %737
  %v740 = vsel %vm579, %v731, %v738
  %745 = vrot.lane.b32.xlu0 %v443, 32
  %v746 = vpop.permute.xlu0 %745
  %747 = vrot.lane.b32.xlu0 %v446, 32
  %v748 = vpop.permute.xlu0 %747
  %749 = vrot.lane.b32.xlu0 %v449, 32
  %v750 = vpop.permute.xlu0 %749
  %751 = vrot.lane.b32.xlu0 %v452, 32
  %v752 = vpop.permute.xlu0 %751
  %758 = vrot.lane.b32.xlu0 %v467, 32
  %v759 = vpop.permute.xlu0 %758
  %v762 = vsel %vm222, %v740, 0
  %764 = vmatpush.msra.mxu0 0.0
  %765 = vmatpush.msra.mxu0 0.0
  %766 = vmatpush.msra.mxu0 0.0
  %767 = vmatpush.msra.mxu0 0.0
  %768 = vmatpush.msra.mxu0 0.0
  %769 = vmatpush.msra.mxu0 0.0
  %770 = vmatpush.msra.mxu0 0.0
  %771 = vmatpush.msra.mxu0 0.0
  %772 = vmatpush.msra.mxu0 0.0
  %773 = vmatpush.msra.mxu0 0.0
  %774 = vmatpush.msra.mxu0 0.0
  %775 = vmatpush.msra.mxu0 0.0
  %776 = vmatpush.msra.mxu0 %v752
  %777 = vmatpush.msra.mxu0 %v750
  %778 = vmatpush.msra.mxu0 %v748
  %779 = vmatpush.msra.mxu0 %v746
  %780 = vmatmul.f32.gmra.mxu0 %v762
  %v781 = vpop.f32.mrf.mxu0
  %v782 = vadd.f32 %v759, %v781
  %783 = vdwg.mxu0
  %v784 = vadd.f32 %v437, %v782
  %v785 = vsel %vm222, %v784, 0.0
  %786 = vadd.xlane.f32.xlu0 %v785
  %v787 = vpop.xlane.xlu0 %786
  %v788 = vmul.f32 %v787, %v410
  %v789 = vsub.f32 %v784, %v788
  %v790 = vmul.f32 %v789, %v789
  %v791 = vsel %vm222, %v790, 0.0
  %792 = vadd.xlane.f32.xlu0 %v791
  %v793 = vpop.xlane.xlu0 %792
  %v794 = vmul.f32 %v793, %v410
  %v795 = vadd.f32 %v794, 1e-05
  %v796 = vrsqrt.pop %v795
  %v797 = vmul.f32 %v796, %v795
  %v798 = vmul.f32 %v797, %v796
  %v799 = vmul.f32 0.5, %v798
  %v800 = vsub.f32 1.5, %v799
  %v801 = vmul.f32 %v796, %v800
  %vm802 = vweird.f32 %v795
  %vm803 = vweird.f32 %v796
  %vm804 = vmor %vm802, %vm803
  %v805 = vsel %vm804, %v796, %v801
  %v806 = vmul.f32 %v789, %v805
  %v807 = vperm.slane %v464, 0
  %v808 = vmul.f32 %v806, %v807
  %810 = vrot.lane.b32.xlu0 %v807, 96
  %v811 = vpop.permute.xlu0 %810
  %v813 = vadd.f32 %v808, %v811
  %v815 = vrot.slane %v489, 4
  %816 = vrot.lane.b32.xlu0 %v815, 32
  %v817 = vpop.permute.xlu0 %816
  %vm819 = vcmask 523264
  %v820 = vsel %vm819, %v564, %v817
  %v821 = vrot.slane %v546, 4
  %v824 = vrot.slane %v820, 4
  %vm826 = vcmask 1043456
  %v827 = vsel %vm826, %v821, %v824
  %828 = vst [vmem:[%s12] sm:$0xff] %v827
  %v829 = vperm.slane %v463, 1
  %v831 = vsel %vm222, %v813, 0
  %833 = vmatpush.msra.mxu0 0.0
  %834 = vmatpush.msra.mxu0 0.0
  %835 = vmatpush.msra.mxu0 0.0
  %836 = vmatpush.msra.mxu0 0.0
  %837 = vmatpush.msra.mxu0 0.0
  %838 = vmatpush.msra.mxu0 0.0
  %839 = vmatpush.msra.mxu0 0.0
  %840 = vmatpush.msra.mxu0 0.0
  %841 = vmatpush.msra.mxu0 0.0
  %842 = vmatpush.msra.mxu0 0.0
  %843 = vmatpush.msra.mxu0 0.0
  %844 = vmatpush.msra.mxu0 0.0
  %845 = vmatpush.msra.mxu0 %v453
  %846 = vmatpush.msra.mxu0 %v450
  %847 = vmatpush.msra.mxu0 %v447
  %848 = vmatpush.msra.mxu0 %v444
  %849 = vmatmul.f32.gmra.mxu0 %v831
  %v850 = vpop.f32.mrf.mxu0
  %v851 = vadd.f32 %v829, %v850
  %852 = vdwg.mxu0
  %v853 = vxor.u32 %v851, 2147483648
  %v854 = vmul.f32 %v853, 1.442695
  %v855 = vpow.pop %v854
  %v856 = vadd.f32 %v855, 1.0
  %v857 = vrcp.pop %v856
  %v858 = vmul.f32 %v856, %v857
  %v859 = vsub.f32 1.0, %v858
  %v860 = vmul.f32 %v857, %v859
  %v861 = vadd.f32 %v857, %v860
  %vm862 = vweird.f32 %v856
  %vm863 = vweird.f32 %v857
  %vm864 = vmor %vm862, %vm863
  %v865 = vsel %vm864, %v857, %v861
  %v866 = vand.u32 2147483647, %v856
  %vm867 = vcmp.eq.f32.partialorder %v866, 8.507059e+37
  %v868 = vand.u32 %v856, 2147483648
  %v869 = vor.u32 1.1754944e-38, %v868
  %v870 = vsel %vm867, %v869, %v865
  %v871 = vmul.f32 1.0, %v870
  %v872 = vmul.f32 %v851, %v871
  %v874 = vsel %vm819, %v872, 0
  %876 = vmatpush.msra.mxu0 0.0
  %877 = vmatpush.msra.mxu0 0.0
  %878 = vmatpush.msra.mxu0 0.0
  %879 = vmatpush.msra.mxu0 0.0
  %880 = vmatpush.msra.mxu0 0.0
  %881 = vmatpush.msra.mxu0 0.0
  %882 = vmatpush.msra.mxu0 0.0
  %883 = vmatpush.msra.mxu0 0.0
  %884 = vmatpush.msra.mxu0 %v462
  %885 = vmatpush.msra.mxu0 %v461
  %886 = vmatpush.msra.mxu0 %v460
  %887 = vmatpush.msra.mxu0 %v459
  %888 = vmatpush.msra.mxu0 %v458
  %889 = vmatpush.msra.mxu0 %v457
  %890 = vmatpush.msra.mxu0 %v456
  %891 = vmatpush.msra.mxu0 %v455
  %892 = vmatmul.f32.gmra.mxu0 %v874
  %v893 = vpop.f32.mrf.mxu0
  %v894 = vadd.f32 0.0, %v893
  %895 = vdwg.mxu0
  %v896 = vadd.f32 %v813, %v894
  %898 = vrot.lane.b32.xlu0 %v829, 64
  %v899 = vpop.permute.xlu0 %898
  %v901 = vadd.f32 %v896, %v899
  %v902 = vsel %vm222, %v901, 0.0
  %903 = vadd.xlane.f32.xlu0 %v902
  %v904 = vpop.xlane.xlu0 %903
  %v905 = vmul.f32 %v904, %v410
  %v906 = vsub.f32 %v901, %v905
  %v907 = vmul.f32 %v906, %v906
  %v908 = vsel %vm222, %v907, 0.0
  %909 = vadd.xlane.f32.xlu0 %v908
  %v910 = vpop.xlane.xlu0 %909
  %v911 = vmul.f32 %v910, %v410
  %v912 = vadd.f32 %v911, 1e-05
  %v913 = vrsqrt.pop %v912
  %v914 = vmul.f32 %v913, %v912
  %v915 = vmul.f32 %v914, %v913
  %v916 = vmul.f32 0.5, %v915
  %v917 = vsub.f32 1.5, %v916
  %v918 = vmul.f32 %v913, %v917
  %vm919 = vweird.f32 %v912
  %vm920 = vweird.f32 %v913
  %vm921 = vmor %vm919, %vm920
  %v922 = vsel %vm921, %v913, %v918
  %v923 = vmul.f32 %v906, %v922
  %v924 = vperm.slane %v464, 1
  %v925 = vmul.f32 %v923, %v924
  %927 = vrot.lane.b32.xlu0 %v924, 96
  %v928 = vpop.permute.xlu0 %927
  %v930 = vadd.f32 %v925, %v928
  %v932 = vrot.slane %v930, 2
  %v934 = vrot.slane %v930, 4
  %v936 = vsel %vm88, %v932, %v934
  %vm937 = vcmask 257024
  %938 = vst.msk [vmem:[%s13] sm:$0xf] %vm937, %v936
  %v939 = vld [vmem:[%s4] sm:$0xf]
  %v940 = vrot.slane %v930, 6
  %v943 = vrot.slane %v939, 4
  %v945 = vsel %vm88, %v939, %v940
  %vm946 = vcmask 1045504
  %v947 = vsel %vm946, %v945, %v943
  %v948 = vperm.slane %v463, 2
  %950 = vrot.lane.b32.xlu0 %v948, 64
  %v951 = vpop.permute.xlu0 %950
  %v954 = vsel %vm222, %v947, 0
  %v956 = vsel %vm222, %v934, 0
  %958 = vmatpush.msra.mxu0 0.0
  %959 = vmatpush.msra.mxu0 0.0
  %960 = vmatpush.msra.mxu0 0.0
  %961 = vmatpush.msra.mxu0 0.0
  %962 = vmatpush.msra.mxu0 0.0
  %963 = vmatpush.msra.mxu0 0.0
  %964 = vmatpush.msra.mxu0 0.0
  %965 = vmatpush.msra.mxu0 0.0
  %966 = vmatpush.msra.mxu0 0.0
  %967 = vmatpush.msra.mxu0 0.0
  %968 = vmatpush.msra.mxu0 0.0
  %969 = vmatpush.msra.mxu0 0.0
  %970 = vmatpush.msra.mxu0 %v454
  %971 = vmatpush.msra.mxu0 %v451
  %972 = vmatpush.msra.mxu0 %v448
  %973 = vmatpush.msra.mxu0 %v445
  %974 = vmatmul.f32.gmra.mxu0 %v954
  %v975 = vpop.f32.mrf.mxu0
  %v976 = vadd.f32 %v951, %v975
  %977 = vmatmul.f32.gmra.mxu0 %v956
  %v978 = vpop.f32.mrf.mxu0
  %v979 = vadd.f32 %v951, %v978
  %980 = vdwg.mxu0
  %v981 = vxor.u32 %v976, 2147483648
  %v982 = vxor.u32 %v979, 2147483648
  %v983 = vmul.f32 %v981, 1.442695
  %v984 = vpow.pop %v983
  %v985 = vmul.f32 %v982, 1.442695
  %v986 = vpow.pop %v985
  %v987 = vadd.f32 %v984, 1.0
  %v988 = vadd.f32 %v986, 1.0
  %v989 = vrcp.pop %v987
  %v990 = vmul.f32 %v987, %v989
  %v991 = vsub.f32 1.0, %v990
  %v992 = vmul.f32 %v989, %v991
  %v993 = vadd.f32 %v989, %v992
  %vm994 = vweird.f32 %v987
  %vm995 = vweird.f32 %v989
  %vm996 = vmor %vm994, %vm995
  %v997 = vsel %vm996, %v989, %v993
  %v998 = vand.u32 2147483647, %v987
  %vm999 = vcmp.eq.f32.partialorder %v998, 8.507059e+37
  %v1000 = vand.u32 %v987, 2147483648
  %v1001 = vor.u32 1.1754944e-38, %v1000
  %v1002 = vsel %vm999, %v1001, %v997
  %v1003 = vmul.f32 1.0, %v1002
  %v1004 = vrcp.pop %v988
  %v1005 = vmul.f32 %v988, %v1004
  %v1006 = vsub.f32 1.0, %v1005
  %v1007 = vmul.f32 %v1004, %v1006
  %v1008 = vadd.f32 %v1004, %v1007
  %vm1009 = vweird.f32 %v988
  %vm1010 = vweird.f32 %v1004
  %vm1011 = vmor %vm1009, %vm1010
  %v1012 = vsel %vm1011, %v1004, %v1008
  %v1013 = vand.u32 2147483647, %v988
  %vm1014 = vcmp.eq.f32.partialorder %v1013, 8.507059e+37
  %v1015 = vand.u32 %v988, 2147483648
  %v1016 = vor.u32 1.1754944e-38, %v1015
  %v1017 = vsel %vm1014, %v1016, %v1012
  %v1018 = vmul.f32 1.0, %v1017
  %1021 = vrot.lane.b32.xlu0 %v1003, 96
  %v1022 = vpop.permute.xlu0 %1021
  %1023 = vrot.lane.b32.xlu0 %v1018, 96
  %v1024 = vpop.permute.xlu0 %1023
  %v1027 = vmul.f32 %v976, %v1022
  %v1028 = vmul.f32 %v979, %v1024
  %v1031 = vrot.slane %v1027, 2
  %v1032 = vrot.slane %v1028, 2
  %v1033 = vsel %vm946, %v1031, %v1032
  %v1035 = vsel %vm826, %v1027, %v1033
  %v1036 = vperm.slane %v463, 4
  %v1037 = vmul.f32 %v1035, %v1036
  %v1038 = vadd.f32 %v1037, 0.0
  %v1039 = vrot.slane %v1027, 1
  %vm1041 = vcmask 1044480
  %v1042 = vrot.slane %v1027, 3
  %v1043 = vrot.slane %v1028, 3
  %v1044 = vsel %vm1041, %v1042, %v1043
  %v1046 = vsel %vm826, %v1039, %v1044
  %v1047 = vperm.slane %v463, 5
  %v1048 = vmul.f32 %v1046, %v1047
  %v1049 = vadd.f32 %v1038, %v1048
  %v1051 = vrot.slane %v1028, 4
  %v1053 = vsel %vm826, %v1031, %v1051
  %v1054 = vperm.slane %v463, 6
  %v1055 = vmul.f32 %v1053, %v1054
  %v1056 = vadd.f32 %v1049, %v1055
  %v1057 = vperm.slane %v463, 3
  %1059 = vrot.lane.b32.xlu0 %v1057, 96
  %v1060 = vpop.permute.xlu0 %1059
  %v1062 = vadd.f32 %v1056, %v1060
  %v1063 = vxor.u32 %v1062, 2147483648
  %v1064 = vmul.f32 %v1063, 1.442695
  %v1065 = vpow.pop %v1064
  %v1066 = vadd.f32 %v1065, 1.0
  %v1067 = vrcp.pop %v1066
  %v1068 = vmul.f32 %v1066, %v1067
  %v1069 = vsub.f32 1.0, %v1068
  %v1070 = vmul.f32 %v1067, %v1069
  %v1071 = vadd.f32 %v1067, %v1070
  %vm1072 = vweird.f32 %v1066
  %vm1073 = vweird.f32 %v1067
  %vm1074 = vmor %vm1072, %vm1073
  %v1075 = vsel %vm1074, %v1067, %v1071
  %v1076 = vand.u32 2147483647, %v1066
  %vm1077 = vcmp.eq.f32.partialorder %v1076, 8.507059e+37
  %v1078 = vand.u32 %v1066, 2147483648
  %v1079 = vor.u32 1.1754944e-38, %v1078
  %v1080 = vsel %vm1077, %v1079, %v1075
  %v1081 = vmul.f32 1.0, %v1080
  %v1082 = vmul.f32 %v1062, %v1081
  %1083 = vrot.lane.b32.xlu0 %v445, 32
  %v1084 = vpop.permute.xlu0 %1083
  %1085 = vrot.lane.b32.xlu0 %v448, 32
  %v1086 = vpop.permute.xlu0 %1085
  %1087 = vrot.lane.b32.xlu0 %v451, 32
  %v1088 = vpop.permute.xlu0 %1087
  %1089 = vrot.lane.b32.xlu0 %v454, 32
  %v1090 = vpop.permute.xlu0 %1089
  %v1096 = vsel %vm222, %v1082, 0
  %1098 = vmatpush.msra.mxu0 0.0
  %1099 = vmatpush.msra.mxu0 0.0
  %1100 = vmatpush.msra.mxu0 0.0
  %1101 = vmatpush.msra.mxu0 0.0
  %1102 = vmatpush.msra.mxu0 0.0
  %1103 = vmatpush.msra.mxu0 0.0
  %1104 = vmatpush.msra.mxu0 0.0
  %1105 = vmatpush.msra.mxu0 0.0
  %1106 = vmatpush.msra.mxu0 0.0
  %1107 = vmatpush.msra.mxu0 0.0
  %1108 = vmatpush.msra.mxu0 0.0
  %1109 = vmatpush.msra.mxu0 0.0
  %1110 = vmatpush.msra.mxu0 %v1090
  %1111 = vmatpush.msra.mxu0 %v1088
  %1112 = vmatpush.msra.mxu0 %v1086
  %1113 = vmatpush.msra.mxu0 %v1084
  %1114 = vmatmul.f32.gmra.mxu0 %v1096
  %v1115 = vpop.f32.mrf.mxu0
  %v1116 = vadd.f32 %v1057, %v1115
  %1117 = vdwg.mxu0
  %v1118 = vadd.f32 %v930, %v1116
  %v1119 = vsel %vm222, %v1118, 0.0
  %1120 = vadd.xlane.f32.xlu0 %v1119
  %v1121 = vpop.xlane.xlu0 %1120
  %v1122 = vmul.f32 %v1121, %v410
  %v1123 = vsub.f32 %v1118, %v1122
  %v1124 = vmul.f32 %v1123, %v1123
  %v1125 = vsel %vm222, %v1124, 0.0
  %1126 = vadd.xlane.f32.xlu0 %v1125
  %v1127 = vpop.xlane.xlu0 %1126
  %v1128 = vmul.f32 %v1127, %v410
  %v1129 = vadd.f32 %v1128, 1e-05
  %v1130 = vrsqrt.pop %v1129
  %v1131 = vmul.f32 %v1130, %v1129
  %v1132 = vmul.f32 %v1131, %v1130
  %v1133 = vmul.f32 0.5, %v1132
  %v1134 = vsub.f32 1.5, %v1133
  %v1135 = vmul.f32 %v1130, %v1134
  %vm1136 = vweird.f32 %v1129
  %vm1137 = vweird.f32 %v1130
  %vm1138 = vmor %vm1136, %vm1137
  %v1139 = vsel %vm1138, %v1130, %v1135
  %v1140 = vmul.f32 %v1123, %v1139
  %v1141 = vperm.slane %v464, 2
  %v1142 = vmul.f32 %v1140, %v1141
  %1144 = vrot.lane.b32.xlu0 %v1141, 96
  %v1145 = vpop.permute.xlu0 %1144
  %v1147 = vadd.f32 %v1142, %v1145
  %1152 = vrot.lane.b32.xlu0 %v444, 64
  %v1153 = vpop.permute.xlu0 %1152
  %1154 = vrot.lane.b32.xlu0 %v447, 64
  %v1155 = vpop.permute.xlu0 %1154
  %1156 = vrot.lane.b32.xlu0 %v450, 64
  %v1157 = vpop.permute.xlu0 %1156
  %1158 = vrot.lane.b32.xlu0 %v453, 64
  %v1159 = vpop.permute.xlu0 %1158
  %v1165 = vsel %vm222, %v1147, 0
  %1167 = vmatpush.msra.mxu0 0.0
  %1168 = vmatpush.msra.mxu0 0.0
  %1169 = vmatpush.msra.mxu0 0.0
  %1170 = vmatpush.msra.mxu0 0.0
  %1171 = vmatpush.msra.mxu0 0.0
  %1172 = vmatpush.msra.mxu0 0.0
  %1173 = vmatpush.msra.mxu0 0.0
  %1174 = vmatpush.msra.mxu0 0.0
  %1175 = vmatpush.msra.mxu0 0.0
  %1176 = vmatpush.msra.mxu0 0.0
  %1177 = vmatpush.msra.mxu0 0.0
  %1178 = vmatpush.msra.mxu0 0.0
  %1179 = vmatpush.msra.mxu0 %v1159
  %1180 = vmatpush.msra.mxu0 %v1157
  %1181 = vmatpush.msra.mxu0 %v1155
  %1182 = vmatpush.msra.mxu0 %v1153
  %1183 = vmatmul.f32.gmra.mxu0 %v1165
  %v1184 = vpop.f32.mrf.mxu0
  %v1185 = vadd.f32 %v948, %v1184
  %1186 = vdwg.mxu0
  %v1187 = vxor.u32 %v1185, 2147483648
  %v1188 = vmul.f32 %v1187, 1.442695
  %v1189 = vpow.pop %v1188
  %v1190 = vadd.f32 %v1189, 1.0
  %v1191 = vrcp.pop %v1190
  %v1192 = vmul.f32 %v1190, %v1191
  %v1193 = vsub.f32 1.0, %v1192
  %v1194 = vmul.f32 %v1191, %v1193
  %v1195 = vadd.f32 %v1191, %v1194
  %vm1196 = vweird.f32 %v1190
  %vm1197 = vweird.f32 %v1191
  %vm1198 = vmor %vm1196, %vm1197
  %v1199 = vsel %vm1198, %v1191, %v1195
  %v1200 = vand.u32 2147483647, %v1190
  %vm1201 = vcmp.eq.f32.partialorder %v1200, 8.507059e+37
  %v1202 = vand.u32 %v1190, 2147483648
  %v1203 = vor.u32 1.1754944e-38, %v1202
  %v1204 = vsel %vm1201, %v1203, %v1199
  %v1205 = vmul.f32 1.0, %v1204
  %v1206 = vmul.f32 %v1185, %v1205
  %1215 = vrot.lane.b32.xlu0 %v455, 96
  %v1216 = vpop.permute.xlu0 %1215
  %1217 = vrot.lane.b32.xlu0 %v456, 96
  %v1218 = vpop.permute.xlu0 %1217
  %1219 = vrot.lane.b32.xlu0 %v457, 96
  %v1220 = vpop.permute.xlu0 %1219
  %1221 = vrot.lane.b32.xlu0 %v458, 96
  %v1222 = vpop.permute.xlu0 %1221
  %1223 = vrot.lane.b32.xlu0 %v459, 96
  %v1224 = vpop.permute.xlu0 %1223
  %1225 = vrot.lane.b32.xlu0 %v460, 96
  %v1226 = vpop.permute.xlu0 %1225
  %1227 = vrot.lane.b32.xlu0 %v461, 96
  %v1228 = vpop.permute.xlu0 %1227
  %1229 = vrot.lane.b32.xlu0 %v462, 96
  %v1230 = vpop.permute.xlu0 %1229
  %v1240 = vsel %vm819, %v1206, 0
  %1242 = vmatpush.msra.mxu0 0.0
  %1243 = vmatpush.msra.mxu0 0.0
  %1244 = vmatpush.msra.mxu0 0.0
  %1245 = vmatpush.msra.mxu0 0.0
  %1246 = vmatpush.msra.mxu0 0.0
  %1247 = vmatpush.msra.mxu0 0.0
  %1248 = vmatpush.msra.mxu0 0.0
  %1249 = vmatpush.msra.mxu0 0.0
  %1250 = vmatpush.msra.mxu0 %v1230
  %1251 = vmatpush.msra.mxu0 %v1228
  %1252 = vmatpush.msra.mxu0 %v1226
  %1253 = vmatpush.msra.mxu0 %v1224
  %1254 = vmatpush.msra.mxu0 %v1222
  %1255 = vmatpush.msra.mxu0 %v1220
  %1256 = vmatpush.msra.mxu0 %v1218
  %1257 = vmatpush.msra.mxu0 %v1216
  %1258 = vmatmul.f32.gmra.mxu0 %v1240
  %v1259 = vpop.f32.mrf.mxu0
  %v1260 = vadd.f32 0.0, %v1259
  %1261 = vdwg.mxu0
  %v1262 = vadd.f32 %v1147, %v1260
  %1263 = vrot.lane.b32.xlu0 %v829, 32
  %v1264 = vpop.permute.xlu0 %1263
  %v1266 = vadd.f32 %v1262, %v1264
  %v1267 = vsel %vm222, %v1266, 0.0
  %1268 = vadd.xlane.f32.xlu0 %v1267
  %v1269 = vpop.xlane.xlu0 %1268
  %v1270 = vmul.f32 %v1269, %v410
  %v1271 = vsub.f32 %v1266, %v1270
  %v1272 = vmul.f32 %v1271, %v1271
  %v1273 = vsel %vm222, %v1272, 0.0
  %1274 = vadd.xlane.f32.xlu0 %v1273
  %v1275 = vpop.xlane.xlu0 %1274
  %v1276 = vmul.f32 %v1275, %v410
  %v1277 = vadd.f32 %v1276, 1e-05
  %v1278 = vrsqrt.pop %v1277
  %v1279 = vmul.f32 %v1278, %v1277
  %v1280 = vmul.f32 %v1279, %v1278
  %v1281 = vmul.f32 0.5, %v1280
  %v1282 = vsub.f32 1.5, %v1281
  %v1283 = vmul.f32 %v1278, %v1282
  %vm1284 = vweird.f32 %v1277
  %vm1285 = vweird.f32 %v1278
  %vm1286 = vmor %vm1284, %vm1285
  %v1287 = vsel %vm1286, %v1278, %v1283
  %v1288 = vmul.f32 %v1271, %v1287
  %v1289 = vperm.slane %v464, 3
  %v1290 = vmul.f32 %v1288, %v1289
  %1292 = vrot.lane.b32.xlu0 %v1289, 96
  %v1293 = vpop.permute.xlu0 %1292
  %v1295 = vadd.f32 %v1290, %v1293
  %s1296 = scalar_lea.vmem %s7, 96
  %v1297 = vld [vmem:[%s1296] sm:$0xff]
  %v1298 = vld [vmem:[%s1296 + $0x8] sm:$0xff]
  %v1299 = vld [vmem:[%s1296 + $0x10] sm:$0xff]
  %v1300 = vld [vmem:[%s1296 + $0x18] sm:$0xff]
  %v1301 = vld [vmem:[%s1296 + $0x20] sm:$0xff]
  %v1302 = vld [vmem:[%s1296 + $0x28] sm:$0xff]
  %v1303 = vld [vmem:[%s1296 + $0x30] sm:$0xff]
  %v1304 = vld [vmem:[%s1296 + $0x38] sm:$0xff]
  %v1305 = vld [vmem:[%s1296 + $0x40] sm:$0xff]
  %v1306 = vld [vmem:[%s1296 + $0x48] sm:$0xff]
  %v1307 = vld [vmem:[%s1296 + $0x50] sm:$0xff]
  %v1308 = vld [vmem:[%s1296 + $0x58] sm:$0xff]
  %s1309 = scalar_lea.vmem %s8, 64
  %v1310 = vld [vmem:[%s1309] sm:$0xff]
  %v1311 = vld [vmem:[%s1309 + $0x8] sm:$0xff]
  %v1312 = vld [vmem:[%s1309 + $0x10] sm:$0xff]
  %v1313 = vld [vmem:[%s1309 + $0x18] sm:$0xff]
  %v1314 = vld [vmem:[%s1309 + $0x20] sm:$0xff]
  %v1315 = vld [vmem:[%s1309 + $0x28] sm:$0xff]
  %v1316 = vld [vmem:[%s1309 + $0x30] sm:$0xff]
  %v1317 = vld [vmem:[%s1309 + $0x38] sm:$0xff]
  %s1318 = scalar_lea.vmem %s9, 32
  %v1319 = vld [vmem:[%s1318] sm:$0xff]
  %v1320 = vld [vmem:[%s1318 + $0x8] sm:$0xff]
  %v1321 = vld [vmem:[%s1318 + $0x10] sm:$0xff]
  %v1322 = vld [vmem:[%s1318 + $0x18] sm:$0xff]
  %v1323 = vperm.slane %v1319, 0
  %v1325 = vsel %vm222, %v1295, 0
  %1327 = vmatpush.msra.mxu0 0.0
  %1328 = vmatpush.msra.mxu0 0.0
  %1329 = vmatpush.msra.mxu0 0.0
  %1330 = vmatpush.msra.mxu0 0.0
  %1331 = vmatpush.msra.mxu0 0.0
  %1332 = vmatpush.msra.mxu0 0.0
  %1333 = vmatpush.msra.mxu0 0.0
  %1334 = vmatpush.msra.mxu0 0.0
  %1335 = vmatpush.msra.mxu0 0.0
  %1336 = vmatpush.msra.mxu0 0.0
  %1337 = vmatpush.msra.mxu0 0.0
  %1338 = vmatpush.msra.mxu0 0.0
  %1339 = vmatpush.msra.mxu0 %v1306
  %1340 = vmatpush.msra.mxu0 %v1303
  %1341 = vmatpush.msra.mxu0 %v1300
  %1342 = vmatpush.msra.mxu0 %v1297
  %1343 = vmatmul.f32.gmra.mxu0 %v1325
  %v1344 = vpop.f32.mrf.mxu0
  %v1345 = vadd.f32 %v1323, %v1344
  %1346 = vdwg.mxu0
  %1351 = vrot.lane.b32.xlu0 %v1299, 64
  %v1352 = vpop.permute.xlu0 %1351
  %1353 = vrot.lane.b32.xlu0 %v1302, 64
  %v1354 = vpop.permute.xlu0 %1353
  %1355 = vrot.lane.b32.xlu0 %v1305, 64
  %v1356 = vpop.permute.xlu0 %1355
  %1357 = vrot.lane.b32.xlu0 %v1308, 64
  %v1358 = vpop.permute.xlu0 %1357
  %1363 = vmatpush.msra.mxu0 0.0
  %1364 = vmatpush.msra.mxu0 0.0
  %1365 = vmatpush.msra.mxu0 0.0
  %1366 = vmatpush.msra.mxu0 0.0
  %1367 = vmatpush.msra.mxu0 0.0
  %1368 = vmatpush.msra.mxu0 0.0
  %1369 = vmatpush.msra.mxu0 0.0
  %1370 = vmatpush.msra.mxu0 0.0
  %1371 = vmatpush.msra.mxu0 0.0
  %1372 = vmatpush.msra.mxu0 0.0
  %1373 = vmatpush.msra.mxu0 0.0
  %1374 = vmatpush.msra.mxu0 0.0
  %1375 = vmatpush.msra.mxu0 %v1358
  %1376 = vmatpush.msra.mxu0 %v1356
  %1377 = vmatpush.msra.mxu0 %v1354
  %1378 = vmatpush.msra.mxu0 %v1352
  %1379 = vmatmul.f32.gmra.mxu0 %v508
  %v1380 = vpop.f32.mrf.mxu0
  %v1381 = vadd.f32 0.0, %v1380
  %1382 = vmatmul.f32.gmra.mxu0 %v511
  %v1383 = vpop.f32.mrf.mxu0
  %v1384 = vadd.f32 0.0, %v1383
  %1385 = vmatmul.f32.gmra.mxu0 %v514
  %v1386 = vpop.f32.mrf.mxu0
  %v1387 = vadd.f32 0.0, %v1386
  %1388 = vdwg.mxu0
  %1390 = vrot.lane.b32.xlu0 %v1345, 112
  %v1391 = vpop.permute.xlu0 %1390
  %s1393 = scalar_lea.vmem %s3, 8
  %v1394 = vld [vmem:[%s1393] sm:$0xff]
  %1396 = vrot.lane.b32.xlu0 %v1394, 64
  %v1397 = vpop.permute.xlu0 %1396
  %1398 = vrot.lane.b32.xlu0 %v1394, 112
  %v1399 = vpop.permute.xlu0 %1398
  %1400 = vrot.lane.b32.xlu0 %v1394, 48
  %v1401 = vpop.permute.xlu0 %1400
  %1404 = vrot.lane.b32.xlu0 %v1381, 112
  %v1405 = vpop.permute.xlu0 %1404
  %1406 = vrot.lane.b32.xlu0 %v1384, 112
  %v1407 = vpop.permute.xlu0 %1406
  %1409 = vrot.lane.b32.xlu0 %v1387, 112
  %v1410 = vpop.permute.xlu0 %1409
  %1411 = vrot.lane.b32.xlu0 %v1345, 96
  %v1412 = vpop.permute.xlu0 %1411
  %1413 = vrot.lane.b32.xlu0 %v1391, 96
  %v1414 = vpop.permute.xlu0 %1413
  %v1415 = vadd.f32 %v1345, %v1321
  %v1416 = vadd.f32 %v1391, %v1322
  %1419 = vrot.lane.b32.xlu0 %v1321, 112
  %v1420 = vpop.permute.xlu0 %1419
  %1421 = vrot.lane.b32.xlu0 %v1322, 112
  %v1422 = vpop.permute.xlu0 %1421
  %v1425 = vadd.f32 %v1345, %v1420
  %v1426 = vadd.f32 %v1391, %v1422
  %v1428 = vsel %vm579, %v1425, 0
  %v1431 = vsel %vm579, %v1426, 0
  %v1433 = vsel %vm579, %v1381, 0
  %v1435 = vsel %vm579, %v1384, 0
  %v1437 = vsel %vm579, %v1405, 0
  %v1439 = vsel %vm579, %v1407, 0
  %v1441 = vsel %vm579, %v1387, 0
  %v1443 = vsel %vm579, %v1410, 0
  %1445 = vmatpush.xpose.msra.mxu0 0.0
  %1446 = vmatpush.xpose.msra.mxu0 0.0
  %1447 = vmatpush.xpose.msra.mxu0 0.0
  %1448 = vmatpush.xpose.msra.mxu0 0.0
  %1449 = vmatpush.xpose.msra.mxu0 0.0
  %1450 = vmatpush.xpose.msra.mxu0 0.0
  %1451 = vmatpush.xpose.msra.mxu0 0.0
  %1452 = vmatpush.xpose.msra.mxu0 0.0
  %1453 = vmatpush.xpose.msra.mxu0 0.0
  %1454 = vmatpush.xpose.msra.mxu0 0.0
  %1455 = vmatpush.xpose.msra.mxu0 %v1443
  %1456 = vmatpush.xpose.msra.mxu0 %v1441
  %1457 = vmatpush.xpose.msra.mxu0 %v1439
  %1458 = vmatpush.xpose.msra.mxu0 %v1437
  %1459 = vmatpush.xpose.msra.mxu0 %v1435
  %1460 = vmatpush.xpose.msra.mxu0 %v1433
  %1461 = vmatmul.f32.gmra.mxu0 %v1428
  %v1462 = vpop.f32.mrf.mxu0
  %v1463 = vadd.f32 0.0, %v1462
  %1464 = vmatmul.f32.gmra.mxu0 %v1431
  %v1465 = vpop.f32.mrf.mxu0
  %v1466 = vadd.f32 0.0, %v1465
  %1467 = vdwg.mxu0
  %v1469 = vsel %vm579, %v1415, 0
  %v1472 = vsel %vm579, %v1416, 0
  %v1474 = vsel %vm579, %v1394, 0
  %v1476 = vsel %vm579, %v1397, 0
  %v1478 = vsel %vm579, %v1399, 0
  %v1480 = vsel %vm579, %v1401, 0
  %v1482 = vsel %vm579, %v1412, 0
  %v1484 = vsel %vm579, %v1414, 0
  %1486 = vmatpush.xpose.msra.mxu0 0.0
  %1487 = vmatpush.xpose.msra.mxu0 0.0
  %1488 = vmatpush.xpose.msra.mxu0 0.0
  %1489 = vmatpush.xpose.msra.mxu0 0.0
  %1490 = vmatpush.xpose.msra.mxu0 0.0
  %1491 = vmatpush.xpose.msra.mxu0 0.0
  %1492 = vmatpush.xpose.msra.mxu0 0.0
  %1493 = vmatpush.xpose.msra.mxu0 0.0
  %1494 = vmatpush.xpose.msra.mxu0 0.0
  %1495 = vmatpush.xpose.msra.mxu0 0.0
  %1496 = vmatpush.xpose.msra.mxu0 %v1484
  %1497 = vmatpush.xpose.msra.mxu0 %v1482
  %1498 = vmatpush.xpose.msra.mxu0 %v1480
  %1499 = vmatpush.xpose.msra.mxu0 %v1478
  %1500 = vmatpush.xpose.msra.mxu0 %v1476
  %1501 = vmatpush.xpose.msra.mxu0 %v1474
  %1502 = vmatmul.f32.gmra.mxu0 %v1469
  %v1503 = vpop.f32.mrf.mxu0
  %v1504 = vadd.f32 %v1463, %v1503
  %1505 = vmatmul.f32.gmra.mxu0 %v1472
  %v1506 = vpop.f32.mrf.mxu0
  %v1507 = vadd.f32 %v1466, %v1506
  %1508 = vdwg.mxu0
  %v1509 = vmul.f32 %v1504, 0.25
  %v1510 = vmul.f32 %v1507, 0.25
  %v1511 = vadd.f32 %v1509, %v441
  %v1512 = vadd.f32 %v1510, %v442
  %v1513 = vsel %vm666, %v1511, -inf
  %1514 = vmax.xlane.f32.xlu0 %v1513
  %v1515 = vpop.xlane.xlu0 %1514
  %v1516 = vsel %vm666, %v1512, -inf
  %1517 = vmax.xlane.f32.xlu0 %v1516
  %v1518 = vpop.xlane.xlu0 %1517
  %v1519 = vsub.f32 %v1511, %v1515
  %v1520 = vsub.f32 %v1512, %v1518
  %v1521 = vmul.f32 %v1519, 1.442695
  %v1522 = vpow.pop %v1521
  %v1523 = vmul.f32 %v1520, 1.442695
  %v1524 = vpow.pop %v1523
  %v1525 = vsel %vm666, %v1522, 0.0
  %1526 = vadd.xlane.f32.xlu0 %v1525
  %v1527 = vpop.xlane.xlu0 %1526
  %v1528 = vsel %vm666, %v1524, 0.0
  %1529 = vadd.xlane.f32.xlu0 %v1528
  %v1530 = vpop.xlane.xlu0 %1529
  %v1531 = vrcp.pop %v1527
  %v1532 = vrcp.pop %v1530
  %v1533 = vmul.f32 %v1522, %v1531
  %v1534 = vmul.f32 %v1524, %v1532
  %1535 = vrot.lane.b32.xlu0 %v1394, 96
  %v1536 = vpop.permute.xlu0 %1535
  %1537 = vrot.lane.b32.xlu0 %v1397, 96
  %v1538 = vpop.permute.xlu0 %1537
  %1539 = vrot.lane.b32.xlu0 %v1399, 96
  %v1540 = vpop.permute.xlu0 %1539
  %1541 = vrot.lane.b32.xlu0 %v1401, 96
  %v1542 = vpop.permute.xlu0 %1541
  %1543 = vrot.lane.b32.xlu0 %v1412, 96
  %v1544 = vpop.permute.xlu0 %1543
  %1545 = vrot.lane.b32.xlu0 %v1414, 96
  %v1546 = vpop.permute.xlu0 %1545
  %v1554 = vsel %vm666, %v1533, 0
  %v1557 = vsel %vm666, %v1534, 0
  %1559 = vmatpush.msra.mxu0 0.0
  %1560 = vmatpush.msra.mxu0 0.0
  %1561 = vmatpush.msra.mxu0 0.0
  %1562 = vmatpush.msra.mxu0 0.0
  %1563 = vmatpush.msra.mxu0 0.0
  %1564 = vmatpush.msra.mxu0 0.0
  %1565 = vmatpush.msra.mxu0 0.0
  %1566 = vmatpush.msra.mxu0 0.0
  %1567 = vmatpush.msra.mxu0 0.0
  %1568 = vmatpush.msra.mxu0 0.0
  %1569 = vmatpush.msra.mxu0 %v1546
  %1570 = vmatpush.msra.mxu0 %v1544
  %1571 = vmatpush.msra.mxu0 %v1542
  %1572 = vmatpush.msra.mxu0 %v1540
  %1573 = vmatpush.msra.mxu0 %v1538
  %1574 = vmatpush.msra.mxu0 %v1536
  %1575 = vmatmul.f32.gmra.mxu0 %v1554
  %v1576 = vpop.f32.mrf.mxu0
  %v1577 = vadd.f32 0.0, %v1576
  %1578 = vmatmul.f32.gmra.mxu0 %v1557
  %v1579 = vpop.f32.mrf.mxu0
  %v1580 = vadd.f32 0.0, %v1579
  %1581 = vdwg.mxu0
  %1583 = vrot.lane.b32.xlu0 %v1580, 16
  %v1584 = vpop.permute.xlu0 %1583
  %v1586 = vsel %vm579, %v1577, %v1584
  %1591 = vrot.lane.b32.xlu0 %v1297, 32
  %v1592 = vpop.permute.xlu0 %1591
  %1593 = vrot.lane.b32.xlu0 %v1300, 32
  %v1594 = vpop.permute.xlu0 %1593
  %1595 = vrot.lane.b32.xlu0 %v1303, 32
  %v1596 = vpop.permute.xlu0 %1595
  %1597 = vrot.lane.b32.xlu0 %v1306, 32
  %v1598 = vpop.permute.xlu0 %1597
  %1604 = vrot.lane.b32.xlu0 %v1323, 32
  %v1605 = vpop.permute.xlu0 %1604
  %v1608 = vsel %vm222, %v1586, 0
  %1610 = vmatpush.msra.mxu0 0.0
  %1611 = vmatpush.msra.mxu0 0.0
  %1612 = vmatpush.msra.mxu0 0.0
  %1613 = vmatpush.msra.mxu0 0.0
  %1614 = vmatpush.msra.mxu0 0.0
  %1615 = vmatpush.msra.mxu0 0.0
  %1616 = vmatpush.msra.mxu0 0.0
  %1617 = vmatpush.msra.mxu0 0.0
  %1618 = vmatpush.msra.mxu0 0.0
  %1619 = vmatpush.msra.mxu0 0.0
  %1620 = vmatpush.msra.mxu0 0.0
  %1621 = vmatpush.msra.mxu0 0.0
  %1622 = vmatpush.msra.mxu0 %v1598
  %1623 = vmatpush.msra.mxu0 %v1596
  %1624 = vmatpush.msra.mxu0 %v1594
  %1625 = vmatpush.msra.mxu0 %v1592
  %1626 = vmatmul.f32.gmra.mxu0 %v1608
  %v1627 = vpop.f32.mrf.mxu0
  %v1628 = vadd.f32 %v1605, %v1627
  %1629 = vdwg.mxu0
  %v1630 = vadd.f32 %v1295, %v1628
  %v1631 = vsel %vm222, %v1630, 0.0
  %1632 = vadd.xlane.f32.xlu0 %v1631
  %v1633 = vpop.xlane.xlu0 %1632
  %v1634 = vmul.f32 %v1633, %v410
  %v1635 = vsub.f32 %v1630, %v1634
  %v1636 = vmul.f32 %v1635, %v1635
  %v1637 = vsel %vm222, %v1636, 0.0
  %1638 = vadd.xlane.f32.xlu0 %v1637
  %v1639 = vpop.xlane.xlu0 %1638
  %v1640 = vmul.f32 %v1639, %v410
  %v1641 = vadd.f32 %v1640, 1e-05
  %v1642 = vrsqrt.pop %v1641
  %v1643 = vmul.f32 %v1642, %v1641
  %v1644 = vmul.f32 %v1643, %v1642
  %v1645 = vmul.f32 0.5, %v1644
  %v1646 = vsub.f32 1.5, %v1645
  %v1647 = vmul.f32 %v1642, %v1646
  %vm1648 = vweird.f32 %v1641
  %vm1649 = vweird.f32 %v1642
  %vm1650 = vmor %vm1648, %vm1649
  %v1651 = vsel %vm1650, %v1642, %v1647
  %v1652 = vmul.f32 %v1635, %v1651
  %v1653 = vperm.slane %v1320, 0
  %v1654 = vmul.f32 %v1652, %v1653
  %1656 = vrot.lane.b32.xlu0 %v1653, 96
  %v1657 = vpop.permute.xlu0 %1656
  %v1659 = vadd.f32 %v1654, %v1657
  %v1661 = vrot.slane %v1345, 4
  %1662 = vrot.lane.b32.xlu0 %v1661, 32
  %v1663 = vpop.permute.xlu0 %1662
  %v1665 = vsel %vm819, %v1412, %v1663
  %v1666 = vrot.slane %v1394, 4
  %v1669 = vrot.slane %v1665, 4
  %v1671 = vsel %vm826, %v1666, %v1669
  %s1672 = scalar_lea.vmem %s12, 8
  %1673 = vst [vmem:[%s1672] sm:$0xff] %v1671
  %v1674 = vperm.slane %v1319, 1
  %v1676 = vsel %vm222, %v1659, 0
  %1678 = vmatpush.msra.mxu0 0.0
  %1679 = vmatpush.msra.mxu0 0.0
  %1680 = vmatpush.msra.mxu0 0.0
  %1681 = vmatpush.msra.mxu0 0.0
  %1682 = vmatpush.msra.mxu0 0.0
  %1683 = vmatpush.msra.mxu0 0.0
  %1684 = vmatpush.msra.mxu0 0.0
  %1685 = vmatpush.msra.mxu0 0.0
  %1686 = vmatpush.msra.mxu0 0.0
  %1687 = vmatpush.msra.mxu0 0.0
  %1688 = vmatpush.msra.mxu0 0.0
  %1689 = vmatpush.msra.mxu0 0.0
  %1690 = vmatpush.msra.mxu0 %v1307
  %1691 = vmatpush.msra.mxu0 %v1304
  %1692 = vmatpush.msra.mxu0 %v1301
  %1693 = vmatpush.msra.mxu0 %v1298
  %1694 = vmatmul.f32.gmra.mxu0 %v1676
  %v1695 = vpop.f32.mrf.mxu0
  %v1696 = vadd.f32 %v1674, %v1695
  %1697 = vdwg.mxu0
  %v1698 = vxor.u32 %v1696, 2147483648
  %v1699 = vmul.f32 %v1698, 1.442695
  %v1700 = vpow.pop %v1699
  %v1701 = vadd.f32 %v1700, 1.0
  %v1702 = vrcp.pop %v1701
  %v1703 = vmul.f32 %v1701, %v1702
  %v1704 = vsub.f32 1.0, %v1703
  %v1705 = vmul.f32 %v1702, %v1704
  %v1706 = vadd.f32 %v1702, %v1705
  %vm1707 = vweird.f32 %v1701
  %vm1708 = vweird.f32 %v1702
  %vm1709 = vmor %vm1707, %vm1708
  %v1710 = vsel %vm1709, %v1702, %v1706
  %v1711 = vand.u32 2147483647, %v1701
  %vm1712 = vcmp.eq.f32.partialorder %v1711, 8.507059e+37
  %v1713 = vand.u32 %v1701, 2147483648
  %v1714 = vor.u32 1.1754944e-38, %v1713
  %v1715 = vsel %vm1712, %v1714, %v1710
  %v1716 = vmul.f32 1.0, %v1715
  %v1717 = vmul.f32 %v1696, %v1716
  %v1719 = vsel %vm819, %v1717, 0
  %1721 = vmatpush.msra.mxu0 0.0
  %1722 = vmatpush.msra.mxu0 0.0
  %1723 = vmatpush.msra.mxu0 0.0
  %1724 = vmatpush.msra.mxu0 0.0
  %1725 = vmatpush.msra.mxu0 0.0
  %1726 = vmatpush.msra.mxu0 0.0
  %1727 = vmatpush.msra.mxu0 0.0
  %1728 = vmatpush.msra.mxu0 0.0
  %1729 = vmatpush.msra.mxu0 %v1317
  %1730 = vmatpush.msra.mxu0 %v1316
  %1731 = vmatpush.msra.mxu0 %v1315
  %1732 = vmatpush.msra.mxu0 %v1314
  %1733 = vmatpush.msra.mxu0 %v1313
  %1734 = vmatpush.msra.mxu0 %v1312
  %1735 = vmatpush.msra.mxu0 %v1311
  %1736 = vmatpush.msra.mxu0 %v1310
  %1737 = vmatmul.f32.gmra.mxu0 %v1719
  %v1738 = vpop.f32.mrf.mxu0
  %v1739 = vadd.f32 0.0, %v1738
  %1740 = vdwg.mxu0
  %v1741 = vadd.f32 %v1659, %v1739
  %1743 = vrot.lane.b32.xlu0 %v1674, 64
  %v1744 = vpop.permute.xlu0 %1743
  %v1746 = vadd.f32 %v1741, %v1744
  %v1747 = vsel %vm222, %v1746, 0.0
  %1748 = vadd.xlane.f32.xlu0 %v1747
  %v1749 = vpop.xlane.xlu0 %1748
  %v1750 = vmul.f32 %v1749, %v410
  %v1751 = vsub.f32 %v1746, %v1750
  %v1752 = vmul.f32 %v1751, %v1751
  %v1753 = vsel %vm222, %v1752, 0.0
  %1754 = vadd.xlane.f32.xlu0 %v1753
  %v1755 = vpop.xlane.xlu0 %1754
  %v1756 = vmul.f32 %v1755, %v410
  %v1757 = vadd.f32 %v1756, 1e-05
  %v1758 = vrsqrt.pop %v1757
  %v1759 = vmul.f32 %v1758, %v1757
  %v1760 = vmul.f32 %v1759, %v1758
  %v1761 = vmul.f32 0.5, %v1760
  %v1762 = vsub.f32 1.5, %v1761
  %v1763 = vmul.f32 %v1758, %v1762
  %vm1764 = vweird.f32 %v1757
  %vm1765 = vweird.f32 %v1758
  %vm1766 = vmor %vm1764, %vm1765
  %v1767 = vsel %vm1766, %v1758, %v1763
  %v1768 = vmul.f32 %v1751, %v1767
  %v1769 = vperm.slane %v1320, 1
  %v1770 = vmul.f32 %v1768, %v1769
  %1772 = vrot.lane.b32.xlu0 %v1769, 96
  %v1773 = vpop.permute.xlu0 %1772
  %v1775 = vadd.f32 %v1770, %v1773
  %v1777 = vrot.slane %v1775, 2
  %v1779 = vrot.slane %v1775, 4
  %v1781 = vsel %vm88, %v1777, %v1779
  %s1782 = scalar_lea.vmem %s13, 4
  %1783 = vst.msk [vmem:[%s1782] sm:$0xf] %vm937, %v1781
  %s1784 = scalar_lea.vmem %s4, 4
  %v1785 = vld [vmem:[%s1784] sm:$0xf]
  %v1786 = vrot.slane %v1775, 6
  %v1789 = vrot.slane %v1785, 4
  %v1791 = vsel %vm88, %v1785, %v1786
  %v1792 = vsel %vm946, %v1791, %v1789
  %v1793 = vperm.slane %v1319, 2
  %1795 = vrot.lane.b32.xlu0 %v1793, 64
  %v1796 = vpop.permute.xlu0 %1795
  %v1799 = vsel %vm222, %v1792, 0
  %v1801 = vsel %vm222, %v1779, 0
  %1803 = vmatpush.msra.mxu0 0.0
  %1804 = vmatpush.msra.mxu0 0.0
  %1805 = vmatpush.msra.mxu0 0.0
  %1806 = vmatpush.msra.mxu0 0.0
  %1807 = vmatpush.msra.mxu0 0.0
  %1808 = vmatpush.msra.mxu0 0.0
  %1809 = vmatpush.msra.mxu0 0.0
  %1810 = vmatpush.msra.mxu0 0.0
  %1811 = vmatpush.msra.mxu0 0.0
  %1812 = vmatpush.msra.mxu0 0.0
  %1813 = vmatpush.msra.mxu0 0.0
  %1814 = vmatpush.msra.mxu0 0.0
  %1815 = vmatpush.msra.mxu0 %v1308
  %1816 = vmatpush.msra.mxu0 %v1305
  %1817 = vmatpush.msra.mxu0 %v1302
  %1818 = vmatpush.msra.mxu0 %v1299
  %1819 = vmatmul.f32.gmra.mxu0 %v1799
  %v1820 = vpop.f32.mrf.mxu0
  %v1821 = vadd.f32 %v1796, %v1820
  %1822 = vmatmul.f32.gmra.mxu0 %v1801
  %v1823 = vpop.f32.mrf.mxu0
  %v1824 = vadd.f32 %v1796, %v1823
  %1825 = vdwg.mxu0
  %v1826 = vxor.u32 %v1821, 2147483648
  %v1827 = vxor.u32 %v1824, 2147483648
  %v1828 = vmul.f32 %v1826, 1.442695
  %v1829 = vpow.pop %v1828
  %v1830 = vmul.f32 %v1827, 1.442695
  %v1831 = vpow.pop %v1830
  %v1832 = vadd.f32 %v1829, 1.0
  %v1833 = vadd.f32 %v1831, 1.0
  %v1834 = vrcp.pop %v1832
  %v1835 = vmul.f32 %v1832, %v1834
  %v1836 = vsub.f32 1.0, %v1835
  %v1837 = vmul.f32 %v1834, %v1836
  %v1838 = vadd.f32 %v1834, %v1837
  %vm1839 = vweird.f32 %v1832
  %vm1840 = vweird.f32 %v1834
  %vm1841 = vmor %vm1839, %vm1840
  %v1842 = vsel %vm1841, %v1834, %v1838
  %v1843 = vand.u32 2147483647, %v1832
  %vm1844 = vcmp.eq.f32.partialorder %v1843, 8.507059e+37
  %v1845 = vand.u32 %v1832, 2147483648
  %v1846 = vor.u32 1.1754944e-38, %v1845
  %v1847 = vsel %vm1844, %v1846, %v1842
  %v1848 = vmul.f32 1.0, %v1847
  %v1849 = vrcp.pop %v1833
  %v1850 = vmul.f32 %v1833, %v1849
  %v1851 = vsub.f32 1.0, %v1850
  %v1852 = vmul.f32 %v1849, %v1851
  %v1853 = vadd.f32 %v1849, %v1852
  %vm1854 = vweird.f32 %v1833
  %vm1855 = vweird.f32 %v1849
  %vm1856 = vmor %vm1854, %vm1855
  %v1857 = vsel %vm1856, %v1849, %v1853
  %v1858 = vand.u32 2147483647, %v1833
  %vm1859 = vcmp.eq.f32.partialorder %v1858, 8.507059e+37
  %v1860 = vand.u32 %v1833, 2147483648
  %v1861 = vor.u32 1.1754944e-38, %v1860
  %v1862 = vsel %vm1859, %v1861, %v1857
  %v1863 = vmul.f32 1.0, %v1862
  %1866 = vrot.lane.b32.xlu0 %v1848, 96
  %v1867 = vpop.permute.xlu0 %1866
  %1868 = vrot.lane.b32.xlu0 %v1863, 96
  %v1869 = vpop.permute.xlu0 %1868
  %v1872 = vmul.f32 %v1821, %v1867
  %v1873 = vmul.f32 %v1824, %v1869
  %v1876 = vrot.slane %v1872, 2
  %v1877 = vrot.slane %v1873, 2
  %v1878 = vsel %vm946, %v1876, %v1877
  %v1880 = vsel %vm826, %v1872, %v1878
  %v1881 = vperm.slane %v1319, 4
  %v1882 = vmul.f32 %v1880, %v1881
  %v1883 = vadd.f32 %v1882, 0.0
  %v1884 = vrot.slane %v1872, 1
  %v1886 = vrot.slane %v1872, 3
  %v1887 = vrot.slane %v1873, 3
  %v1888 = vsel %vm1041, %v1886, %v1887
  %v1890 = vsel %vm826, %v1884, %v1888
  %v1891 = vperm.slane %v1319, 5
  %v1892 = vmul.f32 %v1890, %v1891
  %v1893 = vadd.f32 %v1883, %v1892
  %v1895 = vrot.slane %v1873, 4
  %v1897 = vsel %vm826, %v1876, %v1895
  %v1898 = vperm.slane %v1319, 6
  %v1899 = vmul.f32 %v1897, %v1898
  %v1900 = vadd.f32 %v1893, %v1899
  %v1901 = vperm.slane %v1319, 3
  %1903 = vrot.lane.b32.xlu0 %v1901, 96
  %v1904 = vpop.permute.xlu0 %1903
  %v1906 = vadd.f32 %v1900, %v1904
  %v1907 = vxor.u32 %v1906, 2147483648
  %v1908 = vmul.f32 %v1907, 1.442695
  %v1909 = vpow.pop %v1908
  %v1910 = vadd.f32 %v1909, 1.0
  %v1911 = vrcp.pop %v1910
  %v1912 = vmul.f32 %v1910, %v1911
  %v1913 = vsub.f32 1.0, %v1912
  %v1914 = vmul.f32 %v1911, %v1913
  %v1915 = vadd.f32 %v1911, %v1914
  %vm1916 = vweird.f32 %v1910
  %vm1917 = vweird.f32 %v1911
  %vm1918 = vmor %vm1916, %vm1917
  %v1919 = vsel %vm1918, %v1911, %v1915
  %v1920 = vand.u32 2147483647, %v1910
  %vm1921 = vcmp.eq.f32.partialorder %v1920, 8.507059e+37
  %v1922 = vand.u32 %v1910, 2147483648
  %v1923 = vor.u32 1.1754944e-38, %v1922
  %v1924 = vsel %vm1921, %v1923, %v1919
  %v1925 = vmul.f32 1.0, %v1924
  %v1926 = vmul.f32 %v1906, %v1925
  %1927 = vrot.lane.b32.xlu0 %v1299, 32
  %v1928 = vpop.permute.xlu0 %1927
  %1929 = vrot.lane.b32.xlu0 %v1302, 32
  %v1930 = vpop.permute.xlu0 %1929
  %1931 = vrot.lane.b32.xlu0 %v1305, 32
  %v1932 = vpop.permute.xlu0 %1931
  %1933 = vrot.lane.b32.xlu0 %v1308, 32
  %v1934 = vpop.permute.xlu0 %1933
  %v1940 = vsel %vm222, %v1926, 0
  %1942 = vmatpush.msra.mxu0 0.0
  %1943 = vmatpush.msra.mxu0 0.0
  %1944 = vmatpush.msra.mxu0 0.0
  %1945 = vmatpush.msra.mxu0 0.0
  %1946 = vmatpush.msra.mxu0 0.0
  %1947 = vmatpush.msra.mxu0 0.0
  %1948 = vmatpush.msra.mxu0 0.0
  %1949 = vmatpush.msra.mxu0 0.0
  %1950 = vmatpush.msra.mxu0 0.0
  %1951 = vmatpush.msra.mxu0 0.0
  %1952 = vmatpush.msra.mxu0 0.0
  %1953 = vmatpush.msra.mxu0 0.0
  %1954 = vmatpush.msra.mxu0 %v1934
  %1955 = vmatpush.msra.mxu0 %v1932
  %1956 = vmatpush.msra.mxu0 %v1930
  %1957 = vmatpush.msra.mxu0 %v1928
  %1958 = vmatmul.f32.gmra.mxu0 %v1940
  %v1959 = vpop.f32.mrf.mxu0
  %v1960 = vadd.f32 %v1901, %v1959
  %1961 = vdwg.mxu0
  %v1962 = vadd.f32 %v1775, %v1960
  %v1963 = vsel %vm222, %v1962, 0.0
  %1964 = vadd.xlane.f32.xlu0 %v1963
  %v1965 = vpop.xlane.xlu0 %1964
  %v1966 = vmul.f32 %v1965, %v410
  %v1967 = vsub.f32 %v1962, %v1966
  %v1968 = vmul.f32 %v1967, %v1967
  %v1969 = vsel %vm222, %v1968, 0.0
  %1970 = vadd.xlane.f32.xlu0 %v1969
  %v1971 = vpop.xlane.xlu0 %1970
  %v1972 = vmul.f32 %v1971, %v410
  %v1973 = vadd.f32 %v1972, 1e-05
  %v1974 = vrsqrt.pop %v1973
  %v1975 = vmul.f32 %v1974, %v1973
  %v1976 = vmul.f32 %v1975, %v1974
  %v1977 = vmul.f32 0.5, %v1976
  %v1978 = vsub.f32 1.5, %v1977
  %v1979 = vmul.f32 %v1974, %v1978
  %vm1980 = vweird.f32 %v1973
  %vm1981 = vweird.f32 %v1974
  %vm1982 = vmor %vm1980, %vm1981
  %v1983 = vsel %vm1982, %v1974, %v1979
  %v1984 = vmul.f32 %v1967, %v1983
  %v1985 = vperm.slane %v1320, 2
  %v1986 = vmul.f32 %v1984, %v1985
  %1988 = vrot.lane.b32.xlu0 %v1985, 96
  %v1989 = vpop.permute.xlu0 %1988
  %v1991 = vadd.f32 %v1986, %v1989
  %1996 = vrot.lane.b32.xlu0 %v1298, 64
  %v1997 = vpop.permute.xlu0 %1996
  %1998 = vrot.lane.b32.xlu0 %v1301, 64
  %v1999 = vpop.permute.xlu0 %1998
  %2000 = vrot.lane.b32.xlu0 %v1304, 64
  %v2001 = vpop.permute.xlu0 %2000
  %2002 = vrot.lane.b32.xlu0 %v1307, 64
  %v2003 = vpop.permute.xlu0 %2002
  %v2009 = vsel %vm222, %v1991, 0
  %2011 = vmatpush.msra.mxu0 0.0
  %2012 = vmatpush.msra.mxu0 0.0
  %2013 = vmatpush.msra.mxu0 0.0
  %2014 = vmatpush.msra.mxu0 0.0
  %2015 = vmatpush.msra.mxu0 0.0
  %2016 = vmatpush.msra.mxu0 0.0
  %2017 = vmatpush.msra.mxu0 0.0
  %2018 = vmatpush.msra.mxu0 0.0
  %2019 = vmatpush.msra.mxu0 0.0
  %2020 = vmatpush.msra.mxu0 0.0
  %2021 = vmatpush.msra.mxu0 0.0
  %2022 = vmatpush.msra.mxu0 0.0
  %2023 = vmatpush.msra.mxu0 %v2003
  %2024 = vmatpush.msra.mxu0 %v2001
  %2025 = vmatpush.msra.mxu0 %v1999
  %2026 = vmatpush.msra.mxu0 %v1997
  %2027 = vmatmul.f32.gmra.mxu0 %v2009
  %v2028 = vpop.f32.mrf.mxu0
  %v2029 = vadd.f32 %v1793, %v2028
  %2030 = vdwg.mxu0
  %v2031 = vxor.u32 %v2029, 2147483648
  %v2032 = vmul.f32 %v2031, 1.442695
  %v2033 = vpow.pop %v2032
  %v2034 = vadd.f32 %v2033, 1.0
  %v2035 = vrcp.pop %v2034
  %v2036 = vmul.f32 %v2034, %v2035
  %v2037 = vsub.f32 1.0, %v2036
  %v2038 = vmul.f32 %v2035, %v2037
  %v2039 = vadd.f32 %v2035, %v2038
  %vm2040 = vweird.f32 %v2034
  %vm2041 = vweird.f32 %v2035
  %vm2042 = vmor %vm2040, %vm2041
  %v2043 = vsel %vm2042, %v2035, %v2039
  %v2044 = vand.u32 2147483647, %v2034
  %vm2045 = vcmp.eq.f32.partialorder %v2044, 8.507059e+37
  %v2046 = vand.u32 %v2034, 2147483648
  %v2047 = vor.u32 1.1754944e-38, %v2046
  %v2048 = vsel %vm2045, %v2047, %v2043
  %v2049 = vmul.f32 1.0, %v2048
  %v2050 = vmul.f32 %v2029, %v2049
  %2059 = vrot.lane.b32.xlu0 %v1310, 96
  %v2060 = vpop.permute.xlu0 %2059
  %2061 = vrot.lane.b32.xlu0 %v1311, 96
  %v2062 = vpop.permute.xlu0 %2061
  %2063 = vrot.lane.b32.xlu0 %v1312, 96
  %v2064 = vpop.permute.xlu0 %2063
  %2065 = vrot.lane.b32.xlu0 %v1313, 96
  %v2066 = vpop.permute.xlu0 %2065
  %2067 = vrot.lane.b32.xlu0 %v1314, 96
  %v2068 = vpop.permute.xlu0 %2067
  %2069 = vrot.lane.b32.xlu0 %v1315, 96
  %v2070 = vpop.permute.xlu0 %2069
  %2071 = vrot.lane.b32.xlu0 %v1316, 96
  %v2072 = vpop.permute.xlu0 %2071
  %2073 = vrot.lane.b32.xlu0 %v1317, 96
  %v2074 = vpop.permute.xlu0 %2073
  %v2084 = vsel %vm819, %v2050, 0
  %2086 = vmatpush.msra.mxu0 0.0
  %2087 = vmatpush.msra.mxu0 0.0
  %2088 = vmatpush.msra.mxu0 0.0
  %2089 = vmatpush.msra.mxu0 0.0
  %2090 = vmatpush.msra.mxu0 0.0
  %2091 = vmatpush.msra.mxu0 0.0
  %2092 = vmatpush.msra.mxu0 0.0
  %2093 = vmatpush.msra.mxu0 0.0
  %2094 = vmatpush.msra.mxu0 %v2074
  %2095 = vmatpush.msra.mxu0 %v2072
  %2096 = vmatpush.msra.mxu0 %v2070
  %2097 = vmatpush.msra.mxu0 %v2068
  %2098 = vmatpush.msra.mxu0 %v2066
  %2099 = vmatpush.msra.mxu0 %v2064
  %2100 = vmatpush.msra.mxu0 %v2062
  %2101 = vmatpush.msra.mxu0 %v2060
  %2102 = vmatmul.f32.gmra.mxu0 %v2084
  %v2103 = vpop.f32.mrf.mxu0
  %v2104 = vadd.f32 0.0, %v2103
  %2105 = vdwg.mxu0
  %v2106 = vadd.f32 %v1991, %v2104
  %2107 = vrot.lane.b32.xlu0 %v1674, 32
  %v2108 = vpop.permute.xlu0 %2107
  %v2110 = vadd.f32 %v2106, %v2108
  %v2111 = vsel %vm222, %v2110, 0.0
  %2112 = vadd.xlane.f32.xlu0 %v2111
  %v2113 = vpop.xlane.xlu0 %2112
  %v2114 = vmul.f32 %v2113, %v410
  %v2115 = vsub.f32 %v2110, %v2114
  %v2116 = vmul.f32 %v2115, %v2115
  %v2117 = vsel %vm222, %v2116, 0.0
  %2118 = vadd.xlane.f32.xlu0 %v2117
  %v2119 = vpop.xlane.xlu0 %2118
  %v2120 = vmul.f32 %v2119, %v410
  %v2121 = vadd.f32 %v2120, 1e-05
  %v2122 = vrsqrt.pop %v2121
  %v2123 = vmul.f32 %v2122, %v2121
  %v2124 = vmul.f32 %v2123, %v2122
  %v2125 = vmul.f32 0.5, %v2124
  %v2126 = vsub.f32 1.5, %v2125
  %v2127 = vmul.f32 %v2122, %v2126
  %vm2128 = vweird.f32 %v2121
  %vm2129 = vweird.f32 %v2122
  %vm2130 = vmor %vm2128, %vm2129
  %v2131 = vsel %vm2130, %v2122, %v2127
  %v2132 = vmul.f32 %v2115, %v2131
  %v2133 = vperm.slane %v1320, 3
  %v2134 = vmul.f32 %v2132, %v2133
  %2136 = vrot.lane.b32.xlu0 %v2133, 96
  %v2137 = vpop.permute.xlu0 %2136
  %v2139 = vadd.f32 %v2134, %v2137
  %v2140 = vld [vmem:[%s6 + $0x180] sm:$0xff]
  %v2141 = vld [vmem:[%s6 + $0x188] sm:$0xff]
  %v2142 = vld [vmem:[%s6 + $0x190] sm:$0xff]
  %v2143 = vld [vmem:[%s6 + $0x198] sm:$0xff]
  %v2144 = vperm.slane %v41, 1
  %v2146 = vsel %vm222, %v2139, 0
  %2148 = vmatpush.msra.mxu0 0.0
  %2149 = vmatpush.msra.mxu0 0.0
  %2150 = vmatpush.msra.mxu0 0.0
  %2151 = vmatpush.msra.mxu0 0.0
  %2152 = vmatpush.msra.mxu0 0.0
  %2153 = vmatpush.msra.mxu0 0.0
  %2154 = vmatpush.msra.mxu0 0.0
  %2155 = vmatpush.msra.mxu0 0.0
  %2156 = vmatpush.msra.mxu0 0.0
  %2157 = vmatpush.msra.mxu0 0.0
  %2158 = vmatpush.msra.mxu0 0.0
  %2159 = vmatpush.msra.mxu0 0.0
  %2160 = vmatpush.msra.mxu0 %v2143
  %2161 = vmatpush.msra.mxu0 %v2142
  %2162 = vmatpush.msra.mxu0 %v2141
  %2163 = vmatpush.msra.mxu0 %v2140
  %2164 = vmatmul.f32.gmra.mxu0 %v2146
  %v2165 = vpop.f32.mrf.mxu0
  %v2166 = vadd.f32 %v2144, %v2165
  %2167 = vdwg.mxu0
  %v2168 = vsel %vm579, %v2166, -inf
  %2169 = vmax.xlane.f32.xlu0 %v2168
  %v2170 = vpop.xlane.xlu0 %2169
  %v2171 = vsub.f32 %v2166, %v2170
  %v2172 = vmul.f32 %v2171, 1.442695
  %v2173 = vpow.pop %v2172
  %v2174 = vsel %vm579, %v2173, 0.0
  %2175 = vadd.xlane.f32.xlu0 %v2174
  %v2176 = vpop.xlane.xlu0 %2175
  %v2177 = vlog2.pop %v2176
  %v2178 = vmul.f32 %v2177, 0.6931472
  %v2179 = vsub.f32 %v2171, %v2178
  %v2180 = vlaneseq
  %v2181 = vand.u32 %v2180, 127
  %v2182 = vcvt.s32.f32 %v2181
  %v2183 = vsel %vm579, %v2179, -inf
  %2184 = vmax.xlane.f32.xlu0 %v2183
  %v2185 = vpop.xlane.xlu0 %2184
  %vm2186 = vcmp.eq.f32.partialorder %v2179, %v2185
  %v2187 = vsel %vm2186, %v2182, 16.0
  %v2188 = vsel %vm579, %v2187, inf
  %2189 = vmin.xlane.f32.xlu0 %v2188
  %v2190 = vpop.xlane.xlu0 %2189
  %vm2191 = vcmp.eq.f32.partialorder %v2182, %v2190
  %v2192 = vsel %vm2191, -3.4028235e+38, %v2179
  %v2193 = vsel %vm579, %v2192, -inf
  %2194 = vmax.xlane.f32.xlu0 %v2193
  %v2195 = vpop.xlane.xlu0 %2194
  %vm2196 = vcmp.eq.f32.partialorder %v2192, %v2195
  %v2197 = vsel %vm2196, %v2182, 16.0
  %v2198 = vsel %vm579, %v2197, inf
  %2199 = vmin.xlane.f32.xlu0 %v2198
  %v2200 = vpop.xlane.xlu0 %2199
  %vm2201 = vcmp.eq.f32.partialorder %v2182, %v2200
  %v2202 = vsel %vm2201, -3.4028235e+38, %v2192
  %v2203 = vsel %vm579, %v2202, -inf
  %2204 = vmax.xlane.f32.xlu0 %v2203
  %v2205 = vpop.xlane.xlu0 %2204
  %vm2206 = vcmp.eq.f32.partialorder %v2202, %v2205
  %v2207 = vsel %vm2206, %v2182, 16.0
  %v2208 = vsel %vm579, %v2207, inf
  %2209 = vmin.xlane.f32.xlu0 %v2208
  %v2210 = vpop.xlane.xlu0 %2209
  %vm2211 = vcmask 7168
  %v2212 = vsel %vm2211, %v2185, %v2195
  %vm2213 = vcmask 15360
  %v2214 = vsel %vm2213, %v2212, %v2205
  %v2215 = vsel %vm2211, %v2190, %v2200
  %v2216 = vsel %vm2213, %v2215, %v2210
  %2218 = vrot.lane.b32.xlu0 %v2214, 32
  %v2219 = vpop.permute.xlu0 %2218
  %2222 = vrot.lane.b32.xlu0 %v2216, 48
  %v2223 = vpop.permute.xlu0 %2222
  %v2225 = vsel %vm222, %v2139, %v2219
  %vm2226 = vcmask 285696
  %v2227 = vsel %vm2226, %v2225, 0.0
  %v2228 = vsel %vm666, %v2227, %v2223
  %vm2229 = vcmask 416768
  %v2230 = vsel %vm2229, %v2228, 0.0
  %v2231 = vsel %vm819, %v2230, 0.0
  %2232 = vst [vmem:[%s11] sm:$0xff] %v2231
  // Predicated region
  $region46: #{streaming_forward.1} parent=0 // pred_check
    _
  $region47: #{streaming_forward.1} parent=0 // pred_check_branch
    %2234 = sbr.rel (0) target = $region49
  $region48: #{streaming_forward.1} parent=0 // pred_region
    _
  $region49: #{streaming_forward.1} parent=0 // pred_fallthru
    _
  // Predicated region
  $region50: #{streaming_forward.1} parent=0 // pred_check
    _
  $region51: #{streaming_forward.1} parent=0 // pred_check_branch
    %2236 = sbr.rel (0) target = $region53
  $region52: #{streaming_forward.1} parent=0 // pred_region
    _
  $region53: #{streaming_forward.1} parent=0 // pred_fallthru
    _
  // Predicated region
  $region54: #{streaming_forward.1} parent=0 // pred_check
    _
  $region55: #{streaming_forward.1} parent=0 // pred_check_branch
    %2238 = sbr.rel (0) target = $region57
  $region56: #{streaming_forward.1} parent=0 // pred_region
    _
  $region57: #{streaming_forward.1} parent=0 // pred_fallthru
    _
  // Predicated region
  $region58: #{streaming_forward.1} parent=0 // pred_check
    _
  $region59: #{streaming_forward.1} parent=0 // pred_check_branch
    %2240 = sbr.rel (0) target = $region61
  $region60: #{streaming_forward.1} parent=0 // pred_region
    _
  $region61: #{streaming_forward.1} parent=0 // pred_fallthru
    _
  // Predicated region
  $region62: #{streaming_forward.1} parent=0 // pred_check
    _
  $region63: #{streaming_forward.1} parent=0 // pred_check_branch
    %2242 = sbr.rel (0) target = $region65
  $region64: #{streaming_forward.1} parent=0 // pred_region
    _
  $region65: #{streaming_forward.1} parent=0 // pred_fallthru
    _
  // Predicated region
  $region66: #{streaming_forward.1} parent=0 // pred_check
    _
  $region67: #{streaming_forward.1} parent=0 // pred_check_branch
    %2244 = sbr.rel (0) target = $region69
  $region68: #{streaming_forward.1} parent=0 // pred_region
    _
  $region69: #{streaming_forward.1} parent=0 // pred_fallthru
    _

</llo_original>
